<compile_context>
chip_gen: v7x
topology: tpu7x:2x2x1
jax: 0.10.0
libtpu: 0.0.40
codegen_flags: <defaults>
</compile_context>

<pallas_src>
import functools

import jax
import jax.numpy as jnp
from jax.experimental import pallas as pl
from jax.experimental.pallas import tpu as pltpu

# ----------------------- model dimensions -----------------------
IMG_C, IMG_H, IMG_W = 3, 36, 36
CNN_OUT = 512
POS0, POS1 = 8, 8
LSTM_IN = CNN_OUT + POS0 + POS1          # 528 (only used for the parameter layout)
LSTM_H = 128
N_ACTIONS = 4
MLP_HIDDEN = 64   # TODO(synk): MLP class definition not given; assumed Linear->Tanh->Linear
HEAD_PAD = 128    # lane-dense packed width of the fused head output

TILE_M = 256
VMEM_LIMIT = 32 * 1024 * 1024


# ----------------------- row-tiling helpers -----------------------

def _row_tiling(M):
    """Return (padded_M, tile_m, grid) for an M-tiled GEMM."""
    if M <= TILE_M:
        return M, M, (1,)
    m_pad = pl.cdiv(M, TILE_M) * TILE_M
    return m_pad, TILE_M, (m_pad // TILE_M,)


def _pad_rows(x, m_pad):
    if x.shape[0] == m_pad:
        return x
    return jnp.pad(x, ((0, m_pad - x.shape[0]),) + ((0, 0),) * (x.ndim - 1))


# ----------------------- generic tiled GEMM kernel -----------------------

def _linear_body(x_ref, w_ref, b_ref, e_ref, o_ref, activation):
    y = jnp.dot(x_ref[...], w_ref[...], preferred_element_type=jnp.float32)
    y = y + b_ref[...]
    if e_ref is not None:
        y = y + e_ref[...]
    if activation == "relu":
        y = jnp.maximum(y, 0.0)
    elif activation == "tanh":
        y = jnp.tanh(y)
    o_ref[...] = y.astype(o_ref.dtype)


def _linear_kernel(x_ref, w_ref, b_ref, o_ref, *, activation):
    _linear_body(x_ref, w_ref, b_ref, None, o_ref, activation)


def _linear_extra_kernel(x_ref, w_ref, b_ref, e_ref, o_ref, *, activation):
    _linear_body(x_ref, w_ref, b_ref, e_ref, o_ref, activation)


def linear(x, w, b, activation=None, extra=None, out_dtype=jnp.float32, pad_n_to=None):
    """act(x @ w + b [+ extra]); bf16 MXU inputs, f32 accumulation, M-tiled grid."""
    M, K = x.shape
    Kw, N = w.shape
    assert K == Kw
    n_valid = N
    if pad_n_to is not None and N < pad_n_to:            # lane-dense output
        w = jnp.pad(w, ((0, 0), (0, pad_n_to - N)))
        b = jnp.pad(b, (0, pad_n_to - N))
        if extra is not None:
            extra = jnp.pad(extra, ((0, 0), (0, pad_n_to - N)))
        N = pad_n_to

    m_pad, tile_m, grid = _row_tiling(M)
    x = _pad_rows(x.astype(jnp.bfloat16), m_pad)
    args = [x, w.astype(jnp.bfloat16), b.reshape(1, N).astype(jnp.float32)]
    in_specs = [
        pl.BlockSpec((tile_m, K), lambda i: (i, 0)),
        pl.BlockSpec((K, N), lambda i: (0, 0)),
        pl.BlockSpec((1, N), lambda i: (0, 0)),
    ]
    if extra is not None:
        args.append(_pad_rows(extra.astype(jnp.float32), m_pad))
        in_specs.append(pl.BlockSpec((tile_m, N), lambda i: (i, 0)))
        kernel = functools.partial(_linear_extra_kernel, activation=activation)
    else:
        kernel = functools.partial(_linear_kernel, activation=activation)

    out = pl.pallas_call(
        kernel,
        out_shape=jax.ShapeDtypeStruct((m_pad, N), out_dtype),
        grid=grid,
        in_specs=in_specs,
        out_specs=pl.BlockSpec((tile_m, N), lambda i: (i, 0)),
        compiler_params=pltpu.CompilerParams(
            dimension_semantics=("parallel",),
            vmem_limit_bytes=VMEM_LIMIT),
    )(*args)
    if m_pad != M or N != n_valid:
        out = out[:M, :n_valid]
    return out


# ----------------------- fused LSTM recurrence (grid over T) -----------------------

def _lstm_scan_kernel(gx_ref, mask_ref, h0_ref, c0_ref, whh_ref,
                      hseq_ref, hT_ref, cT_ref, h_scr, c_scr):
    t = pl.program_id(0)

    @pl.when(t == 0)
    def _():
        h_scr[...] = h0_ref[...]
        c_scr[...] = c0_ref[...]

    H = h_scr.shape[-1]
    m = mask_ref[0]                                        # (B, 1)  = 1 - done[t]
    h_prev = m * h_scr[...]
    c_prev = m * c_scr[...]

    # Input projection was hoisted: gx_ref already holds x_t @ W_ih + b (+ pos).
    gates = gx_ref[0] + jnp.dot(h_prev.astype(jnp.bfloat16), whh_ref[...],
                                preferred_element_type=jnp.float32)
    # PyTorch nn.LSTM gate ordering: i, f, g, o  (gate math kept in f32)
    i_g = jax.nn.sigmoid(gates[:, 0 * H:1 * H])
    f_g = jax.nn.sigmoid(gates[:, 1 * H:2 * H])
    g_g = jnp.tanh(gates[:, 2 * H:3 * H])
    o_g = jax.nn.sigmoid(gates[:, 3 * H:4 * H])
    c_new = f_g * c_prev + i_g * g_g
    h_new = o_g * jnp.tanh(c_new)

    h_scr[...] = h_new
    c_scr[...] = c_new
    hseq_ref[...] = h_new.reshape(hseq_ref.shape)

    @pl.when(t == pl.num_programs(0) - 1)
    def _():
        hT_ref[...] = h_new
        cT_ref[...] = c_new


def lstm_scan(gates_x, mask, h0, c0, w_hh):
    """gates_x: (T, B, 4H) precomputed input projection; mask: (T, B, 1)."""
    T, B, G = gates_x.shape
    H = h0.shape[-1]
    return pl.pallas_call(
        _lstm_scan_kernel,
        out_shape=(jax.ShapeDtypeStruct((T, B, H), jnp.float32),
                   jax.ShapeDtypeStruct((B, H), jnp.float32),
                   jax.ShapeDtypeStruct((B, H), jnp.float32)),
        grid=(T,),
        in_specs=[
            pl.BlockSpec((1, B, G), lambda t: (t, 0, 0)),   # per-step gates_x block
            pl.BlockSpec((1, B, 1), lambda t: (t, 0, 0)),   # per-step (1-done) mask
            pl.BlockSpec((B, H), lambda t: (0, 0)),          # h0 (resident)
            pl.BlockSpec((B, H), lambda t: (0, 0)),          # c0 (resident)
            pl.BlockSpec((H, G), lambda t: (0, 0)),          # W_hh (resident)
        ],
        out_specs=(
            pl.BlockSpec((1, B, H), lambda t: (t, 0, 0)),    # hidden sequence
            pl.BlockSpec((B, H), lambda t: (0, 0)),          # final h
            pl.BlockSpec((B, H), lambda t: (0, 0)),          # final c
        ),
        scratch_shapes=[pltpu.VMEM((B, H), jnp.float32),
                        pltpu.VMEM((B, H), jnp.float32)],
        compiler_params=pltpu.CompilerParams(
            dimension_semantics=("arbitrary",),
            vmem_limit_bytes=VMEM_LIMIT),
    )(gates_x.astype(jnp.float32), mask.astype(jnp.float32),
      h0.astype(jnp.float32), c0.astype(jnp.float32),
      w_hh.astype(jnp.bfloat16))


# ----------------------- fused policy/value heads -----------------------

def _heads_kernel(h_ref, w1_ref, b1_ref, w2_ref, b2_ref, o_ref):
    y1 = jnp.dot(h_ref[...], w1_ref[...], preferred_element_type=jnp.float32) + b1_ref[...]
    y1 = jnp.tanh(y1)
    y2 = jnp.dot(y1.astype(jnp.bfloat16), w2_ref[...],
                 preferred_element_type=jnp.float32) + b2_ref[...]
    o_ref[...] = y2.astype(o_ref.dtype)


def mlp_heads(h, w1, b1, w2, b2):
    """One kernel for both heads; output is lane-dense (M, 128): logits | value | pad."""
    M, H = h.shape
    N1 = w1.shape[1]
    N2 = w2.shape[1]
    m_pad, tile_m, grid = _row_tiling(M)
    h = _pad_rows(h.astype(jnp.bfloat16), m_pad)
    out = pl.pallas_call(
        _heads_kernel,
        out_shape=jax.ShapeDtypeStruct((m_pad, N2), jnp.float32),
        grid=grid,
        in_specs=[
            pl.BlockSpec((tile_m, H), lambda i: (i, 0)),
            pl.BlockSpec((H, N1), lambda i: (0, 0)),
            pl.BlockSpec((1, N1), lambda i: (0, 0)),
            pl.BlockSpec((N1, N2), lambda i: (0, 0)),
            pl.BlockSpec((1, N2), lambda i: (0, 0)),
        ],
        out_specs=pl.BlockSpec((tile_m, N2), lambda i: (i, 0)),
        compiler_params=pltpu.CompilerParams(
            dimension_semantics=("parallel",),
            vmem_limit_bytes=VMEM_LIMIT),
    )(h, w1.astype(jnp.bfloat16), b1.reshape(1, N1).astype(jnp.float32),
      w2.astype(jnp.bfloat16), b2.reshape(1, N2).astype(jnp.float32))
    return out[:M]


# ----------------------- conv = NHWC im2col (glue) + Pallas GEMM -----------------------

def _im2col_nhwc(x, k, s):
    # x: (N, H, W, C) NHWC; patch inner ordering is (ki, kj, c)
    N, H, W, C = x.shape
    oh = (H - k) // s + 1
    ow = (W - k) // s + 1
    cols = []
    for i in range(k):
        for j in range(k):
            cols.append(x[:, i:i + s * oh:s, j:j + s * ow:s, :])     # (N, oh, ow, C)
    p = jnp.stack(cols, axis=3)                                       # (N, oh, ow, k*k, C)
    return p.reshape(N * oh * ow, k * k * C), oh, ow


def conv2d_relu(x, w, b, stride):
    # x NHWC; w: (OC, InC, k, k) PyTorch layout; fused ReLU; stays NHWC (no transposes).
    OC, C, k, _ = w.shape
    N = x.shape[0]
    patches, oh, ow = _im2col_nhwc(x, k, stride)
    wm = jnp.transpose(w, (0, 2, 3, 1)).reshape(OC, k * k * C).T      # (k*k*C, OC), (ki,kj,c) order
    y = linear(patches, wm, b, activation="relu",
               out_dtype=jnp.bfloat16, pad_n_to=128)                  # lane-dense GEMM
    return y.reshape(N, oh, ow, OC)


# ----------------------- parameters (deterministic, synthetic) -----------------------

def init_params(key):
    ks = jax.random.split(key, 24)

    def w(k, shape, gain=None):
        fan_in = 1
        for d in shape[:-1] if len(shape) == 2 else shape[1:]:
            fan_in *= d
        scale = (gain if gain is not None else 1.0) / jnp.sqrt(jnp.float32(fan_in))
        return (jax.random.normal(k, shape, jnp.float32) * scale).astype(jnp.float32)

    flat_dim = 64 * 1 * 1   # 36x36 -> 8x8 -> 3x3 -> 1x1 spatial, 64 channels
    params = {
        "conv1_w": w(ks[0], (32, IMG_C, 8, 8)), "conv1_b": jnp.zeros((32,), jnp.float32),
        "conv2_w": w(ks[1], (64, 32, 4, 4)),    "conv2_b": jnp.zeros((64,), jnp.float32),
        "conv3_w": w(ks[2], (64, 64, 3, 3)),    "conv3_b": jnp.zeros((64,), jnp.float32),
        "fc_w":    w(ks[3], (flat_dim, CNN_OUT)), "fc_b": jnp.zeros((CNN_OUT,), jnp.float32),
        # TODO(synk): init_lstm() definition not given; plain scaled-normal init used.
        # NOTE: if real PyTorch weights are loaded, lstm_b must be b_ih + b_hh summed.
        "lstm_w_ih": w(ks[4], (LSTM_IN, 4 * LSTM_H)),
        "lstm_w_hh": w(ks[5], (LSTM_H, 4 * LSTM_H)),
        "lstm_b":    jnp.zeros((4 * LSTM_H,), jnp.float32),
        "policy_w1": w(ks[6], (LSTM_H, MLP_HIDDEN)), "policy_b1": jnp.zeros((MLP_HIDDEN,), jnp.float32),
        "policy_w2": w(ks[7], (MLP_HIDDEN, N_ACTIONS), gain=0.01), "policy_b2": jnp.zeros((N_ACTIONS,), jnp.float32),
        "value_w1":  w(ks[8], (LSTM_H, MLP_HIDDEN)), "value_b1": jnp.zeros((MLP_HIDDEN,), jnp.float32),
        "value_w2":  w(ks[9], (MLP_HIDDEN, 1), gain=1.0), "value_b2": jnp.zeros((1,), jnp.float32),
    }
    return params


# ----------------------- LSTMAgent.forward -----------------------

def lstm_agent_forward(params, image, position, state, done, T, B):
    # --- extract ---  (NCHW input -> NHWC once; activations stay NHWC)
    x = image.astype(jnp.float32) / 255.0                    # preprocess_image
    x = jnp.transpose(x, (0, 2, 3, 1))
    h = conv2d_relu(x, params["conv1_w"], params["conv1_b"], 4)
    h = conv2d_relu(h, params["conv2_w"], params["conv2_b"], 2)
    h = conv2d_relu(h, params["conv3_w"], params["conv3_b"], 1)
    h = h.reshape(h.shape[0], -1)                             # spatial is 1x1 -> same as NCHW flatten
    feat = linear(h, params["fc_w"], params["fc_b"],
                  activation="relu", out_dtype=jnp.bfloat16)  # (TB, 512) bf16

    # one_hot(position) @ W_ih[512:] is a row gather-add (keeps the GEMM at K=512)
    w_ih_feat = params["lstm_w_ih"][:CNN_OUT]                 # (512, 4H)
    w_pos0 = params["lstm_w_ih"][CNN_OUT:CNN_OUT + POS0]      # (8, 4H)
    w_pos1 = params["lstm_w_ih"][CNN_OUT + POS0:]             # (8, 4H)
    pos_c = (jnp.take(w_pos0, position[:, 0], axis=0)
             + jnp.take(w_pos1, position[:, 1], axis=0))      # (TB, 4H)

    # Hoisted input projection: one big MXU-friendly GEMM over all T*B rows.
    gates_x = linear(feat, w_ih_feat, params["lstm_b"],
                     extra=pos_c, out_dtype=jnp.float32)      # (TB, 4H)

    # --- remember ---  (fused recurrence: one pallas_call, grid=(T,))
    h0 = state[0][:, 0, :].astype(jnp.float32)                # (B, H), single layer
    c0 = state[1][:, 0, :].astype(jnp.float32)
    gates_x = gates_x.reshape(T, B, 4 * LSTM_H)
    mask = (1.0 - done.reshape(T, B).astype(jnp.float32))[:, :, None]   # (T, B, 1)
    hseq, h_T, c_T = lstm_scan(gates_x, mask, h0, c0, params["lstm_w_hh"])
    hidden = hseq.reshape(T * B, LSTM_H)                      # == flatten(cat, 0, 1)
    new_state = [h_T[:, None, :], c_T[:, None, :]]            # back to (B, 1, H)

    # --- heads ---  (fused: one kernel, lane-dense packed output)
    w1p = jnp.concatenate([params["policy_w1"], params["value_w1"]], axis=1)   # (128, 128)
    b1p = jnp.concatenate([params["policy_b1"], params["value_b1"]], axis=0)   # (128,)
    w2p = jnp.zeros((2 * MLP_HIDDEN, HEAD_PAD), jnp.float32)
    w2p = w2p.at[:MLP_HIDDEN, :N_ACTIONS].set(params["policy_w2"])
    w2p = w2p.at[MLP_HIDDEN:, N_ACTIONS:N_ACTIONS + 1].set(params["value_w2"])
    b2p = jnp.zeros((HEAD_PAD,), jnp.float32)
    b2p = b2p.at[:N_ACTIONS].set(params["policy_b2"])
    b2p = b2p.at[N_ACTIONS:N_ACTIONS + 1].set(params["value_b2"])
    packed = mlp_heads(hidden, w1p, b1p, w2p, b2p)            # (TB, 128)
    logits = packed[:, :N_ACTIONS]                            # Categorical(logits=...)
    v = packed[:, N_ACTIONS:N_ACTIONS + 1]                    # (TB, 1)
    # TODO(synk): torch.distributions.Categorical has no Pallas equivalent; logits returned.
    return logits, v, new_state


# ----------------------- demo -----------------------

if __name__ == "__main__":
    T, B = 2, 2
    TB = T * B
    key = jax.random.PRNGKey(0)
    kp, ki, kpos, kd = jax.random.split(key, 4)

    params = init_params(kp)
    image = jax.random.uniform(ki, (TB, IMG_C, IMG_H, IMG_W), jnp.float32, 0.0, 255.0)
    position = jax.random.randint(kpos, (TB, 2), 0, min(POS0, POS1))
    done = (jax.random.uniform(kd, (TB,)) < 0.3).astype(jnp.float32)
    state = [jnp.zeros((B, 1, LSTM_H), jnp.float32),          # Agent.initial(num_envs=B)
             jnp.zeros((B, 1, LSTM_H), jnp.float32)]

    forward = jax.jit(lstm_agent_forward, static_argnums=(5, 6))
    logits, value, new_state = forward(params, image, position, state, done, T, B)
    jax.block_until_ready((logits, value, new_state[0], new_state[1]))

    assert logits.shape == (TB, N_ACTIONS)
    assert value.shape == (TB, 1)
    assert new_state[0].shape == (B, 1, LSTM_H)
    assert new_state[1].shape == (B, 1, LSTM_H)
    print("KERNEL_OK")
</pallas_src>

<mosaic_0001>
module attributes {stable_mosaic.version = 11 : i64} {
  func.func @_linear_kernel(%arg0: i32, %arg1: memref<256x192xbf16, #tpu.memory_space<vmem>>, %arg2: memref<192x128xbf16, #tpu.memory_space<vmem>>, %arg3: memref<1x128xf32, #tpu.memory_space<vmem>>, %arg4: memref<256x128xbf16, #tpu.memory_space<vmem>>) attributes {dimension_semantics = [#tpu.dimension_semantics<parallel>], iteration_bounds = array<i64: 1>, scalar_prefetch = 0 : i64, scratch_operands = 0 : i64, tpu.core_type = #tpu.core_type<tc>, window_params = [{transform_indices = @transform_0, window_bounds = array<i64: 256, 192>}, {pipeline_mode = #tpu.pipeline_mode<synchronous>, transform_indices = @transform_1, window_bounds = array<i64: 192, 128>}, {pipeline_mode = #tpu.pipeline_mode<synchronous>, transform_indices = @transform_2, window_bounds = array<i64: 1, 128>}, {transform_indices = @transform_3, window_bounds = array<i64: 256, 128>}]} {
    %c0 = arith.constant 0 : index
    %c0_0 = arith.constant 0 : index
    %0 = vector.load %arg1[%c0, %c0_0] : memref<256x192xbf16, #tpu.memory_space<vmem>>, vector<256x192xbf16>
    %c0_1 = arith.constant 0 : index
    %c0_2 = arith.constant 0 : index
    %1 = vector.load %arg2[%c0_1, %c0_2] : memref<192x128xbf16, #tpu.memory_space<vmem>>, vector<192x128xbf16>
    %cst = arith.constant dense<0.000000e+00> : vector<256x128xf32>
    %2 = tpu.matmul %0, %1, %cst {dimension_numbers = #tpu.dot_dimension_numbers<[1], [0], [0], [1], [0, 0, 1, 1], [], []>} : vector<256x192xbf16>, vector<192x128xbf16>, vector<256x128xf32> -> vector<256x128xf32>
    %c0_3 = arith.constant 0 : index
    %c0_4 = arith.constant 0 : index
    %3 = vector.load %arg3[%c0_3, %c0_4] : memref<1x128xf32, #tpu.memory_space<vmem>>, vector<1x128xf32>
    %4 = vector.broadcast %3 : vector<1x128xf32> to vector<256x128xf32>
    %5 = arith.addf %2, %4 : vector<256x128xf32>
    %cst_5 = arith.constant 0.000000e+00 : f32
    %6 = vector.broadcast %cst_5 : f32 to vector<256x128xf32>
    %7 = arith.maximumf %5, %6 : vector<256x128xf32>
    %8 = arith.truncf %7 : vector<256x128xf32> to vector<256x128xbf16>
    %c0_6 = arith.constant 0 : index
    %c0_7 = arith.constant 0 : index
    %9 = vector.load %arg4[%c0_6, %c0_7] : memref<256x128xbf16, #tpu.memory_space<vmem>>, vector<256x128xbf16>
    tpu.vector_store %arg4[%c0_6, %c0_7], %8 {strides = array<i32>} : memref<256x128xbf16, #tpu.memory_space<vmem>>, vector<256x128xbf16>,
    return
  }
  func.func @transform_0(%arg0: i32) -> (i32, i32) {
    %c0_i32 = arith.constant 0 : i32
    %c0_i32_0 = arith.constant 0 : i32
    return %arg0, %c0_i32 : i32, i32
  }
  func.func @transform_1(%arg0: i32) -> (i32, i32) {
    %c0_i32 = arith.constant 0 : i32
    %c0_i32_0 = arith.constant 0 : i32
    %c0_i32_1 = arith.constant 0 : i32
    return %c0_i32, %c0_i32_0 : i32, i32
  }
  func.func @transform_2(%arg0: i32) -> (i32, i32) {
    %c0_i32 = arith.constant 0 : i32
    %c0_i32_0 = arith.constant 0 : i32
    %c0_i32_1 = arith.constant 0 : i32
    return %c0_i32, %c0_i32_0 : i32, i32
  }
  func.func @transform_3(%arg0: i32) -> (i32, i32) {
    %c0_i32 = arith.constant 0 : i32
    %c0_i32_0 = arith.constant 0 : i32
    return %arg0, %c0_i32 : i32, i32
  }
}

module attributes {stable_mosaic.version = 11 : i64} {
  func.func @_linear_kernel(%arg0: i32, %arg1: memref<36x512xbf16, #tpu.memory_space<vmem>>, %arg2: memref<512x128xbf16, #tpu.memory_space<vmem>>, %arg3: memref<1x128xf32, #tpu.memory_space<vmem>>, %arg4: memref<36x128xbf16, #tpu.memory_space<vmem>>) attributes {dimension_semantics = [#tpu.dimension_semantics<parallel>], iteration_bounds = array<i64: 1>, scalar_prefetch = 0 : i64, scratch_operands = 0 : i64, tpu.core_type = #tpu.core_type<tc>, window_params = [{transform_indices = @transform_0, window_bounds = array<i64: 36, 512>}, {pipeline_mode = #tpu.pipeline_mode<synchronous>, transform_indices = @transform_1, window_bounds = array<i64: 512, 128>}, {pipeline_mode = #tpu.pipeline_mode<synchronous>, transform_indices = @transform_2, window_bounds = array<i64: 1, 128>}, {transform_indices = @transform_3, window_bounds = array<i64: 36, 128>}]} {
    %c0 = arith.constant 0 : index
    %c0_0 = arith.constant 0 : index
    %0 = vector.load %arg1[%c0, %c0_0] : memref<36x512xbf16, #tpu.memory_space<vmem>>, vector<36x512xbf16>
    %c0_1 = arith.constant 0 : index
    %c0_2 = arith.constant 0 : index
    %1 = vector.load %arg2[%c0_1, %c0_2] : memref<512x128xbf16, #tpu.memory_space<vmem>>, vector<512x128xbf16>
    %cst = arith.constant dense<0.000000e+00> : vector<36x128xf32>
    %2 = tpu.matmul %0, %1, %cst {dimension_numbers = #tpu.dot_dimension_numbers<[1], [0], [0], [1], [0, 0, 1, 1], [], []>} : vector<36x512xbf16>, vector<512x128xbf16>, vector<36x128xf32> -> vector<36x128xf32>
    %c0_3 = arith.constant 0 : index
    %c0_4 = arith.constant 0 : index
    %3 = vector.load %arg3[%c0_3, %c0_4] : memref<1x128xf32, #tpu.memory_space<vmem>>, vector<1x128xf32>
    %4 = vector.broadcast %3 : vector<1x128xf32> to vector<36x128xf32>
    %5 = arith.addf %2, %4 : vector<36x128xf32>
    %cst_5 = arith.constant 0.000000e+00 : f32
    %6 = vector.broadcast %cst_5 : f32 to vector<36x128xf32>
    %7 = arith.maximumf %5, %6 : vector<36x128xf32>
    %8 = arith.truncf %7 : vector<36x128xf32> to vector<36x128xbf16>
    %c0_6 = arith.constant 0 : index
    %c0_7 = arith.constant 0 : index
    %9 = vector.load %arg4[%c0_6, %c0_7] : memref<36x128xbf16, #tpu.memory_space<vmem>>, vector<36x128xbf16>
    tpu.vector_store %arg4[%c0_6, %c0_7], %8 {strides = array<i32>} : memref<36x128xbf16, #tpu.memory_space<vmem>>, vector<36x128xbf16>,
    return
  }
  func.func @transform_0(%arg0: i32) -> (i32, i32) {
    %c0_i32 = arith.constant 0 : i32
    %c0_i32_0 = arith.constant 0 : i32
    return %arg0, %c0_i32 : i32, i32
  }
  func.func @transform_1(%arg0: i32) -> (i32, i32) {
    %c0_i32 = arith.constant 0 : i32
    %c0_i32_0 = arith.constant 0 : i32
    %c0_i32_1 = arith.constant 0 : i32
    return %c0_i32, %c0_i32_0 : i32, i32
  }
  func.func @transform_2(%arg0: i32) -> (i32, i32) {
    %c0_i32 = arith.constant 0 : i32
    %c0_i32_0 = arith.constant 0 : i32
    %c0_i32_1 = arith.constant 0 : i32
    return %c0_i32, %c0_i32_0 : i32, i32
  }
  func.func @transform_3(%arg0: i32) -> (i32, i32) {
    %c0_i32 = arith.constant 0 : i32
    %c0_i32_0 = arith.constant 0 : i32
    return %arg0, %c0_i32 : i32, i32
  }
}

module attributes {stable_mosaic.version = 11 : i64} {
  func.func @_linear_kernel(%arg0: i32, %arg1: memref<4x576xbf16, #tpu.memory_space<vmem>>, %arg2: memref<576x128xbf16, #tpu.memory_space<vmem>>, %arg3: memref<1x128xf32, #tpu.memory_space<vmem>>, %arg4: memref<4x128xbf16, #tpu.memory_space<vmem>>) attributes {dimension_semantics = [#tpu.dimension_semantics<parallel>], iteration_bounds = array<i64: 1>, scalar_prefetch = 0 : i64, scratch_operands = 0 : i64, tpu.core_type = #tpu.core_type<tc>, window_params = [{transform_indices = @transform_0, window_bounds = array<i64: 4, 576>}, {pipeline_mode = #tpu.pipeline_mode<synchronous>, transform_indices = @transform_1, window_bounds = array<i64: 576, 128>}, {pipeline_mode = #tpu.pipeline_mode<synchronous>, transform_indices = @transform_2, window_bounds = array<i64: 1, 128>}, {transform_indices = @transform_3, window_bounds = array<i64: 4, 128>}]} {
    %c0 = arith.constant 0 : index
    %c0_0 = arith.constant 0 : index
    %0 = vector.load %arg1[%c0, %c0_0] : memref<4x576xbf16, #tpu.memory_space<vmem>>, vector<4x576xbf16>
    %c0_1 = arith.constant 0 : index
    %c0_2 = arith.constant 0 : index
    %1 = vector.load %arg2[%c0_1, %c0_2] : memref<576x128xbf16, #tpu.memory_space<vmem>>, vector<576x128xbf16>
    %cst = arith.constant dense<0.000000e+00> : vector<4x128xf32>
    %2 = tpu.matmul %0, %1, %cst {dimension_numbers = #tpu.dot_dimension_numbers<[1], [0], [0], [1], [0, 0, 1, 1], [], []>} : vector<4x576xbf16>, vector<576x128xbf16>, vector<4x128xf32> -> vector<4x128xf32>
    %c0_3 = arith.constant 0 : index
    %c0_4 = arith.constant 0 : index
    %3 = vector.load %arg3[%c0_3, %c0_4] : memref<1x128xf32, #tpu.memory_space<vmem>>, vector<1x128xf32>
    %4 = vector.broadcast %3 : vector<1x128xf32> to vector<4x128xf32>
    %5 = arith.addf %2, %4 : vector<4x128xf32>
    %cst_5 = arith.constant 0.000000e+00 : f32
    %6 = vector.broadcast %cst_5 : f32 to vector<4x128xf32>
    %7 = arith.maximumf %5, %6 : vector<4x128xf32>
    %8 = arith.truncf %7 : vector<4x128xf32> to vector<4x128xbf16>
    %c0_6 = arith.constant 0 : index
    %c0_7 = arith.constant 0 : index
    %9 = vector.load %arg4[%c0_6, %c0_7] : memref<4x128xbf16, #tpu.memory_space<vmem>>, vector<4x128xbf16>
    tpu.vector_store %arg4[%c0_6, %c0_7], %8 {strides = array<i32>} : memref<4x128xbf16, #tpu.memory_space<vmem>>, vector<4x128xbf16>,
    return
  }
  func.func @transform_0(%arg0: i32) -> (i32, i32) {
    %c0_i32 = arith.constant 0 : i32
    %c0_i32_0 = arith.constant 0 : i32
    return %arg0, %c0_i32 : i32, i32
  }
  func.func @transform_1(%arg0: i32) -> (i32, i32) {
    %c0_i32 = arith.constant 0 : i32
    %c0_i32_0 = arith.constant 0 : i32
    %c0_i32_1 = arith.constant 0 : i32
    return %c0_i32, %c0_i32_0 : i32, i32
  }
  func.func @transform_2(%arg0: i32) -> (i32, i32) {
    %c0_i32 = arith.constant 0 : i32
    %c0_i32_0 = arith.constant 0 : i32
    %c0_i32_1 = arith.constant 0 : i32
    return %c0_i32, %c0_i32_0 : i32, i32
  }
  func.func @transform_3(%arg0: i32) -> (i32, i32) {
    %c0_i32 = arith.constant 0 : i32
    %c0_i32_0 = arith.constant 0 : i32
    return %arg0, %c0_i32 : i32, i32
  }
}

module attributes {stable_mosaic.version = 11 : i64} {
  func.func @_linear_kernel(%arg0: i32, %arg1: memref<4x64xbf16, #tpu.memory_space<vmem>>, %arg2: memref<64x512xbf16, #tpu.memory_space<vmem>>, %arg3: memref<1x512xf32, #tpu.memory_space<vmem>>, %arg4: memref<4x512xbf16, #tpu.memory_space<vmem>>) attributes {dimension_semantics = [#tpu.dimension_semantics<parallel>], iteration_bounds = array<i64: 1>, scalar_prefetch = 0 : i64, scratch_operands = 0 : i64, tpu.core_type = #tpu.core_type<tc>, window_params = [{transform_indices = @transform_0, window_bounds = array<i64: 4, 64>}, {pipeline_mode = #tpu.pipeline_mode<synchronous>, transform_indices = @transform_1, window_bounds = array<i64: 64, 512>}, {pipeline_mode = #tpu.pipeline_mode<synchronous>, transform_indices = @transform_2, window_bounds = array<i64: 1, 512>}, {transform_indices = @transform_3, window_bounds = array<i64: 4, 512>}]} {
    %c0 = arith.constant 0 : index
    %c0_0 = arith.constant 0 : index
    %0 = vector.load %arg1[%c0, %c0_0] : memref<4x64xbf16, #tpu.memory_space<vmem>>, vector<4x64xbf16>
    %c0_1 = arith.constant 0 : index
    %c0_2 = arith.constant 0 : index
    %1 = vector.load %arg2[%c0_1, %c0_2] : memref<64x512xbf16, #tpu.memory_space<vmem>>, vector<64x512xbf16>
    %cst = arith.constant dense<0.000000e+00> : vector<4x512xf32>
    %2 = tpu.matmul %0, %1, %cst {dimension_numbers = #tpu.dot_dimension_numbers<[1], [0], [0], [1], [0, 0, 1, 1], [], []>} : vector<4x64xbf16>, vector<64x512xbf16>, vector<4x512xf32> -> vector<4x512xf32>
    %c0_3 = arith.constant 0 : index
    %c0_4 = arith.constant 0 : index
    %3 = vector.load %arg3[%c0_3, %c0_4] : memref<1x512xf32, #tpu.memory_space<vmem>>, vector<1x512xf32>
    %4 = vector.broadcast %3 : vector<1x512xf32> to vector<4x512xf32>
    %5 = arith.addf %2, %4 : vector<4x512xf32>
    %cst_5 = arith.constant 0.000000e+00 : f32
    %6 = vector.broadcast %cst_5 : f32 to vector<4x512xf32>
    %7 = arith.maximumf %5, %6 : vector<4x512xf32>
    %8 = arith.truncf %7 : vector<4x512xf32> to vector<4x512xbf16>
    %c0_6 = arith.constant 0 : index
    %c0_7 = arith.constant 0 : index
    %9 = vector.load %arg4[%c0_6, %c0_7] : memref<4x512xbf16, #tpu.memory_space<vmem>>, vector<4x512xbf16>
    tpu.vector_store %arg4[%c0_6, %c0_7], %8 {strides = array<i32>} : memref<4x512xbf16, #tpu.memory_space<vmem>>, vector<4x512xbf16>,
    return
  }
  func.func @transform_0(%arg0: i32) -> (i32, i32) {
    %c0_i32 = arith.constant 0 : i32
    %c0_i32_0 = arith.constant 0 : i32
    return %arg0, %c0_i32 : i32, i32
  }
  func.func @transform_1(%arg0: i32) -> (i32, i32) {
    %c0_i32 = arith.constant 0 : i32
    %c0_i32_0 = arith.constant 0 : i32
    %c0_i32_1 = arith.constant 0 : i32
    return %c0_i32, %c0_i32_0 : i32, i32
  }
  func.func @transform_2(%arg0: i32) -> (i32, i32) {
    %c0_i32 = arith.constant 0 : i32
    %c0_i32_0 = arith.constant 0 : i32
    %c0_i32_1 = arith.constant 0 : i32
    return %c0_i32, %c0_i32_0 : i32, i32
  }
  func.func @transform_3(%arg0: i32) -> (i32, i32) {
    %c0_i32 = arith.constant 0 : i32
    %c0_i32_0 = arith.constant 0 : i32
    return %arg0, %c0_i32 : i32, i32
  }
}

module attributes {stable_mosaic.version = 11 : i64} {
  func.func @_linear_extra_kernel(%arg0: i32, %arg1: memref<4x512xbf16, #tpu.memory_space<vmem>>, %arg2: memref<512x512xbf16, #tpu.memory_space<vmem>>, %arg3: memref<1x512xf32, #tpu.memory_space<vmem>>, %arg4: memref<4x512xf32, #tpu.memory_space<vmem>>, %arg5: memref<4x512xf32, #tpu.memory_space<vmem>>) attributes {dimension_semantics = [#tpu.dimension_semantics<parallel>], iteration_bounds = array<i64: 1>, scalar_prefetch = 0 : i64, scratch_operands = 0 : i64, tpu.core_type = #tpu.core_type<tc>, window_params = [{transform_indices = @transform_0, window_bounds = array<i64: 4, 512>}, {pipeline_mode = #tpu.pipeline_mode<synchronous>, transform_indices = @transform_1, window_bounds = array<i64: 512, 512>}, {pipeline_mode = #tpu.pipeline_mode<synchronous>, transform_indices = @transform_2, window_bounds = array<i64: 1, 512>}, {transform_indices = @transform_3, window_bounds = array<i64: 4, 512>}, {transform_indices = @transform_4, window_bounds = array<i64: 4, 512>}]} {
    %c0 = arith.constant 0 : index
    %c0_0 = arith.constant 0 : index
    %0 = vector.load %arg1[%c0, %c0_0] : memref<4x512xbf16, #tpu.memory_space<vmem>>, vector<4x512xbf16>
    %c0_1 = arith.constant 0 : index
    %c0_2 = arith.constant 0 : index
    %1 = vector.load %arg2[%c0_1, %c0_2] : memref<512x512xbf16, #tpu.memory_space<vmem>>, vector<512x512xbf16>
    %cst = arith.constant dense<0.000000e+00> : vector<4x512xf32>
    %2 = tpu.matmul %0, %1, %cst {dimension_numbers = #tpu.dot_dimension_numbers<[1], [0], [0], [1], [0, 0, 1, 1], [], []>} : vector<4x512xbf16>, vector<512x512xbf16>, vector<4x512xf32> -> vector<4x512xf32>
    %c0_3 = arith.constant 0 : index
    %c0_4 = arith.constant 0 : index
    %3 = vector.load %arg3[%c0_3, %c0_4] : memref<1x512xf32, #tpu.memory_space<vmem>>, vector<1x512xf32>
    %4 = vector.broadcast %3 : vector<1x512xf32> to vector<4x512xf32>
    %5 = arith.addf %2, %4 : vector<4x512xf32>
    %c0_5 = arith.constant 0 : index
    %c0_6 = arith.constant 0 : index
    %6 = vector.load %arg4[%c0_5, %c0_6] : memref<4x512xf32, #tpu.memory_space<vmem>>, vector<4x512xf32>
    %7 = arith.addf %5, %6 : vector<4x512xf32>
    %c0_7 = arith.constant 0 : index
    %c0_8 = arith.constant 0 : index
    %8 = vector.load %arg5[%c0_7, %c0_8] : memref<4x512xf32, #tpu.memory_space<vmem>>, vector<4x512xf32>
    tpu.vector_store %arg5[%c0_7, %c0_8], %7 {strides = array<i32>} : memref<4x512xf32, #tpu.memory_space<vmem>>, vector<4x512xf32>,
    return
  }
  func.func @transform_0(%arg0: i32) -> (i32, i32) {
    %c0_i32 = arith.constant 0 : i32
    %c0_i32_0 = arith.constant 0 : i32
    return %arg0, %c0_i32 : i32, i32
  }
  func.func @transform_1(%arg0: i32) -> (i32, i32) {
    %c0_i32 = arith.constant 0 : i32
    %c0_i32_0 = arith.constant 0 : i32
    %c0_i32_1 = arith.constant 0 : i32
    return %c0_i32, %c0_i32_0 : i32, i32
  }
  func.func @transform_2(%arg0: i32) -> (i32, i32) {
    %c0_i32 = arith.constant 0 : i32
    %c0_i32_0 = arith.constant 0 : i32
    %c0_i32_1 = arith.constant 0 : i32
    return %c0_i32, %c0_i32_0 : i32, i32
  }
  func.func @transform_3(%arg0: i32) -> (i32, i32) {
    %c0_i32 = arith.constant 0 : i32
    %c0_i32_0 = arith.constant 0 : i32
    return %arg0, %c0_i32 : i32, i32
  }
  func.func @transform_4(%arg0: i32) -> (i32, i32) {
    %c0_i32 = arith.constant 0 : i32
    %c0_i32_0 = arith.constant 0 : i32
    return %arg0, %c0_i32 : i32, i32
  }
}

module attributes {stable_mosaic.version = 11 : i64} {
  func.func @_lstm_scan_kernel(%arg0: i32, %arg1: memref<1x2x512xf32, #tpu.memory_space<vmem>>, %arg2: memref<1x2x1xf32, #tpu.memory_space<vmem>>, %arg3: memref<2x128xf32, #tpu.memory_space<vmem>>, %arg4: memref<2x128xf32, #tpu.memory_space<vmem>>, %arg5: memref<128x512xbf16, #tpu.memory_space<vmem>>, %arg6: memref<1x2x128xf32, #tpu.memory_space<vmem>>, %arg7: memref<2x128xf32, #tpu.memory_space<vmem>>, %arg8: memref<2x128xf32, #tpu.memory_space<vmem>>, %arg9: memref<2x128xf32, #tpu.memory_space<vmem>>, %arg10: memref<2x128xf32, #tpu.memory_space<vmem>>) attributes {dimension_semantics = [#tpu.dimension_semantics<arbitrary>], iteration_bounds = array<i64: 2>, scalar_prefetch = 0 : i64, scratch_operands = 2 : i64, tpu.core_type = #tpu.core_type<tc>, window_params = [{transform_indices = @transform_0, window_bounds = array<i64: 1, 2, 512>}, {transform_indices = @transform_1, window_bounds = array<i64: 1, 2, 1>}, {pipeline_mode = #tpu.pipeline_mode<synchronous>, transform_indices = @transform_2, window_bounds = array<i64: 2, 128>}, {pipeline_mode = #tpu.pipeline_mode<synchronous>, transform_indices = @transform_3, window_bounds = array<i64: 2, 128>}, {pipeline_mode = #tpu.pipeline_mode<synchronous>, transform_indices = @transform_4, window_bounds = array<i64: 128, 512>}, {transform_indices = @transform_5, window_bounds = array<i64: 1, 2, 128>}, {pipeline_mode = #tpu.pipeline_mode<synchronous>, transform_indices = @transform_6, window_bounds = array<i64: 2, 128>}, {pipeline_mode = #tpu.pipeline_mode<synchronous>, transform_indices = @transform_7, window_bounds = array<i64: 2, 128>}]} {
    %c0_i32 = arith.constant 0 : i32
    %0 = arith.cmpi eq, %arg0, %c0_i32 : i32
    %1 = arith.extui %0 : i1 to i32
    %c0_i32_0 = arith.constant 0 : i32
    %2 = arith.cmpi ne, %1, %c0_i32_0 : i32
    scf.if %2 {
      %c0_23 = arith.constant 0 : index
      %c0_24 = arith.constant 0 : index
      %49 = vector.load %arg3[%c0_23, %c0_24] : memref<2x128xf32, #tpu.memory_space<vmem>>, vector<2x128xf32>
      %c0_25 = arith.constant 0 : index
      %c0_26 = arith.constant 0 : index
      %50 = vector.load %arg9[%c0_25, %c0_26] : memref<2x128xf32, #tpu.memory_space<vmem>>, vector<2x128xf32>
      tpu.vector_store %arg9[%c0_25, %c0_26], %49 {strides = array<i32>} : memref<2x128xf32, #tpu.memory_space<vmem>>, vector<2x128xf32>,
      %c0_27 = arith.constant 0 : index
      %c0_28 = arith.constant 0 : index
      %51 = vector.load %arg4[%c0_27, %c0_28] : memref<2x128xf32, #tpu.memory_space<vmem>>, vector<2x128xf32>
      %c0_29 = arith.constant 0 : index
      %c0_30 = arith.constant 0 : index
      %52 = vector.load %arg10[%c0_29, %c0_30] : memref<2x128xf32, #tpu.memory_space<vmem>>, vector<2x128xf32>
      tpu.vector_store %arg10[%c0_29, %c0_30], %51 {strides = array<i32>} : memref<2x128xf32, #tpu.memory_space<vmem>>, vector<2x128xf32>,
    } else {
    }
    %c0 = arith.constant 0 : index
    %c0_1 = arith.constant 0 : index
    %c0_2 = arith.constant 0 : index
    %3 = vector.load %arg2[%c0, %c0_1, %c0_2] : memref<1x2x1xf32, #tpu.memory_space<vmem>>, vector<1x2x1xf32>
    %4 = vector.shape_cast %3 : vector<1x2x1xf32> to vector<2x1xf32>
    %c0_3 = arith.constant 0 : index
    %c0_4 = arith.constant 0 : index
    %5 = vector.load %arg9[%c0_3, %c0_4] : memref<2x128xf32, #tpu.memory_space<vmem>>, vector<2x128xf32>
    %6 = vector.broadcast %4 : vector<2x1xf32> to vector<2x128xf32>
    %7 = arith.mulf %6, %5 : vector<2x128xf32>
    %c0_5 = arith.constant 0 : index
    %c0_6 = arith.constant 0 : index
    %8 = vector.load %arg10[%c0_5, %c0_6] : memref<2x128xf32, #tpu.memory_space<vmem>>, vector<2x128xf32>
    %9 = vector.broadcast %4 : vector<2x1xf32> to vector<2x128xf32>
    %10 = arith.mulf %9, %8 : vector<2x128xf32>
    %c0_7 = arith.constant 0 : index
    %c0_8 = arith.constant 0 : index
    %c0_9 = arith.constant 0 : index
    %11 = vector.load %arg1[%c0_7, %c0_8, %c0_9] : memref<1x2x512xf32, #tpu.memory_space<vmem>>, vector<1x2x512xf32>
    %12 = vector.shape_cast %11 : vector<1x2x512xf32> to vector<2x512xf32>
    %13 = arith.truncf %7 : vector<2x128xf32> to vector<2x128xbf16>
    %c0_10 = arith.constant 0 : index
    %c0_11 = arith.constant 0 : index
    %14 = vector.load %arg5[%c0_10, %c0_11] : memref<128x512xbf16, #tpu.memory_space<vmem>>, vector<128x512xbf16>
    %cst = arith.constant dense<0.000000e+00> : vector<2x512xf32>
    %15 = tpu.matmul %13, %14, %cst {dimension_numbers = #tpu.dot_dimension_numbers<[1], [0], [0], [1], [0, 0, 1, 1], [], []>} : vector<2x128xbf16>, vector<128x512xbf16>, vector<2x512xf32> -> vector<2x512xf32>
    %16 = arith.addf %12, %15 : vector<2x512xf32>
    %17 = vector.extract_strided_slice %16 {offsets = [0, 0], sizes = [2, 128], strides = [1, 1]} : vector<2x512xf32> to vector<2x128xf32>
    %18 = arith.negf %17 : vector<2x128xf32>
    %19 = math.exp %18 : vector<2x128xf32>
    %cst_12 = arith.constant 1.000000e+00 : f32
    %20 = vector.broadcast %cst_12 : f32 to vector<2x128xf32>
    %21 = arith.addf %20, %19 : vector<2x128xf32>
    %22 = arith.divf %20, %21 : vector<2x128xf32>
    %23 = vector.extract_strided_slice %16 {offsets = [0, 128], sizes = [2, 128], strides = [1, 1]} : vector<2x512xf32> to vector<2x128xf32>
    %24 = arith.negf %23 : vector<2x128xf32>
    %25 = math.exp %24 : vector<2x128xf32>
    %cst_13 = arith.constant 1.000000e+00 : f32
    %26 = vector.broadcast %cst_13 : f32 to vector<2x128xf32>
    %27 = arith.addf %26, %25 : vector<2x128xf32>
    %28 = arith.divf %26, %27 : vector<2x128xf32>
    %29 = vector.extract_strided_slice %16 {offsets = [0, 256], sizes = [2, 128], strides = [1, 1]} : vector<2x512xf32> to vector<2x128xf32>
    %30 = math.tanh %29 : vector<2x128xf32>
    %31 = vector.extract_strided_slice %16 {offsets = [0, 384], sizes = [2, 128], strides = [1, 1]} : vector<2x512xf32> to vector<2x128xf32>
    %32 = arith.negf %31 : vector<2x128xf32>
    %33 = math.exp %32 : vector<2x128xf32>
    %cst_14 = arith.constant 1.000000e+00 : f32
    %34 = vector.broadcast %cst_14 : f32 to vector<2x128xf32>
    %35 = arith.addf %34, %33 : vector<2x128xf32>
    %36 = arith.divf %34, %35 : vector<2x128xf32>
    %37 = arith.mulf %28, %10 : vector<2x128xf32>
    %38 = arith.mulf %22, %30 : vector<2x128xf32>
    %39 = arith.addf %37, %38 : vector<2x128xf32>
    %40 = math.tanh %39 : vector<2x128xf32>
    %41 = arith.mulf %36, %40 : vector<2x128xf32>
    %c0_15 = arith.constant 0 : index
    %c0_16 = arith.constant 0 : index
    %42 = vector.load %arg9[%c0_15, %c0_16] : memref<2x128xf32, #tpu.memory_space<vmem>>, vector<2x128xf32>
    tpu.vector_store %arg9[%c0_15, %c0_16], %41 {strides = array<i32>} : memref<2x128xf32, #tpu.memory_space<vmem>>, vector<2x128xf32>,
    %c0_17 = arith.constant 0 : index
    %c0_18 = arith.constant 0 : index
    %43 = vector.load %arg10[%c0_17, %c0_18] : memref<2x128xf32, #tpu.memory_space<vmem>>, vector<2x128xf32>
    tpu.vector_store %arg10[%c0_17, %c0_18], %39 {strides = array<i32>} : memref<2x128xf32, #tpu.memory_space<vmem>>, vector<2x128xf32>,
    %44 = vector.shape_cast %41 : vector<2x128xf32> to vector<1x2x128xf32>
    %c0_19 = arith.constant 0 : index
    %c0_20 = arith.constant 0 : index
    %c0_21 = arith.constant 0 : index
    %45 = vector.load %arg6[%c0_19, %c0_20, %c0_21] : memref<1x2x128xf32, #tpu.memory_space<vmem>>, vector<1x2x128xf32>
    tpu.vector_store %arg6[%c0_19, %c0_20, %c0_21], %44 {strides = array<i32>} : memref<1x2x128xf32, #tpu.memory_space<vmem>>, vector<1x2x128xf32>,
    %c1_i32 = arith.constant 1 : i32
    %46 = arith.cmpi eq, %arg0, %c1_i32 : i32
    %47 = arith.extui %46 : i1 to i32
    %c0_i32_22 = arith.constant 0 : i32
    %48 = arith.cmpi ne, %47, %c0_i32_22 : i32
    scf.if %48 {
      %c0_23 = arith.constant 0 : index
      %c0_24 = arith.constant 0 : index
      %49 = vector.load %arg7[%c0_23, %c0_24] : memref<2x128xf32, #tpu.memory_space<vmem>>, vector<2x128xf32>
      tpu.vector_store %arg7[%c0_23, %c0_24], %41 {strides = array<i32>} : memref<2x128xf32, #tpu.memory_space<vmem>>, vector<2x128xf32>,
      %c0_25 = arith.constant 0 : index
      %c0_26 = arith.constant 0 : index
      %50 = vector.load %arg8[%c0_25, %c0_26] : memref<2x128xf32, #tpu.memory_space<vmem>>, vector<2x128xf32>
      tpu.vector_store %arg8[%c0_25, %c0_26], %39 {strides = array<i32>} : memref<2x128xf32, #tpu.memory_space<vmem>>, vector<2x128xf32>,
    } else {
    }
    return
  }
  func.func @transform_0(%arg0: i32) -> (i32, i32, i32) {
    %c0_i32 = arith.constant 0 : i32
    %c0_i32_0 = arith.constant 0 : i32
    %c0_i32_1 = arith.constant 0 : i32
    return %arg0, %c0_i32, %c0_i32_0 : i32, i32, i32
  }
  func.func @transform_1(%arg0: i32) -> (i32, i32, i32) {
    %c0_i32 = arith.constant 0 : i32
    %c0_i32_0 = arith.constant 0 : i32
    %c0_i32_1 = arith.constant 0 : i32
    return %arg0, %c0_i32, %c0_i32_0 : i32, i32, i32
  }
  func.func @transform_2(%arg0: i32) -> (i32, i32) {
    %c0_i32 = arith.constant 0 : i32
    %c0_i32_0 = arith.constant 0 : i32
    %c0_i32_1 = arith.constant 0 : i32
    return %c0_i32, %c0_i32_0 : i32, i32
  }
  func.func @transform_3(%arg0: i32) -> (i32, i32) {
    %c0_i32 = arith.constant 0 : i32
    %c0_i32_0 = arith.constant 0 : i32
    %c0_i32_1 = arith.constant 0 : i32
    return %c0_i32, %c0_i32_0 : i32, i32
  }
  func.func @transform_4(%arg0: i32) -> (i32, i32) {
    %c0_i32 = arith.constant 0 : i32
    %c0_i32_0 = arith.constant 0 : i32
    %c0_i32_1 = arith.constant 0 : i32
    return %c0_i32, %c0_i32_0 : i32, i32
  }
  func.func @transform_5(%arg0: i32) -> (i32, i32, i32) {
    %c0_i32 = arith.constant 0 : i32
    %c0_i32_0 = arith.constant 0 : i32
    %c0_i32_1 = arith.constant 0 : i32
    return %arg0, %c0_i32, %c0_i32_0 : i32, i32, i32
  }
  func.func @transform_6(%arg0: i32) -> (i32, i32) {
    %c0_i32 = arith.constant 0 : i32
    %c0_i32_0 = arith.constant 0 : i32
    %c0_i32_1 = arith.constant 0 : i32
    return %c0_i32, %c0_i32_0 : i32, i32
  }
  func.func @transform_7(%arg0: i32) -> (i32, i32) {
    %c0_i32 = arith.constant 0 : i32
    %c0_i32_0 = arith.constant 0 : i32
    %c0_i32_1 = arith.constant 0 : i32
    return %c0_i32, %c0_i32_0 : i32, i32
  }
}

module attributes {stable_mosaic.version = 11 : i64} {
  func.func @_heads_kernel(%arg0: i32, %arg1: memref<4x128xbf16, #tpu.memory_space<vmem>>, %arg2: memref<128x128xbf16, #tpu.memory_space<vmem>>, %arg3: memref<1x128xf32, #tpu.memory_space<vmem>>, %arg4: memref<128x128xbf16, #tpu.memory_space<vmem>>, %arg5: memref<1x128xf32, #tpu.memory_space<vmem>>, %arg6: memref<4x128xf32, #tpu.memory_space<vmem>>) attributes {dimension_semantics = [#tpu.dimension_semantics<parallel>], iteration_bounds = array<i64: 1>, scalar_prefetch = 0 : i64, scratch_operands = 0 : i64, tpu.core_type = #tpu.core_type<tc>, window_params = [{transform_indices = @transform_0, window_bounds = array<i64: 4, 128>}, {pipeline_mode = #tpu.pipeline_mode<synchronous>, transform_indices = @transform_1, window_bounds = array<i64: 128, 128>}, {pipeline_mode = #tpu.pipeline_mode<synchronous>, transform_indices = @transform_2, window_bounds = array<i64: 1, 128>}, {pipeline_mode = #tpu.pipeline_mode<synchronous>, transform_indices = @transform_3, window_bounds = array<i64: 128, 128>}, {pipeline_mode = #tpu.pipeline_mode<synchronous>, transform_indices = @transform_4, window_bounds = array<i64: 1, 128>}, {transform_indices = @transform_5, window_bounds = array<i64: 4, 128>}]} {
    %c0 = arith.constant 0 : index
    %c0_0 = arith.constant 0 : index
    %0 = vector.load %arg1[%c0, %c0_0] : memref<4x128xbf16, #tpu.memory_space<vmem>>, vector<4x128xbf16>
    %c0_1 = arith.constant 0 : index
    %c0_2 = arith.constant 0 : index
    %1 = vector.load %arg2[%c0_1, %c0_2] : memref<128x128xbf16, #tpu.memory_space<vmem>>, vector<128x128xbf16>
    %cst = arith.constant dense<0.000000e+00> : vector<4x128xf32>
    %2 = tpu.matmul %0, %1, %cst {dimension_numbers = #tpu.dot_dimension_numbers<[1], [0], [0], [1], [0, 0, 1, 1], [], []>} : vector<4x128xbf16>, vector<128x128xbf16>, vector<4x128xf32> -> vector<4x128xf32>
    %c0_3 = arith.constant 0 : index
    %c0_4 = arith.constant 0 : index
    %3 = vector.load %arg3[%c0_3, %c0_4] : memref<1x128xf32, #tpu.memory_space<vmem>>, vector<1x128xf32>
    %4 = vector.broadcast %3 : vector<1x128xf32> to vector<4x128xf32>
    %5 = arith.addf %2, %4 : vector<4x128xf32>
    %6 = math.tanh %5 : vector<4x128xf32>
    %7 = arith.truncf %6 : vector<4x128xf32> to vector<4x128xbf16>
    %c0_5 = arith.constant 0 : index
    %c0_6 = arith.constant 0 : index
    %8 = vector.load %arg4[%c0_5, %c0_6] : memref<128x128xbf16, #tpu.memory_space<vmem>>, vector<128x128xbf16>
    %cst_7 = arith.constant dense<0.000000e+00> : vector<4x128xf32>
    %9 = tpu.matmul %7, %8, %cst_7 {dimension_numbers = #tpu.dot_dimension_numbers<[1], [0], [0], [1], [0, 0, 1, 1], [], []>} : vector<4x128xbf16>, vector<128x128xbf16>, vector<4x128xf32> -> vector<4x128xf32>
    %c0_8 = arith.constant 0 : index
    %c0_9 = arith.constant 0 : index
    %10 = vector.load %arg5[%c0_8, %c0_9] : memref<1x128xf32, #tpu.memory_space<vmem>>, vector<1x128xf32>
    %11 = vector.broadcast %10 : vector<1x128xf32> to vector<4x128xf32>
    %12 = arith.addf %9, %11 : vector<4x128xf32>
    %c0_10 = arith.constant 0 : index
    %c0_11 = arith.constant 0 : index
    %13 = vector.load %arg6[%c0_10, %c0_11] : memref<4x128xf32, #tpu.memory_space<vmem>>, vector<4x128xf32>
    tpu.vector_store %arg6[%c0_10, %c0_11], %12 {strides = array<i32>} : memref<4x128xf32, #tpu.memory_space<vmem>>, vector<4x128xf32>,
    return
  }
  func.func @transform_0(%arg0: i32) -> (i32, i32) {
    %c0_i32 = arith.constant 0 : i32
    %c0_i32_0 = arith.constant 0 : i32
    return %arg0, %c0_i32 : i32, i32
  }
  func.func @transform_1(%arg0: i32) -> (i32, i32) {
    %c0_i32 = arith.constant 0 : i32
    %c0_i32_0 = arith.constant 0 : i32
    %c0_i32_1 = arith.constant 0 : i32
    return %c0_i32, %c0_i32_0 : i32, i32
  }
  func.func @transform_2(%arg0: i32) -> (i32, i32) {
    %c0_i32 = arith.constant 0 : i32
    %c0_i32_0 = arith.constant 0 : i32
    %c0_i32_1 = arith.constant 0 : i32
    return %c0_i32, %c0_i32_0 : i32, i32
  }
  func.func @transform_3(%arg0: i32) -> (i32, i32) {
    %c0_i32 = arith.constant 0 : i32
    %c0_i32_0 = arith.constant 0 : i32
    %c0_i32_1 = arith.constant 0 : i32
    return %c0_i32, %c0_i32_0 : i32, i32
  }
  func.func @transform_4(%arg0: i32) -> (i32, i32) {
    %c0_i32 = arith.constant 0 : i32
    %c0_i32_0 = arith.constant 0 : i32
    %c0_i32_1 = arith.constant 0 : i32
    return %c0_i32, %c0_i32_0 : i32, i32
  }
  func.func @transform_5(%arg0: i32) -> (i32, i32) {
    %c0_i32 = arith.constant 0 : i32
    %c0_i32_0 = arith.constant 0 : i32
    return %arg0, %c0_i32 : i32, i32
  }
}

</mosaic_0001>

<llo_original>
// kernel: lstm_agent_forward.7
$region0: #{lstm_agent_forward.7}
  #allocation0 [shape = 'u32[]', space=smem, size = 0x4, offset = 0x4, fixed_abs, tag = 'smem constant byte address 0x4 - core index']
  #allocation1 [shape = 'u32[144,128]{1,0:T(1,128)}', space=vmem, size = 0x12000, scoped, tag = 'internal scratch']
  %s0 = inlined_call_operand.vmem [shape: bf16[256,192], index: 0, kind: input, shape index: {}]
  %s1 = inlined_call_operand.vmem [shape: bf16[192,128], index: 1, kind: input, shape index: {}]
  %s2 = inlined_call_operand.vmem [shape: f32[1,128], index: 2, kind: input, shape index: {}]
  %s3 = inlined_call_operand.vmem [shape: bf16[256,128], index: 3, kind: output, shape index: {}]
  %s4 = sld [smem:[#allocation0]]
  $region22: #{lstm_agent_forward.7} parent=0
    _
  %s6 = ssub.s32 1, %s4
  %s7 = scalar_select 0, %s6, %s4
  // Predicated region
  $region2: #{lstm_agent_forward.7} parent=0 // pred_check
    _
  $region3: #{lstm_agent_forward.7} parent=0 // pred_check_branch
    %9 = sbr.rel (0) target = $region5
  $region4: #{lstm_agent_forward.7} parent=0 // pred_region
    _
  $region5: #{lstm_agent_forward.7} parent=0 // pred_fallthru
    _
  // Predicated region
  $region6: #{lstm_agent_forward.7} parent=0 // pred_check
    _
  $region7: #{lstm_agent_forward.7} parent=0 // pred_check_branch
    %11 = sbr.rel (0) target = $region9
  $region8: #{lstm_agent_forward.7} parent=0 // pred_region
    _
  $region9: #{lstm_agent_forward.7} parent=0 // pred_fallthru
    _
  // Predicated region
  $region10: #{lstm_agent_forward.7} parent=0 // pred_check
    _
  $region11: #{lstm_agent_forward.7} parent=0 // pred_check_branch
    %13 = sbr.rel (0) target = $region13
  $region12: #{lstm_agent_forward.7} parent=0 // pred_region
    _
  $region13: #{lstm_agent_forward.7} parent=0 // pred_fallthru
    _
  %v15 = vld [vmem:[%s0] sm:$0xff]
  %v16 = vld [vmem:[%s0 + $0x8] sm:$0xff]
  %v17 = vld [vmem:[%s0 + $0x10] sm:$0xff]
  %v18 = vld [vmem:[%s0 + $0x18] sm:$0xff]
  %v19 = vld [vmem:[%s0 + $0x20] sm:$0xff]
  %v20 = vld [vmem:[%s0 + $0x28] sm:$0xff]
  %v21 = vld [vmem:[%s0 + $0x30] sm:$0xff]
  %v22 = vld [vmem:[%s0 + $0x38] sm:$0xff]
  %v23 = vld [vmem:[%s0 + $0x40] sm:$0xff]
  %v24 = vld [vmem:[%s0 + $0x48] sm:$0xff]
  %v25 = vld [vmem:[%s0 + $0x50] sm:$0xff]
  %v26 = vld [vmem:[%s0 + $0x58] sm:$0xff]
  %v27 = vld [vmem:[%s0 + $0x60] sm:$0xff]
  %v28 = vld [vmem:[%s0 + $0x68] sm:$0xff]
  %v29 = vld [vmem:[%s0 + $0x70] sm:$0xff]
  %v30 = vld [vmem:[%s0 + $0x78] sm:$0xff]
  %v31 = vld [vmem:[%s0 + $0x80] sm:$0xff]
  %v32 = vld [vmem:[%s0 + $0x88] sm:$0xff]
  %v33 = vld [vmem:[%s0 + $0x90] sm:$0xff]
  %v34 = vld [vmem:[%s0 + $0x98] sm:$0xff]
  %v35 = vld [vmem:[%s0 + $0xa0] sm:$0xff]
  %v36 = vld [vmem:[%s0 + $0xa8] sm:$0xff]
  %v37 = vld [vmem:[%s0 + $0xb0] sm:$0xff]
  %v38 = vld [vmem:[%s0 + $0xb8] sm:$0xff]
  %v39 = vld [vmem:[%s0 + $0xc0] sm:$0xff]
  %v40 = vld [vmem:[%s0 + $0xc8] sm:$0xff]
  %v41 = vld [vmem:[%s0 + $0xd0] sm:$0xff]
  %v42 = vld [vmem:[%s0 + $0xd8] sm:$0xff]
  %v43 = vld [vmem:[%s0 + $0xe0] sm:$0xff]
  %v44 = vld [vmem:[%s0 + $0xe8] sm:$0xff]
  %v45 = vld [vmem:[%s0 + $0xf0] sm:$0xff]
  %v46 = vld [vmem:[%s0 + $0xf8] sm:$0xff]
  %v47 = vld [vmem:[%s1] sm:$0xf]
  %v48 = vld [vmem:[%s1 + $0x4] sm:$0xf]
  %v49 = vld [vmem:[%s1 + $0x8] sm:$0xf]
  %v50 = vld [vmem:[%s1 + $0xc] sm:$0xf]
  %v51 = vld [vmem:[%s1 + $0x10] sm:$0xf]
  %v52 = vld [vmem:[%s1 + $0x14] sm:$0xf]
  %v53 = vld [vmem:[%s1 + $0x18] sm:$0xf]
  %v54 = vld [vmem:[%s1 + $0x1c] sm:$0xf]
  %v55 = vld [vmem:[%s1 + $0x20] sm:$0xf]
  %v56 = vld [vmem:[%s1 + $0x24] sm:$0xf]
  %v57 = vld [vmem:[%s1 + $0x28] sm:$0xf]
  %v58 = vld [vmem:[%s1 + $0x2c] sm:$0xf]
  %v59 = vld [vmem:[%s1 + $0x30] sm:$0xf]
  %v60 = vld [vmem:[%s1 + $0x34] sm:$0xf]
  %v61 = vld [vmem:[%s1 + $0x38] sm:$0xf]
  %v62 = vld [vmem:[%s1 + $0x3c] sm:$0xf]
  %v63 = vld [vmem:[%s1 + $0x40] sm:$0xf]
  %v64 = vld [vmem:[%s1 + $0x44] sm:$0xf]
  %v65 = vld [vmem:[%s1 + $0x48] sm:$0xf]
  %v66 = vld [vmem:[%s1 + $0x4c] sm:$0xf]
  %v67 = vld [vmem:[%s1 + $0x50] sm:$0xf]
  %v68 = vld [vmem:[%s1 + $0x54] sm:$0xf]
  %v69 = vld [vmem:[%s1 + $0x58] sm:$0xf]
  %v70 = vld [vmem:[%s1 + $0x5c] sm:$0xf]
  %v71 = vld [vmem:[%s2] sm:$0x1]
  %v73 = vlaneseq
  %v74 = vshrl.u32 %v73, 7
  %v75 = vsub.s32 0, %v74
  %v76 = vrot.slane %v71, %v75
  %v110 = vunpack.c.l.b16 %v15
  %v111 = vunpack.c.h.b16 %v15
  %v112 = vunpack.c.l.b16 %v16
  %v113 = vunpack.c.h.b16 %v16
  %v114 = vunpack.c.l.b16 %v17
  %v115 = vunpack.c.h.b16 %v17
  %v116 = vunpack.c.l.b16 %v18
  %v117 = vunpack.c.h.b16 %v18
  %v118 = vunpack.c.l.b16 %v19
  %v119 = vunpack.c.h.b16 %v19
  %v120 = vunpack.c.l.b16 %v20
  %v121 = vunpack.c.h.b16 %v20
  %v122 = vunpack.c.l.b16 %v21
  %v123 = vunpack.c.h.b16 %v21
  %v124 = vunpack.c.l.b16 %v22
  %v125 = vunpack.c.h.b16 %v22
  %v126 = vunpack.c.l.b16 %v23
  %v127 = vunpack.c.h.b16 %v23
  %v128 = vunpack.c.l.b16 %v24
  %v129 = vunpack.c.h.b16 %v24
  %v130 = vunpack.c.l.b16 %v25
  %v131 = vunpack.c.h.b16 %v25
  %v132 = vunpack.c.l.b16 %v26
  %v133 = vunpack.c.h.b16 %v26
  %v134 = vunpack.c.l.b16 %v27
  %v135 = vunpack.c.h.b16 %v27
  %v136 = vunpack.c.l.b16 %v28
  %v137 = vunpack.c.h.b16 %v28
  %v138 = vunpack.c.l.b16 %v29
  %v139 = vunpack.c.h.b16 %v29
  %v140 = vunpack.c.l.b16 %v30
  %v141 = vunpack.c.h.b16 %v30
  %v142 = vunpack.c.l.b16 %v31
  %v143 = vunpack.c.h.b16 %v31
  %v144 = vunpack.c.l.b16 %v32
  %v145 = vunpack.c.h.b16 %v32
  %v146 = vunpack.c.l.b16 %v33
  %v147 = vunpack.c.h.b16 %v33
  %v148 = vunpack.c.l.b16 %v34
  %v149 = vunpack.c.h.b16 %v34
  %v150 = vunpack.c.l.b16 %v35
  %v151 = vunpack.c.h.b16 %v35
  %v152 = vunpack.c.l.b16 %v36
  %v153 = vunpack.c.h.b16 %v36
  %v154 = vunpack.c.l.b16 %v37
  %v155 = vunpack.c.h.b16 %v37
  %v156 = vunpack.c.l.b16 %v38
  %v157 = vunpack.c.h.b16 %v38
  %v158 = vunpack.c.l.b16 %v39
  %v159 = vunpack.c.h.b16 %v39
  %v160 = vunpack.c.l.b16 %v40
  %v161 = vunpack.c.h.b16 %v40
  %v162 = vunpack.c.l.b16 %v41
  %v163 = vunpack.c.h.b16 %v41
  %v164 = vunpack.c.l.b16 %v42
  %v165 = vunpack.c.h.b16 %v42
  %v166 = vunpack.c.l.b16 %v43
  %v167 = vunpack.c.h.b16 %v43
  %v168 = vunpack.c.l.b16 %v44
  %v169 = vunpack.c.h.b16 %v44
  %v170 = vunpack.c.l.b16 %v45
  %v171 = vunpack.c.h.b16 %v45
  %v172 = vunpack.c.l.b16 %v46
  %v173 = vunpack.c.h.b16 %v46
  %v174 = vpack.c.b16 %v112, %v110
  %v175 = vpack.c.b16 %v113, %v111
  %v176 = vpack.c.b16 %v116, %v114
  %v177 = vpack.c.b16 %v117, %v115
  %v178 = vpack.c.b16 %v120, %v118
  %v179 = vpack.c.b16 %v121, %v119
  %v180 = vpack.c.b16 %v124, %v122
  %v181 = vpack.c.b16 %v125, %v123
  %v182 = vpack.c.b16 %v128, %v126
  %v183 = vpack.c.b16 %v129, %v127
  %v184 = vpack.c.b16 %v132, %v130
  %v185 = vpack.c.b16 %v133, %v131
  %v186 = vpack.c.b16 %v136, %v134
  %v187 = vpack.c.b16 %v137, %v135
  %v188 = vpack.c.b16 %v140, %v138
  %v189 = vpack.c.b16 %v141, %v139
  %v190 = vpack.c.b16 %v144, %v142
  %v191 = vpack.c.b16 %v145, %v143
  %v192 = vpack.c.b16 %v148, %v146
  %v193 = vpack.c.b16 %v149, %v147
  %v194 = vpack.c.b16 %v152, %v150
  %v195 = vpack.c.b16 %v153, %v151
  %v196 = vpack.c.b16 %v156, %v154
  %v197 = vpack.c.b16 %v157, %v155
  %v198 = vpack.c.b16 %v160, %v158
  %v199 = vpack.c.b16 %v161, %v159
  %v200 = vpack.c.b16 %v164, %v162
  %v201 = vpack.c.b16 %v165, %v163
  %v202 = vpack.c.b16 %v168, %v166
  %v203 = vpack.c.b16 %v169, %v167
  %v204 = vpack.c.b16 %v172, %v170
  %v205 = vpack.c.b16 %v173, %v171
  %v246 = vunpack.c.l.b16 %v47
  %v247 = vunpack.c.l.b16 %v48
  %v248 = vunpack.c.l.b16 %v49
  %v249 = vunpack.c.l.b16 %v50
  %v250 = vunpack.c.l.b16 %v51
  %v251 = vunpack.c.l.b16 %v52
  %v252 = vunpack.c.l.b16 %v53
  %v253 = vunpack.c.l.b16 %v54
  %v254 = vunpack.c.l.b16 %v55
  %v255 = vunpack.c.l.b16 %v56
  %v256 = vunpack.c.l.b16 %v57
  %v257 = vunpack.c.l.b16 %v58
  %v258 = vunpack.c.l.b16 %v59
  %v259 = vunpack.c.l.b16 %v60
  %v260 = vunpack.c.l.b16 %v61
  %v261 = vunpack.c.l.b16 %v62
  %v262 = vunpack.c.l.b16 %v63
  %v263 = vunpack.c.l.b16 %v64
  %v264 = vunpack.c.l.b16 %v65
  %v265 = vunpack.c.l.b16 %v66
  %v266 = vunpack.c.l.b16 %v67
  %v267 = vunpack.c.l.b16 %v68
  %v268 = vunpack.c.l.b16 %v69
  %v269 = vunpack.c.l.b16 %v70
  %v270 = vpack.c.b16 %v247, %v246
  %v271 = vpack.c.b16 %v249, %v248
  %v272 = vpack.c.b16 %v251, %v250
  %v273 = vpack.c.b16 %v253, %v252
  %v274 = vpack.c.b16 %v255, %v254
  %v275 = vpack.c.b16 %v257, %v256
  %v276 = vpack.c.b16 %v259, %v258
  %v277 = vpack.c.b16 %v261, %v260
  %v278 = vpack.c.b16 %v263, %v262
  %v279 = vpack.c.b16 %v265, %v264
  %v280 = vpack.c.b16 %v267, %v266
  %v281 = vpack.c.b16 %v269, %v268
  %vm294 = vcmask 523264
  %v296 = vsel %vm294, %v175, 0
  %v299 = vsel %vm294, %v177, 0
  %v302 = vsel %vm294, %v179, 0
  %v305 = vsel %vm294, %v181, 0
  %v308 = vsel %vm294, %v183, 0
  %v311 = vsel %vm294, %v185, 0
  %v314 = vsel %vm294, %v187, 0
  %v317 = vsel %vm294, %v189, 0
  %v320 = vsel %vm294, %v191, 0
  %v323 = vsel %vm294, %v193, 0
  %v326 = vsel %vm294, %v195, 0
  %v329 = vsel %vm294, %v197, 0
  %v332 = vsel %vm294, %v199, 0
  %v335 = vsel %vm294, %v201, 0
  %v338 = vsel %vm294, %v203, 0
  %v341 = vsel %vm294, %v205, 0
  %343 = vmatprep.subr.bf16.mxu0 0
  %344 = vmatpush1.bf16.msra.mxu0 %v270
  %345 = vmatprep.subr.bf16.mxu0 0
  %346 = vmatpush1.bf16.msra.mxu0 %v271
  %347 = vmatprep.subr.bf16.mxu0 0
  %348 = vmatpush1.bf16.msra.mxu0 %v272
  %349 = vmatprep.subr.bf16.mxu0 0
  %350 = vmatpush1.bf16.msra.mxu0 %v273
  %351 = vmatprep.subr.bf16.mxu0 0
  %352 = vmatpush1.bf16.msra.mxu0 %v274
  %353 = vmatprep.subr.bf16.mxu0 0
  %354 = vmatpush1.bf16.msra.mxu0 %v275
  %355 = vmatprep.subr.bf16.mxu0 0
  %356 = vmatpush1.bf16.msra.mxu0 %v276
  %357 = vmatprep.subr.bf16.mxu0 0
  %358 = vmatpush1.bf16.msra.mxu0 %v277
  %359 = vmatprep.subr.bf16.mxu0 0
  %360 = vmatpush1.bf16.msra.mxu0 %v278
  %361 = vmatprep.subr.bf16.mxu0 0
  %362 = vmatpush1.bf16.msra.mxu0 %v279
  %363 = vmatprep.subr.bf16.mxu0 0
  %364 = vmatpush1.bf16.msra.mxu0 %v280
  %365 = vmatprep.subr.bf16.mxu0 0
  %366 = vmatpush1.bf16.msra.mxu0 %v281
  %367 = vmatprep.subr.bf16.mxu0 0
  %368 = vmatpush1.bf16.msra.mxu0 0
  %369 = vmatprep.subr.bf16.mxu0 0
  %370 = vmatpush1.bf16.msra.mxu0 0
  %371 = vmatprep.subr.bf16.mxu0 0
  %372 = vmatpush1.bf16.msra.mxu0 0
  %373 = vmatprep.subr.bf16.mxu0 0
  %374 = vmatpush1.bf16.msra.mxu0 0
  %375 = vmatprep.mubr.bf16.mxu0 %v296
  %376 = vmatmul.mubr.bf16.gmra.mrb[0].mxu0 %v174
  %v377 = vpop.f32.mrb[0].mxu0
  %v378 = vadd.f32 %v76, %v377
  %v379 = vpop.f32.mrb[0].mxu0
  %v380 = vpop.f32.mrb[0].mxu0
  %v381 = vadd.f32 %v76, %v380
  %v382 = vpop.f32.mrb[0].mxu0
  %383 = vmatprep.mubr.bf16.mxu0 %v299
  %384 = vmatmul.mubr.bf16.gmra.mrb[0].mxu0 %v176
  %v385 = vpop.f32.mrb[0].mxu0
  %v386 = vadd.f32 %v76, %v385
  %v387 = vpop.f32.mrb[0].mxu0
  %v388 = vpop.f32.mrb[0].mxu0
  %v389 = vadd.f32 %v76, %v388
  %v390 = vpop.f32.mrb[0].mxu0
  %391 = vmatprep.mubr.bf16.mxu0 %v302
  %392 = vmatmul.mubr.bf16.gmra.mrb[0].mxu0 %v178
  %v393 = vpop.f32.mrb[0].mxu0
  %v394 = vadd.f32 %v76, %v393
  %v395 = vpop.f32.mrb[0].mxu0
  %v396 = vpop.f32.mrb[0].mxu0
  %v397 = vadd.f32 %v76, %v396
  %v398 = vpop.f32.mrb[0].mxu0
  %399 = vmatprep.mubr.bf16.mxu0 %v305
  %400 = vmatmul.mubr.bf16.gmra.mrb[0].mxu0 %v180
  %v401 = vpop.f32.mrb[0].mxu0
  %v402 = vadd.f32 %v76, %v401
  %v403 = vpop.f32.mrb[0].mxu0
  %v404 = vpop.f32.mrb[0].mxu0
  %v405 = vadd.f32 %v76, %v404
  %v406 = vpop.f32.mrb[0].mxu0
  %407 = vmatprep.mubr.bf16.mxu0 %v308
  %408 = vmatmul.mubr.bf16.gmra.mrb[0].mxu0 %v182
  %v409 = vpop.f32.mrb[0].mxu0
  %v410 = vadd.f32 %v76, %v409
  %v411 = vpop.f32.mrb[0].mxu0
  %v412 = vpop.f32.mrb[0].mxu0
  %v413 = vadd.f32 %v76, %v412
  %v414 = vpop.f32.mrb[0].mxu0
  %415 = vmatprep.mubr.bf16.mxu0 %v311
  %416 = vmatmul.mubr.bf16.gmra.mrb[0].mxu0 %v184
  %v417 = vpop.f32.mrb[0].mxu0
  %v418 = vadd.f32 %v76, %v417
  %v419 = vpop.f32.mrb[0].mxu0
  %v420 = vpop.f32.mrb[0].mxu0
  %v421 = vadd.f32 %v76, %v420
  %v422 = vpop.f32.mrb[0].mxu0
  %423 = vmatprep.mubr.bf16.mxu0 %v314
  %424 = vmatmul.mubr.bf16.gmra.mrb[0].mxu0 %v186
  %v425 = vpop.f32.mrb[0].mxu0
  %v426 = vadd.f32 %v76, %v425
  %v427 = vpop.f32.mrb[0].mxu0
  %v428 = vpop.f32.mrb[0].mxu0
  %v429 = vadd.f32 %v76, %v428
  %v430 = vpop.f32.mrb[0].mxu0
  %431 = vmatprep.mubr.bf16.mxu0 %v317
  %432 = vmatmul.mubr.bf16.gmra.mrb[0].mxu0 %v188
  %v433 = vpop.f32.mrb[0].mxu0
  %v434 = vadd.f32 %v76, %v433
  %v435 = vpop.f32.mrb[0].mxu0
  %v436 = vpop.f32.mrb[0].mxu0
  %v437 = vadd.f32 %v76, %v436
  %v438 = vpop.f32.mrb[0].mxu0
  %439 = vmatprep.mubr.bf16.mxu0 %v320
  %440 = vmatmul.mubr.bf16.gmra.mrb[0].mxu0 %v190
  %v441 = vpop.f32.mrb[0].mxu0
  %v442 = vadd.f32 %v76, %v441
  %v443 = vpop.f32.mrb[0].mxu0
  %v444 = vpop.f32.mrb[0].mxu0
  %v445 = vadd.f32 %v76, %v444
  %v446 = vpop.f32.mrb[0].mxu0
  %447 = vmatprep.mubr.bf16.mxu0 %v323
  %448 = vmatmul.mubr.bf16.gmra.mrb[0].mxu0 %v192
  %v449 = vpop.f32.mrb[0].mxu0
  %v450 = vadd.f32 %v76, %v449
  %v451 = vpop.f32.mrb[0].mxu0
  %v452 = vpop.f32.mrb[0].mxu0
  %v453 = vadd.f32 %v76, %v452
  %v454 = vpop.f32.mrb[0].mxu0
  %455 = vmatprep.mubr.bf16.mxu0 %v326
  %456 = vmatmul.mubr.bf16.gmra.mrb[0].mxu0 %v194
  %v457 = vpop.f32.mrb[0].mxu0
  %v458 = vadd.f32 %v76, %v457
  %v459 = vpop.f32.mrb[0].mxu0
  %v460 = vpop.f32.mrb[0].mxu0
  %v461 = vadd.f32 %v76, %v460
  %v462 = vpop.f32.mrb[0].mxu0
  %463 = vmatprep.mubr.bf16.mxu0 %v329
  %464 = vmatmul.mubr.bf16.gmra.mrb[0].mxu0 %v196
  %v465 = vpop.f32.mrb[0].mxu0
  %v466 = vadd.f32 %v76, %v465
  %v467 = vpop.f32.mrb[0].mxu0
  %v468 = vpop.f32.mrb[0].mxu0
  %v469 = vadd.f32 %v76, %v468
  %v470 = vpop.f32.mrb[0].mxu0
  %471 = vmatprep.mubr.bf16.mxu0 %v332
  %472 = vmatmul.mubr.bf16.gmra.mrb[0].mxu0 %v198
  %v473 = vpop.f32.mrb[0].mxu0
  %v474 = vadd.f32 %v76, %v473
  %v475 = vpop.f32.mrb[0].mxu0
  %v476 = vpop.f32.mrb[0].mxu0
  %v477 = vadd.f32 %v76, %v476
  %v478 = vpop.f32.mrb[0].mxu0
  %479 = vmatprep.mubr.bf16.mxu0 %v335
  %480 = vmatmul.mubr.bf16.gmra.mrb[0].mxu0 %v200
  %v481 = vpop.f32.mrb[0].mxu0
  %v482 = vadd.f32 %v76, %v481
  %v483 = vpop.f32.mrb[0].mxu0
  %v484 = vpop.f32.mrb[0].mxu0
  %v485 = vadd.f32 %v76, %v484
  %v486 = vpop.f32.mrb[0].mxu0
  %487 = vmatprep.mubr.bf16.mxu0 %v338
  %488 = vmatmul.mubr.bf16.gmra.mrb[0].mxu0 %v202
  %v489 = vpop.f32.mrb[0].mxu0
  %v490 = vadd.f32 %v76, %v489
  %v491 = vpop.f32.mrb[0].mxu0
  %v492 = vpop.f32.mrb[0].mxu0
  %v493 = vadd.f32 %v76, %v492
  %v494 = vpop.f32.mrb[0].mxu0
  %495 = vmatprep.mubr.bf16.mxu0 %v341
  %496 = vmatmul.mubr.bf16.gmra.mrb[0].mxu0 %v204
  %v497 = vpop.f32.mrb[0].mxu0
  %v498 = vadd.f32 %v76, %v497
  %v499 = vpop.f32.mrb[0].mxu0
  %v500 = vpop.f32.mrb[0].mxu0
  %v501 = vadd.f32 %v76, %v500
  %v502 = vpop.f32.mrb[0].mxu0
  %503 = vdwg.mxu0
  %v504 = vmax.f32 %v378, 0.0
  %v505 = vmax.f32 %v381, 0.0
  %v506 = vmax.f32 %v386, 0.0
  %v507 = vmax.f32 %v389, 0.0
  %v508 = vmax.f32 %v394, 0.0
  %v509 = vmax.f32 %v397, 0.0
  %v510 = vmax.f32 %v402, 0.0
  %v511 = vmax.f32 %v405, 0.0
  %v512 = vmax.f32 %v410, 0.0
  %v513 = vmax.f32 %v413, 0.0
  %v514 = vmax.f32 %v418, 0.0
  %v515 = vmax.f32 %v421, 0.0
  %v516 = vmax.f32 %v426, 0.0
  %v517 = vmax.f32 %v429, 0.0
  %v518 = vmax.f32 %v434, 0.0
  %v519 = vmax.f32 %v437, 0.0
  %v520 = vmax.f32 %v442, 0.0
  %v521 = vmax.f32 %v445, 0.0
  %v522 = vmax.f32 %v450, 0.0
  %v523 = vmax.f32 %v453, 0.0
  %v524 = vmax.f32 %v458, 0.0
  %v525 = vmax.f32 %v461, 0.0
  %v526 = vmax.f32 %v466, 0.0
  %v527 = vmax.f32 %v469, 0.0
  %v528 = vmax.f32 %v474, 0.0
  %v529 = vmax.f32 %v477, 0.0
  %v530 = vmax.f32 %v482, 0.0
  %v531 = vmax.f32 %v485, 0.0
  %v532 = vmax.f32 %v490, 0.0
  %v533 = vmax.f32 %v493, 0.0
  %v534 = vmax.f32 %v498, 0.0
  %v535 = vmax.f32 %v501, 0.0
  %v536 = vpack.c.bf16 %v505, %v504
  %v537 = vpack.c.bf16 %v507, %v506
  %v538 = vpack.c.bf16 %v509, %v508
  %v539 = vpack.c.bf16 %v511, %v510
  %v540 = vpack.c.bf16 %v513, %v512
  %v541 = vpack.c.bf16 %v515, %v514
  %v542 = vpack.c.bf16 %v517, %v516
  %v543 = vpack.c.bf16 %v519, %v518
  %v544 = vpack.c.bf16 %v521, %v520
  %v545 = vpack.c.bf16 %v523, %v522
  %v546 = vpack.c.bf16 %v525, %v524
  %v547 = vpack.c.bf16 %v527, %v526
  %v548 = vpack.c.bf16 %v529, %v528
  %v549 = vpack.c.bf16 %v531, %v530
  %v550 = vpack.c.bf16 %v533, %v532
  %v551 = vpack.c.bf16 %v535, %v534
  %v568 = vunpack.c.l.b16 %v536
  %v569 = vunpack.c.h.b16 %v536
  %v570 = vunpack.c.l.b16 %v537
  %v571 = vunpack.c.h.b16 %v537
  %v572 = vunpack.c.l.b16 %v538
  %v573 = vunpack.c.h.b16 %v538
  %v574 = vunpack.c.l.b16 %v539
  %v575 = vunpack.c.h.b16 %v539
  %v576 = vunpack.c.l.b16 %v540
  %v577 = vunpack.c.h.b16 %v540
  %v578 = vunpack.c.l.b16 %v541
  %v579 = vunpack.c.h.b16 %v541
  %v580 = vunpack.c.l.b16 %v542
  %v581 = vunpack.c.h.b16 %v542
  %v582 = vunpack.c.l.b16 %v543
  %v583 = vunpack.c.h.b16 %v543
  %v584 = vunpack.c.l.b16 %v544
  %v585 = vunpack.c.h.b16 %v544
  %v586 = vunpack.c.l.b16 %v545
  %v587 = vunpack.c.h.b16 %v545
  %v588 = vunpack.c.l.b16 %v546
  %v589 = vunpack.c.h.b16 %v546
  %v590 = vunpack.c.l.b16 %v547
  %v591 = vunpack.c.h.b16 %v547
  %v592 = vunpack.c.l.b16 %v548
  %v593 = vunpack.c.h.b16 %v548
  %v594 = vunpack.c.l.b16 %v549
  %v595 = vunpack.c.h.b16 %v549
  %v596 = vunpack.c.l.b16 %v550
  %v597 = vunpack.c.h.b16 %v550
  %v598 = vunpack.c.l.b16 %v551
  %v599 = vunpack.c.h.b16 %v551
  %v600 = vpack.c.b16 %v568, %v568
  %v601 = vpack.c.b16 %v569, %v569
  %v602 = vpack.c.b16 %v570, %v570
  %v603 = vpack.c.b16 %v571, %v571
  %v604 = vpack.c.b16 %v572, %v572
  %v605 = vpack.c.b16 %v573, %v573
  %v606 = vpack.c.b16 %v574, %v574
  %v607 = vpack.c.b16 %v575, %v575
  %v608 = vpack.c.b16 %v576, %v576
  %v609 = vpack.c.b16 %v577, %v577
  %v610 = vpack.c.b16 %v578, %v578
  %v611 = vpack.c.b16 %v579, %v579
  %v612 = vpack.c.b16 %v580, %v580
  %v613 = vpack.c.b16 %v581, %v581
  %v614 = vpack.c.b16 %v582, %v582
  %v615 = vpack.c.b16 %v583, %v583
  %v616 = vpack.c.b16 %v584, %v584
  %v617 = vpack.c.b16 %v585, %v585
  %v618 = vpack.c.b16 %v586, %v586
  %v619 = vpack.c.b16 %v587, %v587
  %v620 = vpack.c.b16 %v588, %v588
  %v621 = vpack.c.b16 %v589, %v589
  %v622 = vpack.c.b16 %v590, %v590
  %v623 = vpack.c.b16 %v591, %v591
  %v624 = vpack.c.b16 %v592, %v592
  %v625 = vpack.c.b16 %v593, %v593
  %v626 = vpack.c.b16 %v594, %v594
  %v627 = vpack.c.b16 %v595, %v595
  %v628 = vpack.c.b16 %v596, %v596
  %v629 = vpack.c.b16 %v597, %v597
  %v630 = vpack.c.b16 %v598, %v598
  %v631 = vpack.c.b16 %v599, %v599
  %664 = vst [vmem:[%s3] sm:$0xf] %v600
  %665 = vst [vmem:[%s3 + $0x4] sm:$0xf] %v601
  %666 = vst [vmem:[%s3 + $0x8] sm:$0xf] %v602
  %667 = vst [vmem:[%s3 + $0xc] sm:$0xf] %v603
  %668 = vst [vmem:[%s3 + $0x10] sm:$0xf] %v604
  %669 = vst [vmem:[%s3 + $0x14] sm:$0xf] %v605
  %670 = vst [vmem:[%s3 + $0x18] sm:$0xf] %v606
  %671 = vst [vmem:[%s3 + $0x1c] sm:$0xf] %v607
  %672 = vst [vmem:[%s3 + $0x20] sm:$0xf] %v608
  %673 = vst [vmem:[%s3 + $0x24] sm:$0xf] %v609
  %674 = vst [vmem:[%s3 + $0x28] sm:$0xf] %v610
  %675 = vst [vmem:[%s3 + $0x2c] sm:$0xf] %v611
  %676 = vst [vmem:[%s3 + $0x30] sm:$0xf] %v612
  %677 = vst [vmem:[%s3 + $0x34] sm:$0xf] %v613
  %678 = vst [vmem:[%s3 + $0x38] sm:$0xf] %v614
  %679 = vst [vmem:[%s3 + $0x3c] sm:$0xf] %v615
  %680 = vst [vmem:[%s3 + $0x40] sm:$0xf] %v616
  %681 = vst [vmem:[%s3 + $0x44] sm:$0xf] %v617
  %682 = vst [vmem:[%s3 + $0x48] sm:$0xf] %v618
  %683 = vst [vmem:[%s3 + $0x4c] sm:$0xf] %v619
  %684 = vst [vmem:[%s3 + $0x50] sm:$0xf] %v620
  %685 = vst [vmem:[%s3 + $0x54] sm:$0xf] %v621
  %686 = vst [vmem:[%s3 + $0x58] sm:$0xf] %v622
  %687 = vst [vmem:[%s3 + $0x5c] sm:$0xf] %v623
  %688 = vst [vmem:[%s3 + $0x60] sm:$0xf] %v624
  %689 = vst [vmem:[%s3 + $0x64] sm:$0xf] %v625
  %690 = vst [vmem:[%s3 + $0x68] sm:$0xf] %v626
  %691 = vst [vmem:[%s3 + $0x6c] sm:$0xf] %v627
  %692 = vst [vmem:[%s3 + $0x70] sm:$0xf] %v628
  %693 = vst [vmem:[%s3 + $0x74] sm:$0xf] %v629
  %694 = vst [vmem:[%s3 + $0x78] sm:$0xf] %v630
  %695 = vst [vmem:[%s3 + $0x7c] sm:$0xf] %v631
  // Predicated region
  $region14: #{lstm_agent_forward.7} parent=0 // pred_check
    _
  $region15: #{lstm_agent_forward.7} parent=0 // pred_check_branch
    %697 = sbr.rel (0) target = $region17
  $region16: #{lstm_agent_forward.7} parent=0 // pred_region
    _
  $region17: #{lstm_agent_forward.7} parent=0 // pred_fallthru
    _
  // Predicated region
  $region18: #{lstm_agent_forward.7} parent=0 // pred_check
    _
  $region19: #{lstm_agent_forward.7} parent=0 // pred_check_branch
    %699 = sbr.rel (0) target = $region21
  $region20: #{lstm_agent_forward.7} parent=0 // pred_region
    _
  $region21: #{lstm_agent_forward.7} parent=0 // pred_fallthru
    _

// kernel: lstm_agent_forward.8
$region0: #{lstm_agent_forward.8}
  #allocation0 [shape = 'u32[]', space=smem, size = 0x4, offset = 0x4, fixed_abs, tag = 'smem constant byte address 0x4 - core index']
  #allocation1 [shape = 'u32[144,128]{1,0:T(1,128)}', space=vmem, size = 0x12000, scoped, tag = 'internal scratch']
  %s0 = inlined_call_operand.vmem [shape: bf16[36,512], index: 0, kind: input, shape index: {}]
  %s1 = inlined_call_operand.vmem [shape: bf16[512,128], index: 1, kind: input, shape index: {}]
  %s2 = inlined_call_operand.vmem [shape: f32[1,128], index: 2, kind: input, shape index: {}]
  %s3 = inlined_call_operand.vmem [shape: bf16[36,128], index: 3, kind: output, shape index: {}]
  %s4 = sld [smem:[#allocation0]]
  $region22: #{lstm_agent_forward.8} parent=0
    _
  %s6 = ssub.s32 1, %s4
  %s7 = scalar_select 0, %s6, %s4
  // Predicated region
  $region2: #{lstm_agent_forward.8} parent=0 // pred_check
    _
  $region3: #{lstm_agent_forward.8} parent=0 // pred_check_branch
    %9 = sbr.rel (0) target = $region5
  $region4: #{lstm_agent_forward.8} parent=0 // pred_region
    _
  $region5: #{lstm_agent_forward.8} parent=0 // pred_fallthru
    _
  // Predicated region
  $region6: #{lstm_agent_forward.8} parent=0 // pred_check
    _
  $region7: #{lstm_agent_forward.8} parent=0 // pred_check_branch
    %11 = sbr.rel (0) target = $region9
  $region8: #{lstm_agent_forward.8} parent=0 // pred_region
    _
  $region9: #{lstm_agent_forward.8} parent=0 // pred_fallthru
    _
  // Predicated region
  $region10: #{lstm_agent_forward.8} parent=0 // pred_check
    _
  $region11: #{lstm_agent_forward.8} parent=0 // pred_check_branch
    %13 = sbr.rel (0) target = $region13
  $region12: #{lstm_agent_forward.8} parent=0 // pred_region
    _
  $region13: #{lstm_agent_forward.8} parent=0 // pred_fallthru
    _
  %v15 = vld [vmem:[%s0] sm:$0xff]
  %v16 = vld [vmem:[%s0 + $0x8] sm:$0xff]
  %v17 = vld [vmem:[%s0 + $0x10] sm:$0xff]
  %v18 = vld [vmem:[%s0 + $0x18] sm:$0xff]
  %v19 = vld [vmem:[%s0 + $0x20] sm:$0xff]
  %v20 = vld [vmem:[%s0 + $0x28] sm:$0xff]
  %v21 = vld [vmem:[%s0 + $0x30] sm:$0xff]
  %v22 = vld [vmem:[%s0 + $0x38] sm:$0xff]
  %v23 = vld [vmem:[%s0 + $0x40] sm:$0x33]
  %v24 = vld [vmem:[%s0 + $0x48] sm:$0x33]
  %v25 = vld [vmem:[%s1] sm:$0xf]
  %v26 = vld [vmem:[%s1 + $0x4] sm:$0xf]
  %v27 = vld [vmem:[%s1 + $0x8] sm:$0xf]
  %v28 = vld [vmem:[%s1 + $0xc] sm:$0xf]
  %v29 = vld [vmem:[%s1 + $0x10] sm:$0xf]
  %v30 = vld [vmem:[%s1 + $0x14] sm:$0xf]
  %v31 = vld [vmem:[%s1 + $0x18] sm:$0xf]
  %v32 = vld [vmem:[%s1 + $0x1c] sm:$0xf]
  %v33 = vld [vmem:[%s1 + $0x20] sm:$0xf]
  %v34 = vld [vmem:[%s1 + $0x24] sm:$0xf]
  %v35 = vld [vmem:[%s1 + $0x28] sm:$0xf]
  %v36 = vld [vmem:[%s1 + $0x2c] sm:$0xf]
  %v37 = vld [vmem:[%s1 + $0x30] sm:$0xf]
  %v38 = vld [vmem:[%s1 + $0x34] sm:$0xf]
  %v39 = vld [vmem:[%s1 + $0x38] sm:$0xf]
  %v40 = vld [vmem:[%s1 + $0x3c] sm:$0xf]
  %v41 = vld [vmem:[%s1 + $0x40] sm:$0xf]
  %v42 = vld [vmem:[%s1 + $0x44] sm:$0xf]
  %v43 = vld [vmem:[%s1 + $0x48] sm:$0xf]
  %v44 = vld [vmem:[%s1 + $0x4c] sm:$0xf]
  %v45 = vld [vmem:[%s1 + $0x50] sm:$0xf]
  %v46 = vld [vmem:[%s1 + $0x54] sm:$0xf]
  %v47 = vld [vmem:[%s1 + $0x58] sm:$0xf]
  %v48 = vld [vmem:[%s1 + $0x5c] sm:$0xf]
  %v49 = vld [vmem:[%s1 + $0x60] sm:$0xf]
  %v50 = vld [vmem:[%s1 + $0x64] sm:$0xf]
  %v51 = vld [vmem:[%s1 + $0x68] sm:$0xf]
  %v52 = vld [vmem:[%s1 + $0x6c] sm:$0xf]
  %v53 = vld [vmem:[%s1 + $0x70] sm:$0xf]
  %v54 = vld [vmem:[%s1 + $0x74] sm:$0xf]
  %v55 = vld [vmem:[%s1 + $0x78] sm:$0xf]
  %v56 = vld [vmem:[%s1 + $0x7c] sm:$0xf]
  %v57 = vld [vmem:[%s1 + $0x80] sm:$0xf]
  %v58 = vld [vmem:[%s1 + $0x84] sm:$0xf]
  %v59 = vld [vmem:[%s1 + $0x88] sm:$0xf]
  %v60 = vld [vmem:[%s1 + $0x8c] sm:$0xf]
  %v61 = vld [vmem:[%s1 + $0x90] sm:$0xf]
  %v62 = vld [vmem:[%s1 + $0x94] sm:$0xf]
  %v63 = vld [vmem:[%s1 + $0x98] sm:$0xf]
  %v64 = vld [vmem:[%s1 + $0x9c] sm:$0xf]
  %v65 = vld [vmem:[%s1 + $0xa0] sm:$0xf]
  %v66 = vld [vmem:[%s1 + $0xa4] sm:$0xf]
  %v67 = vld [vmem:[%s1 + $0xa8] sm:$0xf]
  %v68 = vld [vmem:[%s1 + $0xac] sm:$0xf]
  %v69 = vld [vmem:[%s1 + $0xb0] sm:$0xf]
  %v70 = vld [vmem:[%s1 + $0xb4] sm:$0xf]
  %v71 = vld [vmem:[%s1 + $0xb8] sm:$0xf]
  %v72 = vld [vmem:[%s1 + $0xbc] sm:$0xf]
  %v73 = vld [vmem:[%s1 + $0xc0] sm:$0xf]
  %v74 = vld [vmem:[%s1 + $0xc4] sm:$0xf]
  %v75 = vld [vmem:[%s1 + $0xc8] sm:$0xf]
  %v76 = vld [vmem:[%s1 + $0xcc] sm:$0xf]
  %v77 = vld [vmem:[%s1 + $0xd0] sm:$0xf]
  %v78 = vld [vmem:[%s1 + $0xd4] sm:$0xf]
  %v79 = vld [vmem:[%s1 + $0xd8] sm:$0xf]
  %v80 = vld [vmem:[%s1 + $0xdc] sm:$0xf]
  %v81 = vld [vmem:[%s1 + $0xe0] sm:$0xf]
  %v82 = vld [vmem:[%s1 + $0xe4] sm:$0xf]
  %v83 = vld [vmem:[%s1 + $0xe8] sm:$0xf]
  %v84 = vld [vmem:[%s1 + $0xec] sm:$0xf]
  %v85 = vld [vmem:[%s1 + $0xf0] sm:$0xf]
  %v86 = vld [vmem:[%s1 + $0xf4] sm:$0xf]
  %v87 = vld [vmem:[%s1 + $0xf8] sm:$0xf]
  %v88 = vld [vmem:[%s1 + $0xfc] sm:$0xf]
  %v89 = vld [vmem:[%s2] sm:$0x1]
  %v91 = vlaneseq
  %v92 = vshrl.u32 %v91, 7
  %v93 = vsub.s32 0, %v92
  %v94 = vrot.slane %v89, %v93
  %v106 = vunpack.c.l.b16 %v15
  %v107 = vunpack.c.h.b16 %v15
  %v108 = vunpack.c.l.b16 %v16
  %v109 = vunpack.c.h.b16 %v16
  %v110 = vunpack.c.l.b16 %v17
  %v111 = vunpack.c.h.b16 %v17
  %v112 = vunpack.c.l.b16 %v18
  %v113 = vunpack.c.h.b16 %v18
  %v114 = vunpack.c.l.b16 %v19
  %v115 = vunpack.c.h.b16 %v19
  %v116 = vunpack.c.l.b16 %v20
  %v117 = vunpack.c.h.b16 %v20
  %v118 = vunpack.c.l.b16 %v21
  %v119 = vunpack.c.h.b16 %v21
  %v120 = vunpack.c.l.b16 %v22
  %v121 = vunpack.c.h.b16 %v22
  %v122 = vunpack.c.l.b16 %v23
  %v123 = vunpack.c.h.b16 %v23
  %v124 = vunpack.c.l.b16 %v24
  %v125 = vunpack.c.h.b16 %v24
  %v126 = vpack.c.b16 %v110, %v106
  %v127 = vpack.c.b16 %v111, %v107
  %v128 = vpack.c.b16 %v112, %v108
  %v129 = vpack.c.b16 %v113, %v109
  %v130 = vpack.c.b16 %v118, %v114
  %v131 = vpack.c.b16 %v119, %v115
  %v132 = vpack.c.b16 %v120, %v116
  %v133 = vpack.c.b16 %v121, %v117
  %v134 = vpack.c.b16 %v122, %v122
  %v135 = vpack.c.b16 %v123, %v123
  %v136 = vpack.c.b16 %v124, %v124
  %v137 = vpack.c.b16 %v125, %v125
  %v214 = vunpack.c.l.b16 %v25
  %v215 = vunpack.c.l.b16 %v26
  %v216 = vunpack.c.l.b16 %v27
  %v217 = vunpack.c.l.b16 %v28
  %v218 = vunpack.c.l.b16 %v29
  %v219 = vunpack.c.l.b16 %v30
  %v220 = vunpack.c.l.b16 %v31
  %v221 = vunpack.c.l.b16 %v32
  %v222 = vunpack.c.l.b16 %v33
  %v223 = vunpack.c.l.b16 %v34
  %v224 = vunpack.c.l.b16 %v35
  %v225 = vunpack.c.l.b16 %v36
  %v226 = vunpack.c.l.b16 %v37
  %v227 = vunpack.c.l.b16 %v38
  %v228 = vunpack.c.l.b16 %v39
  %v229 = vunpack.c.l.b16 %v40
  %v230 = vunpack.c.l.b16 %v41
  %v231 = vunpack.c.l.b16 %v42
  %v232 = vunpack.c.l.b16 %v43
  %v233 = vunpack.c.l.b16 %v44
  %v234 = vunpack.c.l.b16 %v45
  %v235 = vunpack.c.l.b16 %v46
  %v236 = vunpack.c.l.b16 %v47
  %v237 = vunpack.c.l.b16 %v48
  %v238 = vunpack.c.l.b16 %v49
  %v239 = vunpack.c.l.b16 %v50
  %v240 = vunpack.c.l.b16 %v51
  %v241 = vunpack.c.l.b16 %v52
  %v242 = vunpack.c.l.b16 %v53
  %v243 = vunpack.c.l.b16 %v54
  %v244 = vunpack.c.l.b16 %v55
  %v245 = vunpack.c.l.b16 %v56
  %v246 = vunpack.c.l.b16 %v57
  %v247 = vunpack.c.l.b16 %v58
  %v248 = vunpack.c.l.b16 %v59
  %v249 = vunpack.c.l.b16 %v60
  %v250 = vunpack.c.l.b16 %v61
  %v251 = vunpack.c.l.b16 %v62
  %v252 = vunpack.c.l.b16 %v63
  %v253 = vunpack.c.l.b16 %v64
  %v254 = vunpack.c.l.b16 %v65
  %v255 = vunpack.c.l.b16 %v66
  %v256 = vunpack.c.l.b16 %v67
  %v257 = vunpack.c.l.b16 %v68
  %v258 = vunpack.c.l.b16 %v69
  %v259 = vunpack.c.l.b16 %v70
  %v260 = vunpack.c.l.b16 %v71
  %v261 = vunpack.c.l.b16 %v72
  %v262 = vunpack.c.l.b16 %v73
  %v263 = vunpack.c.l.b16 %v74
  %v264 = vunpack.c.l.b16 %v75
  %v265 = vunpack.c.l.b16 %v76
  %v266 = vunpack.c.l.b16 %v77
  %v267 = vunpack.c.l.b16 %v78
  %v268 = vunpack.c.l.b16 %v79
  %v269 = vunpack.c.l.b16 %v80
  %v270 = vunpack.c.l.b16 %v81
  %v271 = vunpack.c.l.b16 %v82
  %v272 = vunpack.c.l.b16 %v83
  %v273 = vunpack.c.l.b16 %v84
  %v274 = vunpack.c.l.b16 %v85
  %v275 = vunpack.c.l.b16 %v86
  %v276 = vunpack.c.l.b16 %v87
  %v277 = vunpack.c.l.b16 %v88
  %v278 = vpack.c.b16 %v215, %v214
  %v279 = vpack.c.b16 %v217, %v216
  %v280 = vpack.c.b16 %v219, %v218
  %v281 = vpack.c.b16 %v221, %v220
  %v282 = vpack.c.b16 %v223, %v222
  %v283 = vpack.c.b16 %v225, %v224
  %v284 = vpack.c.b16 %v227, %v226
  %v285 = vpack.c.b16 %v229, %v228
  %v286 = vpack.c.b16 %v231, %v230
  %v287 = vpack.c.b16 %v233, %v232
  %v288 = vpack.c.b16 %v235, %v234
  %v289 = vpack.c.b16 %v237, %v236
  %v290 = vpack.c.b16 %v239, %v238
  %v291 = vpack.c.b16 %v241, %v240
  %v292 = vpack.c.b16 %v243, %v242
  %v293 = vpack.c.b16 %v245, %v244
  %v294 = vpack.c.b16 %v247, %v246
  %v295 = vpack.c.b16 %v249, %v248
  %v296 = vpack.c.b16 %v251, %v250
  %v297 = vpack.c.b16 %v253, %v252
  %v298 = vpack.c.b16 %v255, %v254
  %v299 = vpack.c.b16 %v257, %v256
  %v300 = vpack.c.b16 %v259, %v258
  %v301 = vpack.c.b16 %v261, %v260
  %v302 = vpack.c.b16 %v263, %v262
  %v303 = vpack.c.b16 %v265, %v264
  %v304 = vpack.c.b16 %v267, %v266
  %v305 = vpack.c.b16 %v269, %v268
  %v306 = vpack.c.b16 %v271, %v270
  %v307 = vpack.c.b16 %v273, %v272
  %v308 = vpack.c.b16 %v275, %v274
  %v309 = vpack.c.b16 %v277, %v276
  %342 = vmatprep.subr.bf16.mxu0 0
  %343 = vmatpush1.bf16.msra.mxu0 %v278
  %344 = vmatprep.subr.bf16.mxu0 0
  %345 = vmatpush1.bf16.msra.mxu0 %v279
  %346 = vmatprep.subr.bf16.mxu0 0
  %347 = vmatpush1.bf16.msra.mxu0 %v280
  %348 = vmatprep.subr.bf16.mxu0 0
  %349 = vmatpush1.bf16.msra.mxu0 %v281
  %350 = vmatprep.subr.bf16.mxu0 0
  %351 = vmatpush1.bf16.msra.mxu0 %v282
  %352 = vmatprep.subr.bf16.mxu0 0
  %353 = vmatpush1.bf16.msra.mxu0 %v283
  %354 = vmatprep.subr.bf16.mxu0 0
  %355 = vmatpush1.bf16.msra.mxu0 %v284
  %356 = vmatprep.subr.bf16.mxu0 0
  %357 = vmatpush1.bf16.msra.mxu0 %v285
  %358 = vmatprep.subr.bf16.mxu0 0
  %359 = vmatpush1.bf16.msra.mxu0 %v286
  %360 = vmatprep.subr.bf16.mxu0 0
  %361 = vmatpush1.bf16.msra.mxu0 %v287
  %362 = vmatprep.subr.bf16.mxu0 0
  %363 = vmatpush1.bf16.msra.mxu0 %v288
  %364 = vmatprep.subr.bf16.mxu0 0
  %365 = vmatpush1.bf16.msra.mxu0 %v289
  %366 = vmatprep.subr.bf16.mxu0 0
  %367 = vmatpush1.bf16.msra.mxu0 %v290
  %368 = vmatprep.subr.bf16.mxu0 0
  %369 = vmatpush1.bf16.msra.mxu0 %v291
  %370 = vmatprep.subr.bf16.mxu0 0
  %371 = vmatpush1.bf16.msra.mxu0 %v292
  %372 = vmatprep.subr.bf16.mxu0 0
  %373 = vmatpush1.bf16.msra.mxu0 %v293
  %374 = vmatprep.mubr.bf16.mxu0 %v127
  %375 = vmatmul.mubr.bf16.gmra.mrb[0].mxu0 %v126
  %v376 = vpop.f32.mrb[0].mxu0
  %v377 = vadd.f32 %v94, %v376
  %v378 = vpop.f32.mrb[0].mxu0
  %v379 = vpop.f32.mrb[0].mxu0
  %v380 = vadd.f32 %v94, %v379
  %v381 = vpop.f32.mrb[0].mxu0
  %382 = vmatprep.mubr.bf16.mxu0 %v131
  %383 = vmatmul.mubr.bf16.gmra.mrb[0].mxu0 %v130
  %v384 = vpop.f32.mrb[0].mxu0
  %v385 = vadd.f32 %v94, %v384
  %v386 = vpop.f32.mrb[0].mxu0
  %v387 = vpop.f32.mrb[0].mxu0
  %v388 = vadd.f32 %v94, %v387
  %v389 = vpop.f32.mrb[0].mxu0
  %390 = vmatprep.mubr.bf16.mxu0 %v135
  %391 = vmatmul.mubr.bf16.gmra.mrb[0].mxu0 %v134
  %v392 = vpop.f32.mrb[0].mxu0
  %v393 = vadd.f32 %v94, %v392
  %v394 = vpop.f32.mrb[0].mxu0
  %v395 = vpop.f32.mrb[0].mxu0
  %v396 = vpop.f32.mrb[0].mxu0
  %397 = vdwg.mxu0
  %398 = vmatprep.subr.bf16.mxu0 0
  %399 = vmatpush1.bf16.msra.mxu0 %v294
  %400 = vmatprep.subr.bf16.mxu0 0
  %401 = vmatpush1.bf16.msra.mxu0 %v295
  %402 = vmatprep.subr.bf16.mxu0 0
  %403 = vmatpush1.bf16.msra.mxu0 %v296
  %404 = vmatprep.subr.bf16.mxu0 0
  %405 = vmatpush1.bf16.msra.mxu0 %v297
  %406 = vmatprep.subr.bf16.mxu0 0
  %407 = vmatpush1.bf16.msra.mxu0 %v298
  %408 = vmatprep.subr.bf16.mxu0 0
  %409 = vmatpush1.bf16.msra.mxu0 %v299
  %410 = vmatprep.subr.bf16.mxu0 0
  %411 = vmatpush1.bf16.msra.mxu0 %v300
  %412 = vmatprep.subr.bf16.mxu0 0
  %413 = vmatpush1.bf16.msra.mxu0 %v301
  %414 = vmatprep.subr.bf16.mxu0 0
  %415 = vmatpush1.bf16.msra.mxu0 %v302
  %416 = vmatprep.subr.bf16.mxu0 0
  %417 = vmatpush1.bf16.msra.mxu0 %v303
  %418 = vmatprep.subr.bf16.mxu0 0
  %419 = vmatpush1.bf16.msra.mxu0 %v304
  %420 = vmatprep.subr.bf16.mxu0 0
  %421 = vmatpush1.bf16.msra.mxu0 %v305
  %422 = vmatprep.subr.bf16.mxu0 0
  %423 = vmatpush1.bf16.msra.mxu0 %v306
  %424 = vmatprep.subr.bf16.mxu0 0
  %425 = vmatpush1.bf16.msra.mxu0 %v307
  %426 = vmatprep.subr.bf16.mxu0 0
  %427 = vmatpush1.bf16.msra.mxu0 %v308
  %428 = vmatprep.subr.bf16.mxu0 0
  %429 = vmatpush1.bf16.msra.mxu0 %v309
  %430 = vmatprep.mubr.bf16.mxu0 %v129
  %431 = vmatmul.mubr.bf16.gmra.mrb[0].mxu0 %v128
  %v432 = vpop.f32.mrb[0].mxu0
  %v433 = vadd.f32 %v377, %v432
  %v434 = vpop.f32.mrb[0].mxu0
  %v435 = vpop.f32.mrb[0].mxu0
  %v436 = vadd.f32 %v380, %v435
  %v437 = vpop.f32.mrb[0].mxu0
  %438 = vmatprep.mubr.bf16.mxu0 %v133
  %439 = vmatmul.mubr.bf16.gmra.mrb[0].mxu0 %v132
  %v440 = vpop.f32.mrb[0].mxu0
  %v441 = vadd.f32 %v385, %v440
  %v442 = vpop.f32.mrb[0].mxu0
  %v443 = vpop.f32.mrb[0].mxu0
  %v444 = vadd.f32 %v388, %v443
  %v445 = vpop.f32.mrb[0].mxu0
  %446 = vmatprep.mubr.bf16.mxu0 %v137
  %447 = vmatmul.mubr.bf16.gmra.mrb[0].mxu0 %v136
  %v448 = vpop.f32.mrb[0].mxu0
  %v449 = vadd.f32 %v393, %v448
  %v450 = vpop.f32.mrb[0].mxu0
  %v451 = vpop.f32.mrb[0].mxu0
  %v452 = vpop.f32.mrb[0].mxu0
  %453 = vdwg.mxu0
  %v454 = vmax.f32 %v433, 0.0
  %v455 = vmax.f32 %v436, 0.0
  %v456 = vmax.f32 %v441, 0.0
  %v457 = vmax.f32 %v444, 0.0
  %v458 = vmax.f32 %v449, 0.0
  %v459 = vpack.c.bf16 %v455, %v454
  %v460 = vpack.c.bf16 %v457, %v456
  %v461 = vpack.c.bf16 %v458, %v458
  %v465 = vunpack.c.l.b16 %v459
  %v466 = vunpack.c.h.b16 %v459
  %v467 = vunpack.c.l.b16 %v460
  %v468 = vunpack.c.h.b16 %v460
  %v469 = vunpack.c.l.b16 %v461
  %v470 = vpack.c.b16 %v465, %v465
  %v471 = vpack.c.b16 %v466, %v466
  %v472 = vpack.c.b16 %v467, %v467
  %v473 = vpack.c.b16 %v468, %v468
  %v474 = vpack.c.b16 %v469, %v469
  %480 = vst [vmem:[%s3] sm:$0xf] %v470
  %481 = vst [vmem:[%s3 + $0x4] sm:$0xf] %v471
  %482 = vst [vmem:[%s3 + $0x8] sm:$0xf] %v472
  %483 = vst [vmem:[%s3 + $0xc] sm:$0xf] %v473
  %484 = vst [vmem:[%s3 + $0x10] sm:$0x3] %v474
  // Predicated region
  $region14: #{lstm_agent_forward.8} parent=0 // pred_check
    _
  $region15: #{lstm_agent_forward.8} parent=0 // pred_check_branch
    %486 = sbr.rel (0) target = $region17
  $region16: #{lstm_agent_forward.8} parent=0 // pred_region
    _
  $region17: #{lstm_agent_forward.8} parent=0 // pred_fallthru
    _
  // Predicated region
  $region18: #{lstm_agent_forward.8} parent=0 // pred_check
    _
  $region19: #{lstm_agent_forward.8} parent=0 // pred_check_branch
    %488 = sbr.rel (0) target = $region21
  $region20: #{lstm_agent_forward.8} parent=0 // pred_region
    _
  $region21: #{lstm_agent_forward.8} parent=0 // pred_fallthru
    _

// kernel: lstm_agent_forward.9
$region0: #{lstm_agent_forward.9}
  #allocation0 [shape = 'u32[]', space=smem, size = 0x4, offset = 0x4, fixed_abs, tag = 'smem constant byte address 0x4 - core index']
  #allocation1 [shape = 'u32[144,128]{1,0:T(1,128)}', space=vmem, size = 0x12000, scoped, tag = 'internal scratch']
  %s0 = inlined_call_operand.vmem [shape: bf16[4,576], index: 0, kind: input, shape index: {}]
  %s1 = inlined_call_operand.vmem [shape: bf16[576,128], index: 1, kind: input, shape index: {}]
  %s2 = inlined_call_operand.vmem [shape: f32[1,128], index: 2, kind: input, shape index: {}]
  %s3 = inlined_call_operand.vmem [shape: bf16[4,128], index: 3, kind: output, shape index: {}]
  %s4 = sld [smem:[#allocation0]]
  $region22: #{lstm_agent_forward.9} parent=0
    _
  %s6 = ssub.s32 1, %s4
  %s7 = scalar_select 0, %s6, %s4
  // Predicated region
  $region2: #{lstm_agent_forward.9} parent=0 // pred_check
    _
  $region3: #{lstm_agent_forward.9} parent=0 // pred_check_branch
    %9 = sbr.rel (0) target = $region5
  $region4: #{lstm_agent_forward.9} parent=0 // pred_region
    _
  $region5: #{lstm_agent_forward.9} parent=0 // pred_fallthru
    _
  // Predicated region
  $region6: #{lstm_agent_forward.9} parent=0 // pred_check
    _
  $region7: #{lstm_agent_forward.9} parent=0 // pred_check_branch
    %11 = sbr.rel (0) target = $region9
  $region8: #{lstm_agent_forward.9} parent=0 // pred_region
    _
  $region9: #{lstm_agent_forward.9} parent=0 // pred_fallthru
    _
  // Predicated region
  $region10: #{lstm_agent_forward.9} parent=0 // pred_check
    _
  $region11: #{lstm_agent_forward.9} parent=0 // pred_check_branch
    %13 = sbr.rel (0) target = $region13
  $region12: #{lstm_agent_forward.9} parent=0 // pred_region
    _
  $region13: #{lstm_agent_forward.9} parent=0 // pred_fallthru
    _
  %v15 = vld [vmem:[%s0] sm:$0xff]
  %v16 = vld [vmem:[%s0 + $0x8] sm:$0x3]
  %v17 = vld [vmem:[%s1] sm:$0xf]
  %v18 = vld [vmem:[%s1 + $0x4] sm:$0xf]
  %v19 = vld [vmem:[%s1 + $0x8] sm:$0xf]
  %v20 = vld [vmem:[%s1 + $0xc] sm:$0xf]
  %v21 = vld [vmem:[%s1 + $0x10] sm:$0xf]
  %v22 = vld [vmem:[%s1 + $0x14] sm:$0xf]
  %v23 = vld [vmem:[%s1 + $0x18] sm:$0xf]
  %v24 = vld [vmem:[%s1 + $0x1c] sm:$0xf]
  %v25 = vld [vmem:[%s1 + $0x20] sm:$0xf]
  %v26 = vld [vmem:[%s1 + $0x24] sm:$0xf]
  %v27 = vld [vmem:[%s1 + $0x28] sm:$0xf]
  %v28 = vld [vmem:[%s1 + $0x2c] sm:$0xf]
  %v29 = vld [vmem:[%s1 + $0x30] sm:$0xf]
  %v30 = vld [vmem:[%s1 + $0x34] sm:$0xf]
  %v31 = vld [vmem:[%s1 + $0x38] sm:$0xf]
  %v32 = vld [vmem:[%s1 + $0x3c] sm:$0xf]
  %v33 = vld [vmem:[%s1 + $0x40] sm:$0xf]
  %v34 = vld [vmem:[%s1 + $0x44] sm:$0xf]
  %v35 = vld [vmem:[%s1 + $0x48] sm:$0xf]
  %v36 = vld [vmem:[%s1 + $0x4c] sm:$0xf]
  %v37 = vld [vmem:[%s1 + $0x50] sm:$0xf]
  %v38 = vld [vmem:[%s1 + $0x54] sm:$0xf]
  %v39 = vld [vmem:[%s1 + $0x58] sm:$0xf]
  %v40 = vld [vmem:[%s1 + $0x5c] sm:$0xf]
  %v41 = vld [vmem:[%s1 + $0x60] sm:$0xf]
  %v42 = vld [vmem:[%s1 + $0x64] sm:$0xf]
  %v43 = vld [vmem:[%s1 + $0x68] sm:$0xf]
  %v44 = vld [vmem:[%s1 + $0x6c] sm:$0xf]
  %v45 = vld [vmem:[%s1 + $0x70] sm:$0xf]
  %v46 = vld [vmem:[%s1 + $0x74] sm:$0xf]
  %v47 = vld [vmem:[%s1 + $0x78] sm:$0xf]
  %v48 = vld [vmem:[%s1 + $0x7c] sm:$0xf]
  %v49 = vld [vmem:[%s1 + $0x80] sm:$0xf]
  %v50 = vld [vmem:[%s1 + $0x84] sm:$0xf]
  %v51 = vld [vmem:[%s1 + $0x88] sm:$0xf]
  %v52 = vld [vmem:[%s1 + $0x8c] sm:$0xf]
  %v53 = vld [vmem:[%s1 + $0x90] sm:$0xf]
  %v54 = vld [vmem:[%s1 + $0x94] sm:$0xf]
  %v55 = vld [vmem:[%s1 + $0x98] sm:$0xf]
  %v56 = vld [vmem:[%s1 + $0x9c] sm:$0xf]
  %v57 = vld [vmem:[%s1 + $0xa0] sm:$0xf]
  %v58 = vld [vmem:[%s1 + $0xa4] sm:$0xf]
  %v59 = vld [vmem:[%s1 + $0xa8] sm:$0xf]
  %v60 = vld [vmem:[%s1 + $0xac] sm:$0xf]
  %v61 = vld [vmem:[%s1 + $0xb0] sm:$0xf]
  %v62 = vld [vmem:[%s1 + $0xb4] sm:$0xf]
  %v63 = vld [vmem:[%s1 + $0xb8] sm:$0xf]
  %v64 = vld [vmem:[%s1 + $0xbc] sm:$0xf]
  %v65 = vld [vmem:[%s1 + $0xc0] sm:$0xf]
  %v66 = vld [vmem:[%s1 + $0xc4] sm:$0xf]
  %v67 = vld [vmem:[%s1 + $0xc8] sm:$0xf]
  %v68 = vld [vmem:[%s1 + $0xcc] sm:$0xf]
  %v69 = vld [vmem:[%s1 + $0xd0] sm:$0xf]
  %v70 = vld [vmem:[%s1 + $0xd4] sm:$0xf]
  %v71 = vld [vmem:[%s1 + $0xd8] sm:$0xf]
  %v72 = vld [vmem:[%s1 + $0xdc] sm:$0xf]
  %v73 = vld [vmem:[%s1 + $0xe0] sm:$0xf]
  %v74 = vld [vmem:[%s1 + $0xe4] sm:$0xf]
  %v75 = vld [vmem:[%s1 + $0xe8] sm:$0xf]
  %v76 = vld [vmem:[%s1 + $0xec] sm:$0xf]
  %v77 = vld [vmem:[%s1 + $0xf0] sm:$0xf]
  %v78 = vld [vmem:[%s1 + $0xf4] sm:$0xf]
  %v79 = vld [vmem:[%s1 + $0xf8] sm:$0xf]
  %v80 = vld [vmem:[%s1 + $0xfc] sm:$0xf]
  %v81 = vld [vmem:[%s1 + $0x100] sm:$0xf]
  %v82 = vld [vmem:[%s1 + $0x104] sm:$0xf]
  %v83 = vld [vmem:[%s1 + $0x108] sm:$0xf]
  %v84 = vld [vmem:[%s1 + $0x10c] sm:$0xf]
  %v85 = vld [vmem:[%s1 + $0x110] sm:$0xf]
  %v86 = vld [vmem:[%s1 + $0x114] sm:$0xf]
  %v87 = vld [vmem:[%s1 + $0x118] sm:$0xf]
  %v88 = vld [vmem:[%s1 + $0x11c] sm:$0xf]
  %v89 = vld [vmem:[%s2] sm:$0x1]
  %v91 = vlaneseq
  %v92 = vshrl.u32 %v91, 7
  %v93 = vsub.s32 0, %v92
  %v94 = vrot.slane %v89, %v93
  %v98 = vcombine.high %v15, %v15
  %v100 = vunpack.c.l.s4 1983009808
  %v101 = vunpack.c.0.s8 %v100
  %v102 = vlaneseq
  %v103 = vshrl.u32 %v102, 7
  %v104 = vsub.s32 %v101, %v103
  %v105 = vrot.slane %v15, %v104
  %v107 = vunpack.c.l.s4 1983009808
  %v108 = vunpack.c.0.s8 %v107
  %v109 = vlaneseq
  %v110 = vshrl.u32 %v109, 7
  %v111 = vsub.s32 %v108, %v110
  %v112 = vrot.slane %v98, %v111
  %v113 = vcombine.high %v105, %v105
  %v114 = vcombine.high %v112, %v112
  %v116 = vunpack.c.l.s4 1983009808
  %v117 = vunpack.c.0.s8 %v116
  %v118 = vlaneseq
  %v119 = vshrl.u32 %v118, 7
  %v120 = vsub.s32 %v117, %v119
  %v121 = vrot.slane %v16, %v120
  %v198 = vunpack.c.l.b16 %v17
  %v199 = vunpack.c.l.b16 %v18
  %v200 = vunpack.c.l.b16 %v19
  %v201 = vunpack.c.l.b16 %v20
  %v202 = vunpack.c.l.b16 %v21
  %v203 = vunpack.c.l.b16 %v22
  %v204 = vunpack.c.l.b16 %v23
  %v205 = vunpack.c.l.b16 %v24
  %v206 = vunpack.c.l.b16 %v25
  %v207 = vunpack.c.l.b16 %v26
  %v208 = vunpack.c.l.b16 %v27
  %v209 = vunpack.c.l.b16 %v28
  %v210 = vunpack.c.l.b16 %v29
  %v211 = vunpack.c.l.b16 %v30
  %v212 = vunpack.c.l.b16 %v31
  %v213 = vunpack.c.l.b16 %v32
  %v214 = vunpack.c.l.b16 %v33
  %v215 = vunpack.c.l.b16 %v34
  %v216 = vunpack.c.l.b16 %v35
  %v217 = vunpack.c.l.b16 %v36
  %v218 = vunpack.c.l.b16 %v37
  %v219 = vunpack.c.l.b16 %v38
  %v220 = vunpack.c.l.b16 %v39
  %v221 = vunpack.c.l.b16 %v40
  %v222 = vunpack.c.l.b16 %v41
  %v223 = vunpack.c.l.b16 %v42
  %v224 = vunpack.c.l.b16 %v43
  %v225 = vunpack.c.l.b16 %v44
  %v226 = vunpack.c.l.b16 %v45
  %v227 = vunpack.c.l.b16 %v46
  %v228 = vunpack.c.l.b16 %v47
  %v229 = vunpack.c.l.b16 %v48
  %v230 = vunpack.c.l.b16 %v49
  %v231 = vunpack.c.l.b16 %v50
  %v232 = vunpack.c.l.b16 %v51
  %v233 = vunpack.c.l.b16 %v52
  %v234 = vunpack.c.l.b16 %v53
  %v235 = vunpack.c.l.b16 %v54
  %v236 = vunpack.c.l.b16 %v55
  %v237 = vunpack.c.l.b16 %v56
  %v238 = vunpack.c.l.b16 %v57
  %v239 = vunpack.c.l.b16 %v58
  %v240 = vunpack.c.l.b16 %v59
  %v241 = vunpack.c.l.b16 %v60
  %v242 = vunpack.c.l.b16 %v61
  %v243 = vunpack.c.l.b16 %v62
  %v244 = vunpack.c.l.b16 %v63
  %v245 = vunpack.c.l.b16 %v64
  %v246 = vunpack.c.l.b16 %v65
  %v247 = vunpack.c.l.b16 %v66
  %v248 = vunpack.c.l.b16 %v67
  %v249 = vunpack.c.l.b16 %v68
  %v250 = vunpack.c.l.b16 %v69
  %v251 = vunpack.c.l.b16 %v70
  %v252 = vunpack.c.l.b16 %v71
  %v253 = vunpack.c.l.b16 %v72
  %v254 = vunpack.c.l.b16 %v73
  %v255 = vunpack.c.l.b16 %v74
  %v256 = vunpack.c.l.b16 %v75
  %v257 = vunpack.c.l.b16 %v76
  %v258 = vunpack.c.l.b16 %v77
  %v259 = vunpack.c.l.b16 %v78
  %v260 = vunpack.c.l.b16 %v79
  %v261 = vunpack.c.l.b16 %v80
  %v262 = vunpack.c.l.b16 %v81
  %v263 = vunpack.c.l.b16 %v82
  %v264 = vunpack.c.l.b16 %v83
  %v265 = vunpack.c.l.b16 %v84
  %v266 = vunpack.c.l.b16 %v85
  %v267 = vunpack.c.l.b16 %v86
  %v268 = vunpack.c.l.b16 %v87
  %v269 = vunpack.c.l.b16 %v88
  %v270 = vpack.c.b16 %v199, %v198
  %v271 = vpack.c.b16 %v201, %v200
  %v272 = vpack.c.b16 %v203, %v202
  %v273 = vpack.c.b16 %v205, %v204
  %v274 = vpack.c.b16 %v207, %v206
  %v275 = vpack.c.b16 %v209, %v208
  %v276 = vpack.c.b16 %v211, %v210
  %v277 = vpack.c.b16 %v213, %v212
  %v278 = vpack.c.b16 %v215, %v214
  %v279 = vpack.c.b16 %v217, %v216
  %v280 = vpack.c.b16 %v219, %v218
  %v281 = vpack.c.b16 %v221, %v220
  %v282 = vpack.c.b16 %v223, %v222
  %v283 = vpack.c.b16 %v225, %v224
  %v284 = vpack.c.b16 %v227, %v226
  %v285 = vpack.c.b16 %v229, %v228
  %v286 = vpack.c.b16 %v231, %v230
  %v287 = vpack.c.b16 %v233, %v232
  %v288 = vpack.c.b16 %v235, %v234
  %v289 = vpack.c.b16 %v237, %v236
  %v290 = vpack.c.b16 %v239, %v238
  %v291 = vpack.c.b16 %v241, %v240
  %v292 = vpack.c.b16 %v243, %v242
  %v293 = vpack.c.b16 %v245, %v244
  %v294 = vpack.c.b16 %v247, %v246
  %v295 = vpack.c.b16 %v249, %v248
  %v296 = vpack.c.b16 %v251, %v250
  %v297 = vpack.c.b16 %v253, %v252
  %v298 = vpack.c.b16 %v255, %v254
  %v299 = vpack.c.b16 %v257, %v256
  %v300 = vpack.c.b16 %v259, %v258
  %v301 = vpack.c.b16 %v261, %v260
  %v302 = vpack.c.b16 %v263, %v262
  %v303 = vpack.c.b16 %v265, %v264
  %v304 = vpack.c.b16 %v267, %v266
  %v305 = vpack.c.b16 %v269, %v268
  %vm342 = vcmask 523264
  %v344 = vsel %vm342, %v121, 0
  %346 = vmatprep.subr.bf16.mxu0 0
  %347 = vmatpush1.bf16.msra.mxu0 %v270
  %348 = vmatprep.subr.bf16.mxu0 0
  %349 = vmatpush1.bf16.msra.mxu0 %v271
  %350 = vmatprep.subr.bf16.mxu0 0
  %351 = vmatpush1.bf16.msra.mxu0 %v272
  %352 = vmatprep.subr.bf16.mxu0 0
  %353 = vmatpush1.bf16.msra.mxu0 %v273
  %354 = vmatprep.subr.bf16.mxu0 0
  %355 = vmatpush1.bf16.msra.mxu0 %v274
  %356 = vmatprep.subr.bf16.mxu0 0
  %357 = vmatpush1.bf16.msra.mxu0 %v275
  %358 = vmatprep.subr.bf16.mxu0 0
  %359 = vmatpush1.bf16.msra.mxu0 %v276
  %360 = vmatprep.subr.bf16.mxu0 0
  %361 = vmatpush1.bf16.msra.mxu0 %v277
  %362 = vmatprep.subr.bf16.mxu0 0
  %363 = vmatpush1.bf16.msra.mxu0 %v278
  %364 = vmatprep.subr.bf16.mxu0 0
  %365 = vmatpush1.bf16.msra.mxu0 %v279
  %366 = vmatprep.subr.bf16.mxu0 0
  %367 = vmatpush1.bf16.msra.mxu0 %v280
  %368 = vmatprep.subr.bf16.mxu0 0
  %369 = vmatpush1.bf16.msra.mxu0 %v281
  %370 = vmatprep.subr.bf16.mxu0 0
  %371 = vmatpush1.bf16.msra.mxu0 %v282
  %372 = vmatprep.subr.bf16.mxu0 0
  %373 = vmatpush1.bf16.msra.mxu0 %v283
  %374 = vmatprep.subr.bf16.mxu0 0
  %375 = vmatpush1.bf16.msra.mxu0 %v284
  %376 = vmatprep.subr.bf16.mxu0 0
  %377 = vmatpush1.bf16.msra.mxu0 %v285
  %378 = vmatprep.mubr.bf16.mxu0 %v113
  %379 = vmatmul.mubr.bf16.gmra.mrb[0].mxu0 %v105
  %v380 = vpop.f32.mrb[0].mxu0
  %v381 = vadd.f32 %v94, %v380
  %v382 = vpop.f32.mrb[0].mxu0
  %v383 = vpop.f32.mrb[0].mxu0
  %v384 = vpop.f32.mrb[0].mxu0
  %385 = vdwg.mxu0
  %386 = vmatprep.subr.bf16.mxu0 0
  %387 = vmatpush1.bf16.msra.mxu0 %v286
  %388 = vmatprep.subr.bf16.mxu0 0
  %389 = vmatpush1.bf16.msra.mxu0 %v287
  %390 = vmatprep.subr.bf16.mxu0 0
  %391 = vmatpush1.bf16.msra.mxu0 %v288
  %392 = vmatprep.subr.bf16.mxu0 0
  %393 = vmatpush1.bf16.msra.mxu0 %v289
  %394 = vmatprep.subr.bf16.mxu0 0
  %395 = vmatpush1.bf16.msra.mxu0 %v290
  %396 = vmatprep.subr.bf16.mxu0 0
  %397 = vmatpush1.bf16.msra.mxu0 %v291
  %398 = vmatprep.subr.bf16.mxu0 0
  %399 = vmatpush1.bf16.msra.mxu0 %v292
  %400 = vmatprep.subr.bf16.mxu0 0
  %401 = vmatpush1.bf16.msra.mxu0 %v293
  %402 = vmatprep.subr.bf16.mxu0 0
  %403 = vmatpush1.bf16.msra.mxu0 %v294
  %404 = vmatprep.subr.bf16.mxu0 0
  %405 = vmatpush1.bf16.msra.mxu0 %v295
  %406 = vmatprep.subr.bf16.mxu0 0
  %407 = vmatpush1.bf16.msra.mxu0 %v296
  %408 = vmatprep.subr.bf16.mxu0 0
  %409 = vmatpush1.bf16.msra.mxu0 %v297
  %410 = vmatprep.subr.bf16.mxu0 0
  %411 = vmatpush1.bf16.msra.mxu0 %v298
  %412 = vmatprep.subr.bf16.mxu0 0
  %413 = vmatpush1.bf16.msra.mxu0 %v299
  %414 = vmatprep.subr.bf16.mxu0 0
  %415 = vmatpush1.bf16.msra.mxu0 %v300
  %416 = vmatprep.subr.bf16.mxu0 0
  %417 = vmatpush1.bf16.msra.mxu0 %v301
  %418 = vmatprep.mubr.bf16.mxu0 %v114
  %419 = vmatmul.mubr.bf16.gmra.mrb[0].mxu0 %v112
  %v420 = vpop.f32.mrb[0].mxu0
  %v421 = vadd.f32 %v381, %v420
  %v422 = vpop.f32.mrb[0].mxu0
  %v423 = vpop.f32.mrb[0].mxu0
  %v424 = vpop.f32.mrb[0].mxu0
  %425 = vdwg.mxu0
  %426 = vmatprep.subr.bf16.mxu0 0
  %427 = vmatpush1.bf16.msra.mxu0 %v302
  %428 = vmatprep.subr.bf16.mxu0 0
  %429 = vmatpush1.bf16.msra.mxu0 %v303
  %430 = vmatprep.subr.bf16.mxu0 0
  %431 = vmatpush1.bf16.msra.mxu0 %v304
  %432 = vmatprep.subr.bf16.mxu0 0
  %433 = vmatpush1.bf16.msra.mxu0 %v305
  %434 = vmatprep.subr.bf16.mxu0 0
  %435 = vmatpush1.bf16.msra.mxu0 0
  %436 = vmatprep.subr.bf16.mxu0 0
  %437 = vmatpush1.bf16.msra.mxu0 0
  %438 = vmatprep.subr.bf16.mxu0 0
  %439 = vmatpush1.bf16.msra.mxu0 0
  %440 = vmatprep.subr.bf16.mxu0 0
  %441 = vmatpush1.bf16.msra.mxu0 0
  %442 = vmatprep.subr.bf16.mxu0 0
  %443 = vmatpush1.bf16.msra.mxu0 0
  %444 = vmatprep.subr.bf16.mxu0 0
  %445 = vmatpush1.bf16.msra.mxu0 0
  %446 = vmatprep.subr.bf16.mxu0 0
  %447 = vmatpush1.bf16.msra.mxu0 0
  %448 = vmatprep.subr.bf16.mxu0 0
  %449 = vmatpush1.bf16.msra.mxu0 0
  %450 = vmatprep.subr.bf16.mxu0 0
  %451 = vmatpush1.bf16.msra.mxu0 0
  %452 = vmatprep.subr.bf16.mxu0 0
  %453 = vmatpush1.bf16.msra.mxu0 0
  %454 = vmatprep.subr.bf16.mxu0 0
  %455 = vmatpush1.bf16.msra.mxu0 0
  %456 = vmatprep.subr.bf16.mxu0 0
  %457 = vmatpush1.bf16.msra.mxu0 0
  %458 = vmatprep.mubr.bf16.mxu0 0
  %459 = vmatmul.mubr.bf16.gmra.mrb[0].mxu0 %v344
  %v460 = vpop.f32.mrb[0].mxu0
  %v461 = vadd.f32 %v421, %v460
  %v462 = vpop.f32.mrb[0].mxu0
  %v463 = vpop.f32.mrb[0].mxu0
  %v464 = vpop.f32.mrb[0].mxu0
  %465 = vdwg.mxu0
  %v466 = vmax.f32 %v461, 0.0
  %v467 = vpack.c.bf16 %v466, %v466
  %468 = vst [vmem:[%s3] sm:$0x3] %v467
  // Predicated region
  $region14: #{lstm_agent_forward.9} parent=0 // pred_check
    _
  $region15: #{lstm_agent_forward.9} parent=0 // pred_check_branch
    %470 = sbr.rel (0) target = $region17
  $region16: #{lstm_agent_forward.9} parent=0 // pred_region
    _
  $region17: #{lstm_agent_forward.9} parent=0 // pred_fallthru
    _
  // Predicated region
  $region18: #{lstm_agent_forward.9} parent=0 // pred_check
    _
  $region19: #{lstm_agent_forward.9} parent=0 // pred_check_branch
    %472 = sbr.rel (0) target = $region21
  $region20: #{lstm_agent_forward.9} parent=0 // pred_region
    _
  $region21: #{lstm_agent_forward.9} parent=0 // pred_fallthru
    _

// kernel: lstm_agent_forward.10
$region0: #{lstm_agent_forward.10}
  #allocation0 [shape = 'u32[]', space=smem, size = 0x4, offset = 0x4, fixed_abs, tag = 'smem constant byte address 0x4 - core index']
  #allocation1 [shape = 'u32[144,128]{1,0:T(1,128)}', space=vmem, size = 0x12000, scoped, tag = 'internal scratch']
  %s0 = inlined_call_operand.vmem [shape: bf16[4,64], index: 0, kind: input, shape index: {}]
  %s1 = inlined_call_operand.vmem [shape: bf16[64,512], index: 1, kind: input, shape index: {}]
  %s2 = inlined_call_operand.vmem [shape: f32[1,512], index: 2, kind: input, shape index: {}]
  %s3 = inlined_call_operand.vmem [shape: bf16[4,512], index: 3, kind: output, shape index: {}]
  %s4 = sld [smem:[#allocation0]]
  $region22: #{lstm_agent_forward.10} parent=0
    _
  %s6 = ssub.s32 1, %s4
  %s7 = scalar_select 0, %s6, %s4
  // Predicated region
  $region2: #{lstm_agent_forward.10} parent=0 // pred_check
    _
  $region3: #{lstm_agent_forward.10} parent=0 // pred_check_branch
    %9 = sbr.rel (0) target = $region5
  $region4: #{lstm_agent_forward.10} parent=0 // pred_region
    _
  $region5: #{lstm_agent_forward.10} parent=0 // pred_fallthru
    _
  // Predicated region
  $region6: #{lstm_agent_forward.10} parent=0 // pred_check
    _
  $region7: #{lstm_agent_forward.10} parent=0 // pred_check_branch
    %11 = sbr.rel (0) target = $region9
  $region8: #{lstm_agent_forward.10} parent=0 // pred_region
    _
  $region9: #{lstm_agent_forward.10} parent=0 // pred_fallthru
    _
  // Predicated region
  $region10: #{lstm_agent_forward.10} parent=0 // pred_check
    _
  $region11: #{lstm_agent_forward.10} parent=0 // pred_check_branch
    %13 = sbr.rel (0) target = $region13
  $region12: #{lstm_agent_forward.10} parent=0 // pred_region
    _
  $region13: #{lstm_agent_forward.10} parent=0 // pred_fallthru
    _
  %v15 = vld [vmem:[%s0] sm:$0x3]
  %v16 = vld [vmem:[%s1] sm:$0xff]
  %v17 = vld [vmem:[%s1 + $0x8] sm:$0xff]
  %v18 = vld [vmem:[%s1 + $0x10] sm:$0xff]
  %v19 = vld [vmem:[%s1 + $0x18] sm:$0xff]
  %v20 = vld [vmem:[%s1 + $0x20] sm:$0xff]
  %v21 = vld [vmem:[%s1 + $0x28] sm:$0xff]
  %v22 = vld [vmem:[%s1 + $0x30] sm:$0xff]
  %v23 = vld [vmem:[%s1 + $0x38] sm:$0xff]
  %v24 = vld [vmem:[%s1 + $0x40] sm:$0xff]
  %v25 = vld [vmem:[%s1 + $0x48] sm:$0xff]
  %v26 = vld [vmem:[%s1 + $0x50] sm:$0xff]
  %v27 = vld [vmem:[%s1 + $0x58] sm:$0xff]
  %v28 = vld [vmem:[%s1 + $0x60] sm:$0xff]
  %v29 = vld [vmem:[%s1 + $0x68] sm:$0xff]
  %v30 = vld [vmem:[%s1 + $0x70] sm:$0xff]
  %v31 = vld [vmem:[%s1 + $0x78] sm:$0xff]
  %v32 = vld [vmem:[%s2] sm:$0xf]
  %v34 = vlaneseq
  %v35 = vshrl.u32 %v34, 7
  %v36 = vsub.s32 0, %v35
  %v37 = vrot.slane %v32, %v36
  %v38 = vlaneseq
  %v39 = vshrl.u32 %v38, 7
  %v40 = vsub.s32 1, %v39
  %v41 = vrot.slane %v32, %v40
  %v42 = vlaneseq
  %v43 = vshrl.u32 %v42, 7
  %v44 = vsub.s32 2, %v43
  %v45 = vrot.slane %v32, %v44
  %v46 = vlaneseq
  %v47 = vshrl.u32 %v46, 7
  %v48 = vsub.s32 3, %v47
  %v49 = vrot.slane %v32, %v48
  %v70 = vunpack.c.l.b16 %v16
  %v71 = vunpack.c.h.b16 %v16
  %v72 = vunpack.c.l.b16 %v17
  %v73 = vunpack.c.h.b16 %v17
  %v74 = vunpack.c.l.b16 %v18
  %v75 = vunpack.c.h.b16 %v18
  %v76 = vunpack.c.l.b16 %v19
  %v77 = vunpack.c.h.b16 %v19
  %v78 = vunpack.c.l.b16 %v20
  %v79 = vunpack.c.h.b16 %v20
  %v80 = vunpack.c.l.b16 %v21
  %v81 = vunpack.c.h.b16 %v21
  %v82 = vunpack.c.l.b16 %v22
  %v83 = vunpack.c.h.b16 %v22
  %v84 = vunpack.c.l.b16 %v23
  %v85 = vunpack.c.h.b16 %v23
  %v86 = vunpack.c.l.b16 %v24
  %v87 = vunpack.c.h.b16 %v24
  %v88 = vunpack.c.l.b16 %v25
  %v89 = vunpack.c.h.b16 %v25
  %v90 = vunpack.c.l.b16 %v26
  %v91 = vunpack.c.h.b16 %v26
  %v92 = vunpack.c.l.b16 %v27
  %v93 = vunpack.c.h.b16 %v27
  %v94 = vunpack.c.l.b16 %v28
  %v95 = vunpack.c.h.b16 %v28
  %v96 = vunpack.c.l.b16 %v29
  %v97 = vunpack.c.h.b16 %v29
  %v98 = vunpack.c.l.b16 %v30
  %v99 = vunpack.c.h.b16 %v30
  %v100 = vunpack.c.l.b16 %v31
  %v101 = vunpack.c.h.b16 %v31
  %v102 = vpack.c.b16 %v74, %v70
  %v103 = vpack.c.b16 %v75, %v71
  %v104 = vpack.c.b16 %v76, %v72
  %v105 = vpack.c.b16 %v77, %v73
  %v106 = vpack.c.b16 %v82, %v78
  %v107 = vpack.c.b16 %v83, %v79
  %v108 = vpack.c.b16 %v84, %v80
  %v109 = vpack.c.b16 %v85, %v81
  %v110 = vpack.c.b16 %v90, %v86
  %v111 = vpack.c.b16 %v91, %v87
  %v112 = vpack.c.b16 %v92, %v88
  %v113 = vpack.c.b16 %v93, %v89
  %v114 = vpack.c.b16 %v98, %v94
  %v115 = vpack.c.b16 %v99, %v95
  %v116 = vpack.c.b16 %v100, %v96
  %v117 = vpack.c.b16 %v101, %v97
  %vm134 = vcmask 523264
  %v136 = vsel %vm134, %v15, 0
  %138 = vmatprep.subr.bf16.mxu0 %v103
  %139 = vmatpush1.bf16.msra.mxu0 %v102
  %140 = vmatprep.subr.bf16.mxu0 %v107
  %141 = vmatpush1.bf16.msra.mxu0 %v106
  %142 = vmatprep.subr.bf16.mxu0 %v111
  %143 = vmatpush1.bf16.msra.mxu0 %v110
  %144 = vmatprep.subr.bf16.mxu0 %v115
  %145 = vmatpush1.bf16.msra.mxu0 %v114
  %146 = vmatprep.subr.bf16.mxu0 0
  %147 = vmatpush1.bf16.msra.mxu0 0
  %148 = vmatprep.subr.bf16.mxu0 0
  %149 = vmatpush1.bf16.msra.mxu0 0
  %150 = vmatprep.subr.bf16.mxu0 0
  %151 = vmatpush1.bf16.msra.mxu0 0
  %152 = vmatprep.subr.bf16.mxu0 0
  %153 = vmatpush1.bf16.msra.mxu0 0
  %154 = vmatprep.subr.bf16.mxu0 0
  %155 = vmatpush1.bf16.msra.mxu0 0
  %156 = vmatprep.subr.bf16.mxu0 0
  %157 = vmatpush1.bf16.msra.mxu0 0
  %158 = vmatprep.subr.bf16.mxu0 0
  %159 = vmatpush1.bf16.msra.mxu0 0
  %160 = vmatprep.subr.bf16.mxu0 0
  %161 = vmatpush1.bf16.msra.mxu0 0
  %162 = vmatprep.subr.bf16.mxu0 0
  %163 = vmatpush1.bf16.msra.mxu0 0
  %164 = vmatprep.subr.bf16.mxu0 0
  %165 = vmatpush1.bf16.msra.mxu0 0
  %166 = vmatprep.subr.bf16.mxu0 0
  %167 = vmatpush1.bf16.msra.mxu0 0
  %168 = vmatprep.subr.bf16.mxu0 0
  %169 = vmatpush1.bf16.msra.mxu0 0
  %170 = vmatprep.mubr.bf16.mxu0 0
  %171 = vmatmul.mubr.bf16.gmra.mrb[0].mxu0 %v136
  %v172 = vpop.f32.mrb[0].mxu0
  %v173 = vadd.f32 %v37, %v172
  %v174 = vpop.f32.mrb[0].mxu0
  %v175 = vadd.f32 %v41, %v174
  %v176 = vpop.f32.mrb[0].mxu0
  %v177 = vpop.f32.mrb[0].mxu0
  %178 = vdwg.mxu0
  %179 = vmatprep.subr.bf16.mxu0 %v105
  %180 = vmatpush1.bf16.msra.mxu0 %v104
  %181 = vmatprep.subr.bf16.mxu0 %v109
  %182 = vmatpush1.bf16.msra.mxu0 %v108
  %183 = vmatprep.subr.bf16.mxu0 %v113
  %184 = vmatpush1.bf16.msra.mxu0 %v112
  %185 = vmatprep.subr.bf16.mxu0 %v117
  %186 = vmatpush1.bf16.msra.mxu0 %v116
  %187 = vmatprep.subr.bf16.mxu0 0
  %188 = vmatpush1.bf16.msra.mxu0 0
  %189 = vmatprep.subr.bf16.mxu0 0
  %190 = vmatpush1.bf16.msra.mxu0 0
  %191 = vmatprep.subr.bf16.mxu0 0
  %192 = vmatpush1.bf16.msra.mxu0 0
  %193 = vmatprep.subr.bf16.mxu0 0
  %194 = vmatpush1.bf16.msra.mxu0 0
  %195 = vmatprep.subr.bf16.mxu0 0
  %196 = vmatpush1.bf16.msra.mxu0 0
  %197 = vmatprep.subr.bf16.mxu0 0
  %198 = vmatpush1.bf16.msra.mxu0 0
  %199 = vmatprep.subr.bf16.mxu0 0
  %200 = vmatpush1.bf16.msra.mxu0 0
  %201 = vmatprep.subr.bf16.mxu0 0
  %202 = vmatpush1.bf16.msra.mxu0 0
  %203 = vmatprep.subr.bf16.mxu0 0
  %204 = vmatpush1.bf16.msra.mxu0 0
  %205 = vmatprep.subr.bf16.mxu0 0
  %206 = vmatpush1.bf16.msra.mxu0 0
  %207 = vmatprep.subr.bf16.mxu0 0
  %208 = vmatpush1.bf16.msra.mxu0 0
  %209 = vmatprep.subr.bf16.mxu0 0
  %210 = vmatpush1.bf16.msra.mxu0 0
  %211 = vmatprep.mubr.bf16.mxu0 0
  %212 = vmatmul.mubr.bf16.gmra.mrb[0].mxu0 %v136
  %v213 = vpop.f32.mrb[0].mxu0
  %v214 = vadd.f32 %v45, %v213
  %v215 = vpop.f32.mrb[0].mxu0
  %v216 = vadd.f32 %v49, %v215
  %v217 = vpop.f32.mrb[0].mxu0
  %v218 = vpop.f32.mrb[0].mxu0
  %219 = vdwg.mxu0
  %v220 = vmax.f32 %v173, 0.0
  %v221 = vmax.f32 %v175, 0.0
  %v222 = vmax.f32 %v214, 0.0
  %v223 = vmax.f32 %v216, 0.0
  %v224 = vpack.c.bf16 %v220, %v220
  %v225 = vpack.c.bf16 %v221, %v221
  %v226 = vpack.c.bf16 %v222, %v222
  %v227 = vpack.c.bf16 %v223, %v223
  %v232 = vcombine.low %v224, %v225
  %v233 = vcombine.low %v226, %v227
  %v235 = vunpack.c.l.s4 1983009808
  %v236 = vunpack.c.0.s8 %v235
  %v237 = vlaneseq
  %v238 = vshrl.u32 %v237, 7
  %v239 = vsub.s32 %v236, %v238
  %v240 = vrot.slane %v232, %v239
  %v242 = vunpack.c.l.s4 1983009808
  %v243 = vunpack.c.0.s8 %v242
  %v244 = vlaneseq
  %v245 = vshrl.u32 %v244, 7
  %v246 = vsub.s32 %v243, %v245
  %v247 = vrot.slane %v233, %v246
  %v248 = vcombine.low %v240, %v247
  %250 = vst [vmem:[%s3] sm:$0xff] %v248
  // Predicated region
  $region14: #{lstm_agent_forward.10} parent=0 // pred_check
    _
  $region15: #{lstm_agent_forward.10} parent=0 // pred_check_branch
    %252 = sbr.rel (0) target = $region17
  $region16: #{lstm_agent_forward.10} parent=0 // pred_region
    _
  $region17: #{lstm_agent_forward.10} parent=0 // pred_fallthru
    _
  // Predicated region
  $region18: #{lstm_agent_forward.10} parent=0 // pred_check
    _
  $region19: #{lstm_agent_forward.10} parent=0 // pred_check_branch
    %254 = sbr.rel (0) target = $region21
  $region20: #{lstm_agent_forward.10} parent=0 // pred_region
    _
  $region21: #{lstm_agent_forward.10} parent=0 // pred_fallthru
    _

// kernel: lstm_agent_forward.11
$region0: #{lstm_agent_forward.11}
  #allocation0 [shape = 'u32[]', space=smem, size = 0x4, offset = 0x4, fixed_abs, tag = 'smem constant byte address 0x4 - core index']
  #allocation1 [shape = 'u32[144,128]{1,0:T(1,128)}', space=vmem, size = 0x12000, scoped, tag = 'internal scratch']
  %s0 = inlined_call_operand.vmem [shape: bf16[4,512], index: 0, kind: input, shape index: {}]
  %s1 = inlined_call_operand.vmem [shape: bf16[512,512], index: 1, kind: input, shape index: {}]
  %s2 = inlined_call_operand.vmem [shape: f32[1,512], index: 2, kind: input, shape index: {}]
  %s3 = inlined_call_operand.vmem [shape: f32[4,512], index: 3, kind: input, shape index: {}]
  %s4 = inlined_call_operand.vmem [shape: f32[4,512], index: 4, kind: output, shape index: {}]
  %s5 = sld [smem:[#allocation0]]
  $region26: #{lstm_agent_forward.11} parent=0
    _
  %s7 = ssub.s32 1, %s5
  %s8 = scalar_select 0, %s7, %s5
  // Predicated region
  $region2: #{lstm_agent_forward.11} parent=0 // pred_check
    _
  $region3: #{lstm_agent_forward.11} parent=0 // pred_check_branch
    %10 = sbr.rel (0) target = $region5
  $region4: #{lstm_agent_forward.11} parent=0 // pred_region
    _
  $region5: #{lstm_agent_forward.11} parent=0 // pred_fallthru
    _
  // Predicated region
  $region6: #{lstm_agent_forward.11} parent=0 // pred_check
    _
  $region7: #{lstm_agent_forward.11} parent=0 // pred_check_branch
    %12 = sbr.rel (0) target = $region9
  $region8: #{lstm_agent_forward.11} parent=0 // pred_region
    _
  $region9: #{lstm_agent_forward.11} parent=0 // pred_fallthru
    _
  // Predicated region
  $region10: #{lstm_agent_forward.11} parent=0 // pred_check
    _
  $region11: #{lstm_agent_forward.11} parent=0 // pred_check_branch
    %14 = sbr.rel (0) target = $region13
  $region12: #{lstm_agent_forward.11} parent=0 // pred_region
    _
  $region13: #{lstm_agent_forward.11} parent=0 // pred_fallthru
    _
  // Predicated region
  $region14: #{lstm_agent_forward.11} parent=0 // pred_check
    _
  $region15: #{lstm_agent_forward.11} parent=0 // pred_check_branch
    %16 = sbr.rel (0) target = $region17
  $region16: #{lstm_agent_forward.11} parent=0 // pred_region
    _
  $region17: #{lstm_agent_forward.11} parent=0 // pred_fallthru
    _
  %v17 = vld [vmem:[%s0] sm:$0xff]
  %v18 = vld [vmem:[%s1] sm:$0xff]
  %v19 = vld [vmem:[%s1 + $0x8] sm:$0xff]
  %v20 = vld [vmem:[%s1 + $0x10] sm:$0xff]
  %v21 = vld [vmem:[%s1 + $0x18] sm:$0xff]
  %v22 = vld [vmem:[%s1 + $0x20] sm:$0xff]
  %v23 = vld [vmem:[%s1 + $0x28] sm:$0xff]
  %v24 = vld [vmem:[%s1 + $0x30] sm:$0xff]
  %v25 = vld [vmem:[%s1 + $0x38] sm:$0xff]
  %v26 = vld [vmem:[%s1 + $0x40] sm:$0xff]
  %v27 = vld [vmem:[%s1 + $0x48] sm:$0xff]
  %v28 = vld [vmem:[%s1 + $0x50] sm:$0xff]
  %v29 = vld [vmem:[%s1 + $0x58] sm:$0xff]
  %v30 = vld [vmem:[%s1 + $0x60] sm:$0xff]
  %v31 = vld [vmem:[%s1 + $0x68] sm:$0xff]
  %v32 = vld [vmem:[%s1 + $0x70] sm:$0xff]
  %v33 = vld [vmem:[%s1 + $0x78] sm:$0xff]
  %v34 = vld [vmem:[%s1 + $0x80] sm:$0xff]
  %v35 = vld [vmem:[%s1 + $0x88] sm:$0xff]
  %v36 = vld [vmem:[%s1 + $0x90] sm:$0xff]
  %v37 = vld [vmem:[%s1 + $0x98] sm:$0xff]
  %v38 = vld [vmem:[%s1 + $0xa0] sm:$0xff]
  %v39 = vld [vmem:[%s1 + $0xa8] sm:$0xff]
  %v40 = vld [vmem:[%s1 + $0xb0] sm:$0xff]
  %v41 = vld [vmem:[%s1 + $0xb8] sm:$0xff]
  %v42 = vld [vmem:[%s1 + $0xc0] sm:$0xff]
  %v43 = vld [vmem:[%s1 + $0xc8] sm:$0xff]
  %v44 = vld [vmem:[%s1 + $0xd0] sm:$0xff]
  %v45 = vld [vmem:[%s1 + $0xd8] sm:$0xff]
  %v46 = vld [vmem:[%s1 + $0xe0] sm:$0xff]
  %v47 = vld [vmem:[%s1 + $0xe8] sm:$0xff]
  %v48 = vld [vmem:[%s1 + $0xf0] sm:$0xff]
  %v49 = vld [vmem:[%s1 + $0xf8] sm:$0xff]
  %v50 = vld [vmem:[%s1 + $0x100] sm:$0xff]
  %v51 = vld [vmem:[%s1 + $0x108] sm:$0xff]
  %v52 = vld [vmem:[%s1 + $0x110] sm:$0xff]
  %v53 = vld [vmem:[%s1 + $0x118] sm:$0xff]
  %v54 = vld [vmem:[%s1 + $0x120] sm:$0xff]
  %v55 = vld [vmem:[%s1 + $0x128] sm:$0xff]
  %v56 = vld [vmem:[%s1 + $0x130] sm:$0xff]
  %v57 = vld [vmem:[%s1 + $0x138] sm:$0xff]
  %v58 = vld [vmem:[%s1 + $0x140] sm:$0xff]
  %v59 = vld [vmem:[%s1 + $0x148] sm:$0xff]
  %v60 = vld [vmem:[%s1 + $0x150] sm:$0xff]
  %v61 = vld [vmem:[%s1 + $0x158] sm:$0xff]
  %v62 = vld [vmem:[%s1 + $0x160] sm:$0xff]
  %v63 = vld [vmem:[%s1 + $0x168] sm:$0xff]
  %v64 = vld [vmem:[%s1 + $0x170] sm:$0xff]
  %v65 = vld [vmem:[%s1 + $0x178] sm:$0xff]
  %v66 = vld [vmem:[%s1 + $0x180] sm:$0xff]
  %v67 = vld [vmem:[%s1 + $0x188] sm:$0xff]
  %v68 = vld [vmem:[%s1 + $0x190] sm:$0xff]
  %v69 = vld [vmem:[%s1 + $0x198] sm:$0xff]
  %v70 = vld [vmem:[%s1 + $0x1a0] sm:$0xff]
  %v71 = vld [vmem:[%s1 + $0x1a8] sm:$0xff]
  %v72 = vld [vmem:[%s1 + $0x1b0] sm:$0xff]
  %v73 = vld [vmem:[%s1 + $0x1b8] sm:$0xff]
  %v74 = vld [vmem:[%s1 + $0x1c0] sm:$0xff]
  %v75 = vld [vmem:[%s1 + $0x1c8] sm:$0xff]
  %v76 = vld [vmem:[%s1 + $0x1d0] sm:$0xff]
  %v77 = vld [vmem:[%s1 + $0x1d8] sm:$0xff]
  %v78 = vld [vmem:[%s1 + $0x1e0] sm:$0xff]
  %v79 = vld [vmem:[%s1 + $0x1e8] sm:$0xff]
  %v80 = vld [vmem:[%s1 + $0x1f0] sm:$0xff]
  %v81 = vld [vmem:[%s1 + $0x1f8] sm:$0xff]
  %v82 = vld [vmem:[%s1 + $0x200] sm:$0xff]
  %v83 = vld [vmem:[%s1 + $0x208] sm:$0xff]
  %v84 = vld [vmem:[%s1 + $0x210] sm:$0xff]
  %v85 = vld [vmem:[%s1 + $0x218] sm:$0xff]
  %v86 = vld [vmem:[%s1 + $0x220] sm:$0xff]
  %v87 = vld [vmem:[%s1 + $0x228] sm:$0xff]
  %v88 = vld [vmem:[%s1 + $0x230] sm:$0xff]
  %v89 = vld [vmem:[%s1 + $0x238] sm:$0xff]
  %v90 = vld [vmem:[%s1 + $0x240] sm:$0xff]
  %v91 = vld [vmem:[%s1 + $0x248] sm:$0xff]
  %v92 = vld [vmem:[%s1 + $0x250] sm:$0xff]
  %v93 = vld [vmem:[%s1 + $0x258] sm:$0xff]
  %v94 = vld [vmem:[%s1 + $0x260] sm:$0xff]
  %v95 = vld [vmem:[%s1 + $0x268] sm:$0xff]
  %v96 = vld [vmem:[%s1 + $0x270] sm:$0xff]
  %v97 = vld [vmem:[%s1 + $0x278] sm:$0xff]
  %v98 = vld [vmem:[%s1 + $0x280] sm:$0xff]
  %v99 = vld [vmem:[%s1 + $0x288] sm:$0xff]
  %v100 = vld [vmem:[%s1 + $0x290] sm:$0xff]
  %v101 = vld [vmem:[%s1 + $0x298] sm:$0xff]
  %v102 = vld [vmem:[%s1 + $0x2a0] sm:$0xff]
  %v103 = vld [vmem:[%s1 + $0x2a8] sm:$0xff]
  %v104 = vld [vmem:[%s1 + $0x2b0] sm:$0xff]
  %v105 = vld [vmem:[%s1 + $0x2b8] sm:$0xff]
  %v106 = vld [vmem:[%s1 + $0x2c0] sm:$0xff]
  %v107 = vld [vmem:[%s1 + $0x2c8] sm:$0xff]
  %v108 = vld [vmem:[%s1 + $0x2d0] sm:$0xff]
  %v109 = vld [vmem:[%s1 + $0x2d8] sm:$0xff]
  %v110 = vld [vmem:[%s1 + $0x2e0] sm:$0xff]
  %v111 = vld [vmem:[%s1 + $0x2e8] sm:$0xff]
  %v112 = vld [vmem:[%s1 + $0x2f0] sm:$0xff]
  %v113 = vld [vmem:[%s1 + $0x2f8] sm:$0xff]
  %v114 = vld [vmem:[%s1 + $0x300] sm:$0xff]
  %v115 = vld [vmem:[%s1 + $0x308] sm:$0xff]
  %v116 = vld [vmem:[%s1 + $0x310] sm:$0xff]
  %v117 = vld [vmem:[%s1 + $0x318] sm:$0xff]
  %v118 = vld [vmem:[%s1 + $0x320] sm:$0xff]
  %v119 = vld [vmem:[%s1 + $0x328] sm:$0xff]
  %v120 = vld [vmem:[%s1 + $0x330] sm:$0xff]
  %v121 = vld [vmem:[%s1 + $0x338] sm:$0xff]
  %v122 = vld [vmem:[%s1 + $0x340] sm:$0xff]
  %v123 = vld [vmem:[%s1 + $0x348] sm:$0xff]
  %v124 = vld [vmem:[%s1 + $0x350] sm:$0xff]
  %v125 = vld [vmem:[%s1 + $0x358] sm:$0xff]
  %v126 = vld [vmem:[%s1 + $0x360] sm:$0xff]
  %v127 = vld [vmem:[%s1 + $0x368] sm:$0xff]
  %v128 = vld [vmem:[%s1 + $0x370] sm:$0xff]
  %v129 = vld [vmem:[%s1 + $0x378] sm:$0xff]
  %v130 = vld [vmem:[%s1 + $0x380] sm:$0xff]
  %v131 = vld [vmem:[%s1 + $0x388] sm:$0xff]
  %v132 = vld [vmem:[%s1 + $0x390] sm:$0xff]
  %v133 = vld [vmem:[%s1 + $0x398] sm:$0xff]
  %v134 = vld [vmem:[%s1 + $0x3a0] sm:$0xff]
  %v135 = vld [vmem:[%s1 + $0x3a8] sm:$0xff]
  %v136 = vld [vmem:[%s1 + $0x3b0] sm:$0xff]
  %v137 = vld [vmem:[%s1 + $0x3b8] sm:$0xff]
  %v138 = vld [vmem:[%s1 + $0x3c0] sm:$0xff]
  %v139 = vld [vmem:[%s1 + $0x3c8] sm:$0xff]
  %v140 = vld [vmem:[%s1 + $0x3d0] sm:$0xff]
  %v141 = vld [vmem:[%s1 + $0x3d8] sm:$0xff]
  %v142 = vld [vmem:[%s1 + $0x3e0] sm:$0xff]
  %v143 = vld [vmem:[%s1 + $0x3e8] sm:$0xff]
  %v144 = vld [vmem:[%s1 + $0x3f0] sm:$0xff]
  %v145 = vld [vmem:[%s1 + $0x3f8] sm:$0xff]
  %v146 = vld [vmem:[%s2] sm:$0xf]
  %v148 = vlaneseq
  %v149 = vshrl.u32 %v148, 7
  %v150 = vsub.s32 0, %v149
  %v151 = vrot.slane %v146, %v150
  %v152 = vlaneseq
  %v153 = vshrl.u32 %v152, 7
  %v154 = vsub.s32 1, %v153
  %v155 = vrot.slane %v146, %v154
  %v156 = vlaneseq
  %v157 = vshrl.u32 %v156, 7
  %v158 = vsub.s32 2, %v157
  %v159 = vrot.slane %v146, %v158
  %v160 = vlaneseq
  %v161 = vshrl.u32 %v160, 7
  %v162 = vsub.s32 3, %v161
  %v163 = vrot.slane %v146, %v162
  %v169 = vcombine.high %v17, %v17
  %v171 = vunpack.c.l.s4 1983009808
  %v172 = vunpack.c.0.s8 %v171
  %v173 = vlaneseq
  %v174 = vshrl.u32 %v173, 7
  %v175 = vsub.s32 %v172, %v174
  %v176 = vrot.slane %v17, %v175
  %v178 = vunpack.c.l.s4 1983009808
  %v179 = vunpack.c.0.s8 %v178
  %v180 = vlaneseq
  %v181 = vshrl.u32 %v180, 7
  %v182 = vsub.s32 %v179, %v181
  %v183 = vrot.slane %v169, %v182
  %v184 = vcombine.high %v176, %v176
  %v185 = vcombine.high %v183, %v183
  %v318 = vunpack.c.l.b16 %v18
  %v319 = vunpack.c.h.b16 %v18
  %v320 = vunpack.c.l.b16 %v19
  %v321 = vunpack.c.h.b16 %v19
  %v322 = vunpack.c.l.b16 %v20
  %v323 = vunpack.c.h.b16 %v20
  %v324 = vunpack.c.l.b16 %v21
  %v325 = vunpack.c.h.b16 %v21
  %v326 = vunpack.c.l.b16 %v22
  %v327 = vunpack.c.h.b16 %v22
  %v328 = vunpack.c.l.b16 %v23
  %v329 = vunpack.c.h.b16 %v23
  %v330 = vunpack.c.l.b16 %v24
  %v331 = vunpack.c.h.b16 %v24
  %v332 = vunpack.c.l.b16 %v25
  %v333 = vunpack.c.h.b16 %v25
  %v334 = vunpack.c.l.b16 %v26
  %v335 = vunpack.c.h.b16 %v26
  %v336 = vunpack.c.l.b16 %v27
  %v337 = vunpack.c.h.b16 %v27
  %v338 = vunpack.c.l.b16 %v28
  %v339 = vunpack.c.h.b16 %v28
  %v340 = vunpack.c.l.b16 %v29
  %v341 = vunpack.c.h.b16 %v29
  %v342 = vunpack.c.l.b16 %v30
  %v343 = vunpack.c.h.b16 %v30
  %v344 = vunpack.c.l.b16 %v31
  %v345 = vunpack.c.h.b16 %v31
  %v346 = vunpack.c.l.b16 %v32
  %v347 = vunpack.c.h.b16 %v32
  %v348 = vunpack.c.l.b16 %v33
  %v349 = vunpack.c.h.b16 %v33
  %v350 = vunpack.c.l.b16 %v34
  %v351 = vunpack.c.h.b16 %v34
  %v352 = vunpack.c.l.b16 %v35
  %v353 = vunpack.c.h.b16 %v35
  %v354 = vunpack.c.l.b16 %v36
  %v355 = vunpack.c.h.b16 %v36
  %v356 = vunpack.c.l.b16 %v37
  %v357 = vunpack.c.h.b16 %v37
  %v358 = vunpack.c.l.b16 %v38
  %v359 = vunpack.c.h.b16 %v38
  %v360 = vunpack.c.l.b16 %v39
  %v361 = vunpack.c.h.b16 %v39
  %v362 = vunpack.c.l.b16 %v40
  %v363 = vunpack.c.h.b16 %v40
  %v364 = vunpack.c.l.b16 %v41
  %v365 = vunpack.c.h.b16 %v41
  %v366 = vunpack.c.l.b16 %v42
  %v367 = vunpack.c.h.b16 %v42
  %v368 = vunpack.c.l.b16 %v43
  %v369 = vunpack.c.h.b16 %v43
  %v370 = vunpack.c.l.b16 %v44
  %v371 = vunpack.c.h.b16 %v44
  %v372 = vunpack.c.l.b16 %v45
  %v373 = vunpack.c.h.b16 %v45
  %v374 = vunpack.c.l.b16 %v46
  %v375 = vunpack.c.h.b16 %v46
  %v376 = vunpack.c.l.b16 %v47
  %v377 = vunpack.c.h.b16 %v47
  %v378 = vunpack.c.l.b16 %v48
  %v379 = vunpack.c.h.b16 %v48
  %v380 = vunpack.c.l.b16 %v49
  %v381 = vunpack.c.h.b16 %v49
  %v382 = vunpack.c.l.b16 %v50
  %v383 = vunpack.c.h.b16 %v50
  %v384 = vunpack.c.l.b16 %v51
  %v385 = vunpack.c.h.b16 %v51
  %v386 = vunpack.c.l.b16 %v52
  %v387 = vunpack.c.h.b16 %v52
  %v388 = vunpack.c.l.b16 %v53
  %v389 = vunpack.c.h.b16 %v53
  %v390 = vunpack.c.l.b16 %v54
  %v391 = vunpack.c.h.b16 %v54
  %v392 = vunpack.c.l.b16 %v55
  %v393 = vunpack.c.h.b16 %v55
  %v394 = vunpack.c.l.b16 %v56
  %v395 = vunpack.c.h.b16 %v56
  %v396 = vunpack.c.l.b16 %v57
  %v397 = vunpack.c.h.b16 %v57
  %v398 = vunpack.c.l.b16 %v58
  %v399 = vunpack.c.h.b16 %v58
  %v400 = vunpack.c.l.b16 %v59
  %v401 = vunpack.c.h.b16 %v59
  %v402 = vunpack.c.l.b16 %v60
  %v403 = vunpack.c.h.b16 %v60
  %v404 = vunpack.c.l.b16 %v61
  %v405 = vunpack.c.h.b16 %v61
  %v406 = vunpack.c.l.b16 %v62
  %v407 = vunpack.c.h.b16 %v62
  %v408 = vunpack.c.l.b16 %v63
  %v409 = vunpack.c.h.b16 %v63
  %v410 = vunpack.c.l.b16 %v64
  %v411 = vunpack.c.h.b16 %v64
  %v412 = vunpack.c.l.b16 %v65
  %v413 = vunpack.c.h.b16 %v65
  %v414 = vunpack.c.l.b16 %v66
  %v415 = vunpack.c.h.b16 %v66
  %v416 = vunpack.c.l.b16 %v67
  %v417 = vunpack.c.h.b16 %v67
  %v418 = vunpack.c.l.b16 %v68
  %v419 = vunpack.c.h.b16 %v68
  %v420 = vunpack.c.l.b16 %v69
  %v421 = vunpack.c.h.b16 %v69
  %v422 = vunpack.c.l.b16 %v70
  %v423 = vunpack.c.h.b16 %v70
  %v424 = vunpack.c.l.b16 %v71
  %v425 = vunpack.c.h.b16 %v71
  %v426 = vunpack.c.l.b16 %v72
  %v427 = vunpack.c.h.b16 %v72
  %v428 = vunpack.c.l.b16 %v73
  %v429 = vunpack.c.h.b16 %v73
  %v430 = vunpack.c.l.b16 %v74
  %v431 = vunpack.c.h.b16 %v74
  %v432 = vunpack.c.l.b16 %v75
  %v433 = vunpack.c.h.b16 %v75
  %v434 = vunpack.c.l.b16 %v76
  %v435 = vunpack.c.h.b16 %v76
  %v436 = vunpack.c.l.b16 %v77
  %v437 = vunpack.c.h.b16 %v77
  %v438 = vunpack.c.l.b16 %v78
  %v439 = vunpack.c.h.b16 %v78
  %v440 = vunpack.c.l.b16 %v79
  %v441 = vunpack.c.h.b16 %v79
  %v442 = vunpack.c.l.b16 %v80
  %v443 = vunpack.c.h.b16 %v80
  %v444 = vunpack.c.l.b16 %v81
  %v445 = vunpack.c.h.b16 %v81
  %v446 = vunpack.c.l.b16 %v82
  %v447 = vunpack.c.h.b16 %v82
  %v448 = vunpack.c.l.b16 %v83
  %v449 = vunpack.c.h.b16 %v83
  %v450 = vunpack.c.l.b16 %v84
  %v451 = vunpack.c.h.b16 %v84
  %v452 = vunpack.c.l.b16 %v85
  %v453 = vunpack.c.h.b16 %v85
  %v454 = vunpack.c.l.b16 %v86
  %v455 = vunpack.c.h.b16 %v86
  %v456 = vunpack.c.l.b16 %v87
  %v457 = vunpack.c.h.b16 %v87
  %v458 = vunpack.c.l.b16 %v88
  %v459 = vunpack.c.h.b16 %v88
  %v460 = vunpack.c.l.b16 %v89
  %v461 = vunpack.c.h.b16 %v89
  %v462 = vunpack.c.l.b16 %v90
  %v463 = vunpack.c.h.b16 %v90
  %v464 = vunpack.c.l.b16 %v91
  %v465 = vunpack.c.h.b16 %v91
  %v466 = vunpack.c.l.b16 %v92
  %v467 = vunpack.c.h.b16 %v92
  %v468 = vunpack.c.l.b16 %v93
  %v469 = vunpack.c.h.b16 %v93
  %v470 = vunpack.c.l.b16 %v94
  %v471 = vunpack.c.h.b16 %v94
  %v472 = vunpack.c.l.b16 %v95
  %v473 = vunpack.c.h.b16 %v95
  %v474 = vunpack.c.l.b16 %v96
  %v475 = vunpack.c.h.b16 %v96
  %v476 = vunpack.c.l.b16 %v97
  %v477 = vunpack.c.h.b16 %v97
  %v478 = vunpack.c.l.b16 %v98
  %v479 = vunpack.c.h.b16 %v98
  %v480 = vunpack.c.l.b16 %v99
  %v481 = vunpack.c.h.b16 %v99
  %v482 = vunpack.c.l.b16 %v100
  %v483 = vunpack.c.h.b16 %v100
  %v484 = vunpack.c.l.b16 %v101
  %v485 = vunpack.c.h.b16 %v101
  %v486 = vunpack.c.l.b16 %v102
  %v487 = vunpack.c.h.b16 %v102
  %v488 = vunpack.c.l.b16 %v103
  %v489 = vunpack.c.h.b16 %v103
  %v490 = vunpack.c.l.b16 %v104
  %v491 = vunpack.c.h.b16 %v104
  %v492 = vunpack.c.l.b16 %v105
  %v493 = vunpack.c.h.b16 %v105
  %v494 = vunpack.c.l.b16 %v106
  %v495 = vunpack.c.h.b16 %v106
  %v496 = vunpack.c.l.b16 %v107
  %v497 = vunpack.c.h.b16 %v107
  %v498 = vunpack.c.l.b16 %v108
  %v499 = vunpack.c.h.b16 %v108
  %v500 = vunpack.c.l.b16 %v109
  %v501 = vunpack.c.h.b16 %v109
  %v502 = vunpack.c.l.b16 %v110
  %v503 = vunpack.c.h.b16 %v110
  %v504 = vunpack.c.l.b16 %v111
  %v505 = vunpack.c.h.b16 %v111
  %v506 = vunpack.c.l.b16 %v112
  %v507 = vunpack.c.h.b16 %v112
  %v508 = vunpack.c.l.b16 %v113
  %v509 = vunpack.c.h.b16 %v113
  %v510 = vunpack.c.l.b16 %v114
  %v511 = vunpack.c.h.b16 %v114
  %v512 = vunpack.c.l.b16 %v115
  %v513 = vunpack.c.h.b16 %v115
  %v514 = vunpack.c.l.b16 %v116
  %v515 = vunpack.c.h.b16 %v116
  %v516 = vunpack.c.l.b16 %v117
  %v517 = vunpack.c.h.b16 %v117
  %v518 = vunpack.c.l.b16 %v118
  %v519 = vunpack.c.h.b16 %v118
  %v520 = vunpack.c.l.b16 %v119
  %v521 = vunpack.c.h.b16 %v119
  %v522 = vunpack.c.l.b16 %v120
  %v523 = vunpack.c.h.b16 %v120
  %v524 = vunpack.c.l.b16 %v121
  %v525 = vunpack.c.h.b16 %v121
  %v526 = vunpack.c.l.b16 %v122
  %v527 = vunpack.c.h.b16 %v122
  %v528 = vunpack.c.l.b16 %v123
  %v529 = vunpack.c.h.b16 %v123
  %v530 = vunpack.c.l.b16 %v124
  %v531 = vunpack.c.h.b16 %v124
  %v532 = vunpack.c.l.b16 %v125
  %v533 = vunpack.c.h.b16 %v125
  %v534 = vunpack.c.l.b16 %v126
  %v535 = vunpack.c.h.b16 %v126
  %v536 = vunpack.c.l.b16 %v127
  %v537 = vunpack.c.h.b16 %v127
  %v538 = vunpack.c.l.b16 %v128
  %v539 = vunpack.c.h.b16 %v128
  %v540 = vunpack.c.l.b16 %v129
  %v541 = vunpack.c.h.b16 %v129
  %v542 = vunpack.c.l.b16 %v130
  %v543 = vunpack.c.h.b16 %v130
  %v544 = vunpack.c.l.b16 %v131
  %v545 = vunpack.c.h.b16 %v131
  %v546 = vunpack.c.l.b16 %v132
  %v547 = vunpack.c.h.b16 %v132
  %v548 = vunpack.c.l.b16 %v133
  %v549 = vunpack.c.h.b16 %v133
  %v550 = vunpack.c.l.b16 %v134
  %v551 = vunpack.c.h.b16 %v134
  %v552 = vunpack.c.l.b16 %v135
  %v553 = vunpack.c.h.b16 %v135
  %v554 = vunpack.c.l.b16 %v136
  %v555 = vunpack.c.h.b16 %v136
  %v556 = vunpack.c.l.b16 %v137
  %v557 = vunpack.c.h.b16 %v137
  %v558 = vunpack.c.l.b16 %v138
  %v559 = vunpack.c.h.b16 %v138
  %v560 = vunpack.c.l.b16 %v139
  %v561 = vunpack.c.h.b16 %v139
  %v562 = vunpack.c.l.b16 %v140
  %v563 = vunpack.c.h.b16 %v140
  %v564 = vunpack.c.l.b16 %v141
  %v565 = vunpack.c.h.b16 %v141
  %v566 = vunpack.c.l.b16 %v142
  %v567 = vunpack.c.h.b16 %v142
  %v568 = vunpack.c.l.b16 %v143
  %v569 = vunpack.c.h.b16 %v143
  %v570 = vunpack.c.l.b16 %v144
  %v571 = vunpack.c.h.b16 %v144
  %v572 = vunpack.c.l.b16 %v145
  %v573 = vunpack.c.h.b16 %v145
  %v574 = vpack.c.b16 %v322, %v318
  %v575 = vpack.c.b16 %v323, %v319
  %v576 = vpack.c.b16 %v324, %v320
  %v577 = vpack.c.b16 %v325, %v321
  %v578 = vpack.c.b16 %v330, %v326
  %v579 = vpack.c.b16 %v331, %v327
  %v580 = vpack.c.b16 %v332, %v328
  %v581 = vpack.c.b16 %v333, %v329
  %v582 = vpack.c.b16 %v338, %v334
  %v583 = vpack.c.b16 %v339, %v335
  %v584 = vpack.c.b16 %v340, %v336
  %v585 = vpack.c.b16 %v341, %v337
  %v586 = vpack.c.b16 %v346, %v342
  %v587 = vpack.c.b16 %v347, %v343
  %v588 = vpack.c.b16 %v348, %v344
  %v589 = vpack.c.b16 %v349, %v345
  %v590 = vpack.c.b16 %v354, %v350
  %v591 = vpack.c.b16 %v355, %v351
  %v592 = vpack.c.b16 %v356, %v352
  %v593 = vpack.c.b16 %v357, %v353
  %v594 = vpack.c.b16 %v362, %v358
  %v595 = vpack.c.b16 %v363, %v359
  %v596 = vpack.c.b16 %v364, %v360
  %v597 = vpack.c.b16 %v365, %v361
  %v598 = vpack.c.b16 %v370, %v366
  %v599 = vpack.c.b16 %v371, %v367
  %v600 = vpack.c.b16 %v372, %v368
  %v601 = vpack.c.b16 %v373, %v369
  %v602 = vpack.c.b16 %v378, %v374
  %v603 = vpack.c.b16 %v379, %v375
  %v604 = vpack.c.b16 %v380, %v376
  %v605 = vpack.c.b16 %v381, %v377
  %v606 = vpack.c.b16 %v386, %v382
  %v607 = vpack.c.b16 %v387, %v383
  %v608 = vpack.c.b16 %v388, %v384
  %v609 = vpack.c.b16 %v389, %v385
  %v610 = vpack.c.b16 %v394, %v390
  %v611 = vpack.c.b16 %v395, %v391
  %v612 = vpack.c.b16 %v396, %v392
  %v613 = vpack.c.b16 %v397, %v393
  %v614 = vpack.c.b16 %v402, %v398
  %v615 = vpack.c.b16 %v403, %v399
  %v616 = vpack.c.b16 %v404, %v400
  %v617 = vpack.c.b16 %v405, %v401
  %v618 = vpack.c.b16 %v410, %v406
  %v619 = vpack.c.b16 %v411, %v407
  %v620 = vpack.c.b16 %v412, %v408
  %v621 = vpack.c.b16 %v413, %v409
  %v622 = vpack.c.b16 %v418, %v414
  %v623 = vpack.c.b16 %v419, %v415
  %v624 = vpack.c.b16 %v420, %v416
  %v625 = vpack.c.b16 %v421, %v417
  %v626 = vpack.c.b16 %v426, %v422
  %v627 = vpack.c.b16 %v427, %v423
  %v628 = vpack.c.b16 %v428, %v424
  %v629 = vpack.c.b16 %v429, %v425
  %v630 = vpack.c.b16 %v434, %v430
  %v631 = vpack.c.b16 %v435, %v431
  %v632 = vpack.c.b16 %v436, %v432
  %v633 = vpack.c.b16 %v437, %v433
  %v634 = vpack.c.b16 %v442, %v438
  %v635 = vpack.c.b16 %v443, %v439
  %v636 = vpack.c.b16 %v444, %v440
  %v637 = vpack.c.b16 %v445, %v441
  %v638 = vpack.c.b16 %v450, %v446
  %v639 = vpack.c.b16 %v451, %v447
  %v640 = vpack.c.b16 %v452, %v448
  %v641 = vpack.c.b16 %v453, %v449
  %v642 = vpack.c.b16 %v458, %v454
  %v643 = vpack.c.b16 %v459, %v455
  %v644 = vpack.c.b16 %v460, %v456
  %v645 = vpack.c.b16 %v461, %v457
  %v646 = vpack.c.b16 %v466, %v462
  %v647 = vpack.c.b16 %v467, %v463
  %v648 = vpack.c.b16 %v468, %v464
  %v649 = vpack.c.b16 %v469, %v465
  %v650 = vpack.c.b16 %v474, %v470
  %v651 = vpack.c.b16 %v475, %v471
  %v652 = vpack.c.b16 %v476, %v472
  %v653 = vpack.c.b16 %v477, %v473
  %v654 = vpack.c.b16 %v482, %v478
  %v655 = vpack.c.b16 %v483, %v479
  %v656 = vpack.c.b16 %v484, %v480
  %v657 = vpack.c.b16 %v485, %v481
  %v658 = vpack.c.b16 %v490, %v486
  %v659 = vpack.c.b16 %v491, %v487
  %v660 = vpack.c.b16 %v492, %v488
  %v661 = vpack.c.b16 %v493, %v489
  %v662 = vpack.c.b16 %v498, %v494
  %v663 = vpack.c.b16 %v499, %v495
  %v664 = vpack.c.b16 %v500, %v496
  %v665 = vpack.c.b16 %v501, %v497
  %v666 = vpack.c.b16 %v506, %v502
  %v667 = vpack.c.b16 %v507, %v503
  %v668 = vpack.c.b16 %v508, %v504
  %v669 = vpack.c.b16 %v509, %v505
  %v670 = vpack.c.b16 %v514, %v510
  %v671 = vpack.c.b16 %v515, %v511
  %v672 = vpack.c.b16 %v516, %v512
  %v673 = vpack.c.b16 %v517, %v513
  %v674 = vpack.c.b16 %v522, %v518
  %v675 = vpack.c.b16 %v523, %v519
  %v676 = vpack.c.b16 %v524, %v520
  %v677 = vpack.c.b16 %v525, %v521
  %v678 = vpack.c.b16 %v530, %v526
  %v679 = vpack.c.b16 %v531, %v527
  %v680 = vpack.c.b16 %v532, %v528
  %v681 = vpack.c.b16 %v533, %v529
  %v682 = vpack.c.b16 %v538, %v534
  %v683 = vpack.c.b16 %v539, %v535
  %v684 = vpack.c.b16 %v540, %v536
  %v685 = vpack.c.b16 %v541, %v537
  %v686 = vpack.c.b16 %v546, %v542
  %v687 = vpack.c.b16 %v547, %v543
  %v688 = vpack.c.b16 %v548, %v544
  %v689 = vpack.c.b16 %v549, %v545
  %v690 = vpack.c.b16 %v554, %v550
  %v691 = vpack.c.b16 %v555, %v551
  %v692 = vpack.c.b16 %v556, %v552
  %v693 = vpack.c.b16 %v557, %v553
  %v694 = vpack.c.b16 %v562, %v558
  %v695 = vpack.c.b16 %v563, %v559
  %v696 = vpack.c.b16 %v564, %v560
  %v697 = vpack.c.b16 %v565, %v561
  %v698 = vpack.c.b16 %v570, %v566
  %v699 = vpack.c.b16 %v571, %v567
  %v700 = vpack.c.b16 %v572, %v568
  %v701 = vpack.c.b16 %v573, %v569
  %830 = vmatprep.subr.bf16.mxu0 %v575
  %831 = vmatpush1.bf16.msra.mxu0 %v574
  %832 = vmatprep.subr.bf16.mxu0 %v579
  %833 = vmatpush1.bf16.msra.mxu0 %v578
  %834 = vmatprep.subr.bf16.mxu0 %v583
  %835 = vmatpush1.bf16.msra.mxu0 %v582
  %836 = vmatprep.subr.bf16.mxu0 %v587
  %837 = vmatpush1.bf16.msra.mxu0 %v586
  %838 = vmatprep.subr.bf16.mxu0 %v591
  %839 = vmatpush1.bf16.msra.mxu0 %v590
  %840 = vmatprep.subr.bf16.mxu0 %v595
  %841 = vmatpush1.bf16.msra.mxu0 %v594
  %842 = vmatprep.subr.bf16.mxu0 %v599
  %843 = vmatpush1.bf16.msra.mxu0 %v598
  %844 = vmatprep.subr.bf16.mxu0 %v603
  %845 = vmatpush1.bf16.msra.mxu0 %v602
  %846 = vmatprep.subr.bf16.mxu0 %v607
  %847 = vmatpush1.bf16.msra.mxu0 %v606
  %848 = vmatprep.subr.bf16.mxu0 %v611
  %849 = vmatpush1.bf16.msra.mxu0 %v610
  %850 = vmatprep.subr.bf16.mxu0 %v615
  %851 = vmatpush1.bf16.msra.mxu0 %v614
  %852 = vmatprep.subr.bf16.mxu0 %v619
  %853 = vmatpush1.bf16.msra.mxu0 %v618
  %854 = vmatprep.subr.bf16.mxu0 %v623
  %855 = vmatpush1.bf16.msra.mxu0 %v622
  %856 = vmatprep.subr.bf16.mxu0 %v627
  %857 = vmatpush1.bf16.msra.mxu0 %v626
  %858 = vmatprep.subr.bf16.mxu0 %v631
  %859 = vmatpush1.bf16.msra.mxu0 %v630
  %860 = vmatprep.subr.bf16.mxu0 %v635
  %861 = vmatpush1.bf16.msra.mxu0 %v634
  %862 = vmatprep.mubr.bf16.mxu0 %v184
  %863 = vmatmul.mubr.bf16.gmra.mrb[0].mxu0 %v176
  %v864 = vpop.f32.mrb[0].mxu0
  %v865 = vadd.f32 %v151, %v864
  %v866 = vpop.f32.mrb[0].mxu0
  %v867 = vadd.f32 %v155, %v866
  %v868 = vpop.f32.mrb[0].mxu0
  %v869 = vpop.f32.mrb[0].mxu0
  %870 = vdwg.mxu0
  %871 = vmatprep.subr.bf16.mxu0 %v639
  %872 = vmatpush1.bf16.msra.mxu0 %v638
  %873 = vmatprep.subr.bf16.mxu0 %v643
  %874 = vmatpush1.bf16.msra.mxu0 %v642
  %875 = vmatprep.subr.bf16.mxu0 %v647
  %876 = vmatpush1.bf16.msra.mxu0 %v646
  %877 = vmatprep.subr.bf16.mxu0 %v651
  %878 = vmatpush1.bf16.msra.mxu0 %v650
  %879 = vmatprep.subr.bf16.mxu0 %v655
  %880 = vmatpush1.bf16.msra.mxu0 %v654
  %881 = vmatprep.subr.bf16.mxu0 %v659
  %882 = vmatpush1.bf16.msra.mxu0 %v658
  %883 = vmatprep.subr.bf16.mxu0 %v663
  %884 = vmatpush1.bf16.msra.mxu0 %v662
  %885 = vmatprep.subr.bf16.mxu0 %v667
  %886 = vmatpush1.bf16.msra.mxu0 %v666
  %887 = vmatprep.subr.bf16.mxu0 %v671
  %888 = vmatpush1.bf16.msra.mxu0 %v670
  %889 = vmatprep.subr.bf16.mxu0 %v675
  %890 = vmatpush1.bf16.msra.mxu0 %v674
  %891 = vmatprep.subr.bf16.mxu0 %v679
  %892 = vmatpush1.bf16.msra.mxu0 %v678
  %893 = vmatprep.subr.bf16.mxu0 %v683
  %894 = vmatpush1.bf16.msra.mxu0 %v682
  %895 = vmatprep.subr.bf16.mxu0 %v687
  %896 = vmatpush1.bf16.msra.mxu0 %v686
  %897 = vmatprep.subr.bf16.mxu0 %v691
  %898 = vmatpush1.bf16.msra.mxu0 %v690
  %899 = vmatprep.subr.bf16.mxu0 %v695
  %900 = vmatpush1.bf16.msra.mxu0 %v694
  %901 = vmatprep.subr.bf16.mxu0 %v699
  %902 = vmatpush1.bf16.msra.mxu0 %v698
  %903 = vmatprep.mubr.bf16.mxu0 %v185
  %904 = vmatmul.mubr.bf16.gmra.mrb[0].mxu0 %v183
  %v905 = vpop.f32.mrb[0].mxu0
  %v906 = vadd.f32 %v865, %v905
  %v907 = vpop.f32.mrb[0].mxu0
  %v908 = vadd.f32 %v867, %v907
  %v909 = vpop.f32.mrb[0].mxu0
  %v910 = vpop.f32.mrb[0].mxu0
  %911 = vdwg.mxu0
  %912 = vmatprep.subr.bf16.mxu0 %v577
  %913 = vmatpush1.bf16.msra.mxu0 %v576
  %914 = vmatprep.subr.bf16.mxu0 %v581
  %915 = vmatpush1.bf16.msra.mxu0 %v580
  %916 = vmatprep.subr.bf16.mxu0 %v585
  %917 = vmatpush1.bf16.msra.mxu0 %v584
  %918 = vmatprep.subr.bf16.mxu0 %v589
  %919 = vmatpush1.bf16.msra.mxu0 %v588
  %920 = vmatprep.subr.bf16.mxu0 %v593
  %921 = vmatpush1.bf16.msra.mxu0 %v592
  %922 = vmatprep.subr.bf16.mxu0 %v597
  %923 = vmatpush1.bf16.msra.mxu0 %v596
  %924 = vmatprep.subr.bf16.mxu0 %v601
  %925 = vmatpush1.bf16.msra.mxu0 %v600
  %926 = vmatprep.subr.bf16.mxu0 %v605
  %927 = vmatpush1.bf16.msra.mxu0 %v604
  %928 = vmatprep.subr.bf16.mxu0 %v609
  %929 = vmatpush1.bf16.msra.mxu0 %v608
  %930 = vmatprep.subr.bf16.mxu0 %v613
  %931 = vmatpush1.bf16.msra.mxu0 %v612
  %932 = vmatprep.subr.bf16.mxu0 %v617
  %933 = vmatpush1.bf16.msra.mxu0 %v616
  %934 = vmatprep.subr.bf16.mxu0 %v621
  %935 = vmatpush1.bf16.msra.mxu0 %v620
  %936 = vmatprep.subr.bf16.mxu0 %v625
  %937 = vmatpush1.bf16.msra.mxu0 %v624
  %938 = vmatprep.subr.bf16.mxu0 %v629
  %939 = vmatpush1.bf16.msra.mxu0 %v628
  %940 = vmatprep.subr.bf16.mxu0 %v633
  %941 = vmatpush1.bf16.msra.mxu0 %v632
  %942 = vmatprep.subr.bf16.mxu0 %v637
  %943 = vmatpush1.bf16.msra.mxu0 %v636
  %944 = vmatprep.mubr.bf16.mxu0 %v184
  %945 = vmatmul.mubr.bf16.gmra.mrb[0].mxu0 %v176
  %v946 = vpop.f32.mrb[0].mxu0
  %v947 = vadd.f32 %v159, %v946
  %v948 = vpop.f32.mrb[0].mxu0
  %v949 = vadd.f32 %v163, %v948
  %v950 = vpop.f32.mrb[0].mxu0
  %v951 = vpop.f32.mrb[0].mxu0
  %952 = vdwg.mxu0
  %953 = vmatprep.subr.bf16.mxu0 %v641
  %954 = vmatpush1.bf16.msra.mxu0 %v640
  %955 = vmatprep.subr.bf16.mxu0 %v645
  %956 = vmatpush1.bf16.msra.mxu0 %v644
  %957 = vmatprep.subr.bf16.mxu0 %v649
  %958 = vmatpush1.bf16.msra.mxu0 %v648
  %959 = vmatprep.subr.bf16.mxu0 %v653
  %960 = vmatpush1.bf16.msra.mxu0 %v652
  %961 = vmatprep.subr.bf16.mxu0 %v657
  %962 = vmatpush1.bf16.msra.mxu0 %v656
  %963 = vmatprep.subr.bf16.mxu0 %v661
  %964 = vmatpush1.bf16.msra.mxu0 %v660
  %965 = vmatprep.subr.bf16.mxu0 %v665
  %966 = vmatpush1.bf16.msra.mxu0 %v664
  %967 = vmatprep.subr.bf16.mxu0 %v669
  %968 = vmatpush1.bf16.msra.mxu0 %v668
  %969 = vmatprep.subr.bf16.mxu0 %v673
  %970 = vmatpush1.bf16.msra.mxu0 %v672
  %971 = vmatprep.subr.bf16.mxu0 %v677
  %972 = vmatpush1.bf16.msra.mxu0 %v676
  %973 = vmatprep.subr.bf16.mxu0 %v681
  %974 = vmatpush1.bf16.msra.mxu0 %v680
  %975 = vmatprep.subr.bf16.mxu0 %v685
  %976 = vmatpush1.bf16.msra.mxu0 %v684
  %977 = vmatprep.subr.bf16.mxu0 %v689
  %978 = vmatpush1.bf16.msra.mxu0 %v688
  %979 = vmatprep.subr.bf16.mxu0 %v693
  %980 = vmatpush1.bf16.msra.mxu0 %v692
  %981 = vmatprep.subr.bf16.mxu0 %v697
  %982 = vmatpush1.bf16.msra.mxu0 %v696
  %983 = vmatprep.subr.bf16.mxu0 %v701
  %984 = vmatpush1.bf16.msra.mxu0 %v700
  %985 = vmatprep.mubr.bf16.mxu0 %v185
  %986 = vmatmul.mubr.bf16.gmra.mrb[0].mxu0 %v183
  %v987 = vpop.f32.mrb[0].mxu0
  %v988 = vadd.f32 %v947, %v987
  %v989 = vpop.f32.mrb[0].mxu0
  %v990 = vadd.f32 %v949, %v989
  %v991 = vpop.f32.mrb[0].mxu0
  %v992 = vpop.f32.mrb[0].mxu0
  %993 = vdwg.mxu0
  %v994 = vld [vmem:[%s3] sm:$0xff]
  %v995 = vld [vmem:[%s3 + $0x8] sm:$0xff]
  %v998 = vcombine.high %v994, %v994
  %v999 = vcombine.high %v995, %v995
  %v1002 = vadd.f32 %v906, %v994
  %v1003 = vadd.f32 %v908, %v998
  %v1004 = vadd.f32 %v988, %v995
  %v1005 = vadd.f32 %v990, %v999
  %v1010 = vcombine.low %v1002, %v1003
  %v1011 = vcombine.low %v1004, %v1005
  %1014 = vst [vmem:[%s4] sm:$0xff] %v1010
  %1015 = vst [vmem:[%s4 + $0x8] sm:$0xff] %v1011
  // Predicated region
  $region18: #{lstm_agent_forward.11} parent=0 // pred_check
    _
  $region19: #{lstm_agent_forward.11} parent=0 // pred_check_branch
    %1017 = sbr.rel (0) target = $region21
  $region20: #{lstm_agent_forward.11} parent=0 // pred_region
    _
  $region21: #{lstm_agent_forward.11} parent=0 // pred_fallthru
    _
  // Predicated region
  $region22: #{lstm_agent_forward.11} parent=0 // pred_check
    _
  $region23: #{lstm_agent_forward.11} parent=0 // pred_check_branch
    %1019 = sbr.rel (0) target = $region25
  $region24: #{lstm_agent_forward.11} parent=0 // pred_region
    _
  $region25: #{lstm_agent_forward.11} parent=0 // pred_fallthru
    _

// kernel: lstm_agent_forward.12
$region0: #{lstm_agent_forward.12}
  #allocation0 [shape = 'u32[]', space=smem, size = 0x4, offset = 0x4, fixed_abs, tag = 'smem constant byte address 0x4 - core index']
  #allocation1 [shape = 'u32[144,128]{1,0:T(1,128)}', space=vmem, size = 0x12000, scoped, tag = 'internal scratch']
  #allocation2 [shape = 'f32[2,128]{1,0:T(2,128)}', space=vmem, size = 0x400, scoped, tag = 'scratch operand']
  #allocation3 [shape = 'f32[2,128]{1,0:T(2,128)}', space=vmem, size = 0x400, scoped, tag = 'scratch operand']
  %s0 = inlined_call_operand.vmem [shape: f32[2,2,512], index: 0, kind: input, shape index: {}]
  %s1 = inlined_call_operand.vmem [shape: f32[2,2,1], index: 1, kind: input, shape index: {}]
  %s2 = inlined_call_operand.vmem [shape: f32[2,128], index: 2, kind: input, shape index: {}]
  %s3 = inlined_call_operand.vmem [shape: f32[2,128], index: 3, kind: input, shape index: {}]
  %s4 = inlined_call_operand.vmem [shape: bf16[128,512], index: 4, kind: input, shape index: {}]
  %s5 = inlined_call_operand.vmem [shape: f32[2,2,128], index: 5, kind: output, shape index: {0}]
  %s6 = inlined_call_operand.hbm [shape: f32[2,128], index: 6, kind: output, shape index: {1}]
  %s7 = inlined_call_operand.hbm [shape: f32[2,128], index: 7, kind: output, shape index: {2}]
  %8 = xla_tuple %s5, %s6, %s7
  %s9 = sld [smem:[#allocation0]]
  $region77: #{lstm_agent_forward.12} parent=0
    _
  %s11 = ssub.s32 1, %s9
  %s12 = scalar_select 0, %s11, %s9
  $region1: #{lstm_agent_forward.12} parent=0
    #allocation4 [shape = 'u8[1024]{0}', space=vmem, size = 0x400, scoped, tag = 'output window, operand 1, single buffered']
    #allocation5 [shape = 's32[2]{0}', space=sflag, size = 0x8, scoped, tag = 'scoped memory for lstm_agent_forward.12']
    #allocation6 [shape = 'u8[1024]{0}', space=vmem, size = 0x400, scoped, tag = 'output window, operand 2, single buffered']
    #allocation7 [shape = 's32[1]{0}', space=sflag, size = 0x4, scoped, tag = 'scoped memory for lstm_agent_forward.12']
    %13 = vsyncpa [#allocation5], 0
    %14 = vsyncpa [#allocation7], 0
    loop: start=0, step=1, limit=4
    $region2: #{lstm_agent_forward.12} parent=1 // loop_pre_header
      _
    $region3: #{lstm_agent_forward.12} parent=1 // loop_header
      %s16 = sphi 0, %s20
      %p17 = scmp.ge.s32.totalorder %s16, 4
      %s26 = sphi 0, %s28
      %s29 = sphi 0, %s26
      %s30 = sphi 0, %s29
      %s46 = sphi 0, %s30
      %s52 = sphi 0, %s54
      %s55 = sphi 0, %s52
      %s56 = sphi 0, %s55
      %s72 = sphi 0, %s56
      %s76 = sphi 0, %s76
      %s78 = sphi 0, %s76
      %s79 = sphi 0, %s78
      %s93 = sphi 0, %s79
      %s97 = sphi 0, %s97
      %s99 = sphi 0, %s97
      %s100 = sphi 0, %s99
      %s114 = sphi 0, %s100
      %s118 = sphi 0, %s118
      %s120 = sphi 0, %s118
      %s121 = sphi 0, %s120
      %s135 = sphi 0, %s121
      %s141 = sphi 0, %s143
      %s144 = sphi 0, %s141
      %s145 = sphi 0, %s144
      %s161 = sphi 0, %s145
      %s165 = sphi 0, %s165
      %s167 = sphi 0, %s165
      %s168 = sphi 0, %s167
      %s182 = sphi 0, %s168
      %s186 = sphi 0, %s186
      %s188 = sphi 0, %s186
      %s189 = sphi 0, %s188
      %s203 = sphi 0, %s189
    $region4: #{lstm_agent_forward.12} parent=1 // loop_header_branch
      %19 = sbr.rel (%p17) target = $region8
    $region5: #{lstm_agent_forward.12} parent=1 // loop_body
      %s21 = ssub.s32 %s16, 1
      %s22 = ssub.s32 %s16, 2
      %s23 = sadd.s32 %s16, 1
      %s24 = ssub.s32 %s16, %s23
      %p25 = scmp.eq.s32.totalorder %s24, 0
      %s27 = sadd.s32 %s26, 1
      %s28 = scalar_select %p25, %s26, %s27
      %p31 = pneg %p25
      %p32 = scmp.eq.s32.totalorder %s16, 1
      %p33 = por %p31, %p32
      %p34 = scmp.ne.s32.totalorder %s26, %s29
      %p35 = scmp.eq.s32.totalorder %s16, 0
      %p36 = por %p34, %p35
      %p37 = scmp.ne.s32.totalorder %s26, %s29
      %p38 = scmp.eq.s32.totalorder %s21, 1
      %p39 = por %p37, %p38
      %p40 = scmp.ne.s32.totalorder %s29, %s30
      %p41 = scmp.eq.s32.totalorder %s21, 0
      %p42 = por %p40, %p41
      %p43 = scmp.ne.s32.totalorder %s29, %s30
      %p44 = scmp.eq.s32.totalorder %s22, 1
      %p45 = por %p43, %p44
      %p47 = scmp.ne.s32.totalorder %s30, %s46
      %p48 = scmp.eq.s32.totalorder %s22, 0
      %p49 = por %p47, %p48
      %s50 = ssub.s32 %s16, %s23
      %p51 = scmp.eq.s32.totalorder %s50, 0
      %s53 = sadd.s32 %s52, 1
      %s54 = scalar_select %p51, %s52, %s53
      %p57 = pneg %p51
      %p58 = scmp.eq.s32.totalorder %s16, 1
      %p59 = por %p57, %p58
      %p60 = scmp.ne.s32.totalorder %s52, %s55
      %p61 = scmp.eq.s32.totalorder %s16, 0
      %p62 = por %p60, %p61
      %p63 = scmp.ne.s32.totalorder %s52, %s55
      %p64 = scmp.eq.s32.totalorder %s21, 1
      %p65 = por %p63, %p64
      %p66 = scmp.ne.s32.totalorder %s55, %s56
      %p67 = scmp.eq.s32.totalorder %s21, 0
      %p68 = por %p66, %p67
      %p69 = scmp.ne.s32.totalorder %s55, %s56
      %p70 = scmp.eq.s32.totalorder %s22, 1
      %p71 = por %p69, %p70
      %p73 = scmp.ne.s32.totalorder %s56, %s72
      %p74 = scmp.eq.s32.totalorder %s22, 0
      %p75 = por %p73, %p74
      %s77 = sadd.s32 %s76, 1
      %p80 = scmp.eq.s32.totalorder %s16, 1
      %p81 = scmp.ne.s32.totalorder %s76, %s78
      %p82 = scmp.eq.s32.totalorder %s16, 0
      %p83 = por %p81, %p82
      %p84 = scmp.ne.s32.totalorder %s76, %s78
      %p85 = scmp.eq.s32.totalorder %s21, 1
      %p86 = por %p84, %p85
      %p87 = scmp.ne.s32.totalorder %s78, %s79
      %p88 = scmp.eq.s32.totalorder %s21, 0
      %p89 = por %p87, %p88
      %p90 = scmp.ne.s32.totalorder %s78, %s79
      %p91 = scmp.eq.s32.totalorder %s22, 1
      %p92 = por %p90, %p91
      %p94 = scmp.ne.s32.totalorder %s79, %s93
      %p95 = scmp.eq.s32.totalorder %s22, 0
      %p96 = por %p94, %p95
      %s98 = sadd.s32 %s97, 1
      %p101 = scmp.eq.s32.totalorder %s16, 1
      %p102 = scmp.ne.s32.totalorder %s97, %s99
      %p103 = scmp.eq.s32.totalorder %s16, 0
      %p104 = por %p102, %p103
      %p105 = scmp.ne.s32.totalorder %s97, %s99
      %p106 = scmp.eq.s32.totalorder %s21, 1
      %p107 = por %p105, %p106
      %p108 = scmp.ne.s32.totalorder %s99, %s100
      %p109 = scmp.eq.s32.totalorder %s21, 0
      %p110 = por %p108, %p109
      %p111 = scmp.ne.s32.totalorder %s99, %s100
      %p112 = scmp.eq.s32.totalorder %s22, 1
      %p113 = por %p111, %p112
      %p115 = scmp.ne.s32.totalorder %s100, %s114
      %p116 = scmp.eq.s32.totalorder %s22, 0
      %p117 = por %p115, %p116
      %s119 = sadd.s32 %s118, 1
      %p122 = scmp.eq.s32.totalorder %s16, 1
      %p123 = scmp.ne.s32.totalorder %s118, %s120
      %p124 = scmp.eq.s32.totalorder %s16, 0
      %p125 = por %p123, %p124
      %p126 = scmp.ne.s32.totalorder %s118, %s120
      %p127 = scmp.eq.s32.totalorder %s21, 1
      %p128 = por %p126, %p127
      %p129 = scmp.ne.s32.totalorder %s120, %s121
      %p130 = scmp.eq.s32.totalorder %s21, 0
      %p131 = por %p129, %p130
      %p132 = scmp.ne.s32.totalorder %s120, %s121
      %p133 = scmp.eq.s32.totalorder %s22, 1
      %p134 = por %p132, %p133
      %p136 = scmp.ne.s32.totalorder %s121, %s135
      %p137 = scmp.eq.s32.totalorder %s22, 0
      %p138 = por %p136, %p137
      %s139 = ssub.s32 %s16, %s23
      %p140 = scmp.eq.s32.totalorder %s139, 0
      %s142 = sadd.s32 %s141, 1
      %s143 = scalar_select %p140, %s141, %s142
      %p146 = pneg %p140
      %p147 = scmp.eq.s32.totalorder %s16, 1
      %p148 = por %p146, %p147
      %p149 = scmp.ne.s32.totalorder %s141, %s144
      %p150 = scmp.eq.s32.totalorder %s16, 0
      %p151 = por %p149, %p150
      %p152 = scmp.ne.s32.totalorder %s141, %s144
      %p153 = scmp.eq.s32.totalorder %s21, 1
      %p154 = por %p152, %p153
      %p155 = scmp.ne.s32.totalorder %s144, %s145
      %p156 = scmp.eq.s32.totalorder %s21, 0
      %p157 = por %p155, %p156
      %p158 = scmp.ne.s32.totalorder %s144, %s145
      %p159 = scmp.eq.s32.totalorder %s22, 1
      %p160 = por %p158, %p159
      %p162 = scmp.ne.s32.totalorder %s145, %s161
      %p163 = scmp.eq.s32.totalorder %s22, 0
      %p164 = por %p162, %p163
      %s166 = sadd.s32 %s165, 1
      %p169 = scmp.eq.s32.totalorder %s16, 1
      %p170 = scmp.ne.s32.totalorder %s165, %s167
      %p171 = scmp.eq.s32.totalorder %s16, 0
      %p172 = por %p170, %p171
      %p173 = scmp.ne.s32.totalorder %s165, %s167
      %p174 = scmp.eq.s32.totalorder %s21, 1
      %p175 = por %p173, %p174
      %p176 = scmp.ne.s32.totalorder %s167, %s168
      %p177 = scmp.eq.s32.totalorder %s21, 0
      %p178 = por %p176, %p177
      %p179 = scmp.ne.s32.totalorder %s167, %s168
      %p180 = scmp.eq.s32.totalorder %s22, 1
      %p181 = por %p179, %p180
      %p183 = scmp.ne.s32.totalorder %s168, %s182
      %p184 = scmp.eq.s32.totalorder %s22, 0
      %p185 = por %p183, %p184
      %s187 = sadd.s32 %s186, 1
      %p190 = scmp.eq.s32.totalorder %s16, 1
      %p191 = scmp.ne.s32.totalorder %s186, %s188
      %p192 = scmp.eq.s32.totalorder %s16, 0
      %p193 = por %p191, %p192
      %p194 = scmp.ne.s32.totalorder %s186, %s188
      %p195 = scmp.eq.s32.totalorder %s21, 1
      %p196 = por %p194, %p195
      %p197 = scmp.ne.s32.totalorder %s188, %s189
      %p198 = scmp.eq.s32.totalorder %s21, 0
      %p199 = por %p197, %p198
      %p200 = scmp.ne.s32.totalorder %s188, %s189
      %p201 = scmp.eq.s32.totalorder %s22, 1
      %p202 = por %p200, %p201
      %p204 = scmp.ne.s32.totalorder %s189, %s203
      %p205 = scmp.eq.s32.totalorder %s22, 0
      %p206 = por %p204, %p205
      %p207 = scmp.le.s32.totalorder 1, %s16
      %p208 = scmp.lt.s32.totalorder %s16, 3
      %p209 = pnand %p207, %p208
      %p210 = pneg %p209
      // Predicated region
      $region9: #{lstm_agent_forward.12} parent=5 // pred_check
        _
      $region10: #{lstm_agent_forward.12} parent=5 // pred_check_branch
        %212 = sbr.rel (%p209) target = $region12
      $region11: #{lstm_agent_forward.12} parent=5 // pred_region
        %s213 = ssub.s32 %s16, 1
        // Predicated region
        $region13: #{lstm_agent_forward.12} parent=11 // pred_check
          %p214 = pneg %p89
        $region14: #{lstm_agent_forward.12} parent=11 // pred_check_branch
          %216 = sbr.rel (%p214) target = $region16
        $region15: #{lstm_agent_forward.12} parent=11 // pred_region
          _
        $region16: #{lstm_agent_forward.12} parent=11 // pred_fallthru
          _
        // Predicated region
        $region17: #{lstm_agent_forward.12} parent=11 // pred_check
          %p217 = pneg %p110
        $region18: #{lstm_agent_forward.12} parent=11 // pred_check_branch
          %219 = sbr.rel (%p217) target = $region20
        $region19: #{lstm_agent_forward.12} parent=11 // pred_region
          _
        $region20: #{lstm_agent_forward.12} parent=11 // pred_fallthru
          _
        // Predicated region
        $region21: #{lstm_agent_forward.12} parent=11 // pred_check
          %p220 = pneg %p131
        $region22: #{lstm_agent_forward.12} parent=11 // pred_check_branch
          %222 = sbr.rel (%p220) target = $region24
        $region23: #{lstm_agent_forward.12} parent=11 // pred_region
          _
        $region24: #{lstm_agent_forward.12} parent=11 // pred_fallthru
          _
      $region12: #{lstm_agent_forward.12} parent=5 // pred_fallthru
        _
      %p223 = scmp.lt.s32.totalorder %s16, 2
      // Predicated region
      $region25: #{lstm_agent_forward.12} parent=5 // pred_check
        %p224 = pneg %p223
      $region26: #{lstm_agent_forward.12} parent=5 // pred_check_branch
        %226 = sbr.rel (%p224) target = $region28
      $region27: #{lstm_agent_forward.12} parent=5 // pred_region
        // Predicated region
        $region29: #{lstm_agent_forward.12} parent=27 // pred_check
          %p227 = pneg %p36
        $region30: #{lstm_agent_forward.12} parent=27 // pred_check_branch
          %229 = sbr.rel (%p227) target = $region32
        $region31: #{lstm_agent_forward.12} parent=27 // pred_region
          %p230 = scmp.lt.s32.totalorder %s16, 1
          %s231 = scalar_select %p230, %s16, 1
          %s232 = smul.addr %s231, 4
          %s233 = smul.addr %s232, 2
          %s234 = scalar_lea.vmem %s0, %s233
        $region32: #{lstm_agent_forward.12} parent=27 // pred_fallthru
          _
        // Predicated region
        $region33: #{lstm_agent_forward.12} parent=27 // pred_check
          %p235 = pneg %p62
        $region34: #{lstm_agent_forward.12} parent=27 // pred_check_branch
          %237 = sbr.rel (%p235) target = $region36
        $region35: #{lstm_agent_forward.12} parent=27 // pred_region
          %p238 = scmp.lt.s32.totalorder %s16, 1
          %s239 = scalar_select %p238, %s16, 1
          %s240 = smul.addr %s239, 2
          %s241 = scalar_lea.vmem %s1, %s240
        $region36: #{lstm_agent_forward.12} parent=27 // pred_fallthru
          _
      $region28: #{lstm_agent_forward.12} parent=5 // pred_fallthru
        _
      %p242 = scmp.le.s32.totalorder 1, %s16
      %p243 = scmp.lt.s32.totalorder %s16, 3
      %p244 = pnand %p242, %p243
      %p245 = pneg %p244
      // Predicated region
      $region37: #{lstm_agent_forward.12} parent=5 // pred_check
        _
      $region38: #{lstm_agent_forward.12} parent=5 // pred_check_branch
        %247 = sbr.rel (%p244) target = $region40
      $region39: #{lstm_agent_forward.12} parent=5 // pred_region
        %s248 = ssub.s32 %s16, 1
        %p249 = scmp.lt.s32.totalorder %s21, 1
        %s250 = scalar_select %p249, %s21, 1
        %s251 = smul.addr %s250, 4
        %s252 = smul.addr %s251, 2
        %s253 = scalar_lea.vmem %s0, %s252
        %p254 = pneg %p42
        %p255 = pneg %p39
        %p256 = scmp.lt.s32.totalorder %s21, 1
        %s257 = scalar_select %p256, %s21, 1
        %s258 = smul.addr %s257, 2
        %s259 = scalar_lea.vmem %s1, %s258
        %p260 = pneg %p68
        %p261 = pneg %p65
        %p262 = pneg %p89
        %p263 = pneg %p86
        %p264 = pneg %p110
        %p265 = pneg %p107
        %p266 = pneg %p131
        %p267 = pneg %p128
        %p268 = pneg %p157
        %p269 = pneg %p154
        %p270 = scmp.lt.s32.totalorder %s21, 1
        %s271 = scalar_select %p270, %s21, 1
        %s272 = smul.addr %s271, 2
        %s273 = scalar_lea.vmem %s5, %s272
        %p274 = pneg %p178
        %p275 = pneg %p175
        %p276 = pneg %p199
        %p277 = pneg %p196
        %p278 = scmp.lt.s32.totalorder %s21, 1
        %s279 = scalar_select %p278, %s21, 1
        %s280 = smul.addr %s279, 4
        %s281 = smul.addr %s280, 2
        %s282 = scalar_lea.vmem %s0, %s281
        %p283 = scmp.lt.s32.totalorder %s21, 1
        %s284 = scalar_select %p283, %s21, 1
        %s285 = smul.addr %s284, 2
        %s286 = scalar_lea.vmem %s1, %s285
        %p287 = scmp.lt.s32.totalorder %s21, 1
        %s288 = scalar_select %p287, %s21, 1
        %s289 = smul.addr %s288, 2
        %s290 = scalar_lea.vmem %s5, %s289
        %p292 = scmp.eq.s32.totalorder %s21, 0
        // Predicated region
        $region41: #{lstm_agent_forward.12} parent=39 // pred_check
          %p293 = pneg %p292
        $region42: #{lstm_agent_forward.12} parent=39 // pred_check_branch
          %295 = sbr.rel (%p293) target = $region44
        $region43: #{lstm_agent_forward.12} parent=39 // pred_region
          %v296 = vld [vmem:[%s2] sm:$0x3]
          %297 = vst [vmem:[#allocation2] sm:$0x3] %v296
          %v298 = vld [vmem:[%s3] sm:$0x3]
          %299 = vst [vmem:[#allocation3] sm:$0x3] %v298
        $region44: #{lstm_agent_forward.12} parent=39 // pred_fallthru
          _
        %v300 = vld [vmem:[%s286] sm:$0x3]
        %v301 = vld [vmem:[#allocation2] sm:$0x3]
        %303 = vset.pattern.permute.xlu0 0
        %304 = vperm.xlu0 %303, %v300
        %v305 = vpop.permute.xlu0 %304
        %v307 = vmul.f32 %v305, %v301
        %v308 = vld [vmem:[#allocation3] sm:$0x3]
        %v309 = vmul.f32 %v305, %v308
        %v310 = vld [vmem:[%s282] sm:$0xff]
        %v311 = vpack.c.bf16 %v307, %v307
        %v312 = vld [vmem:[%s4] sm:$0xff]
        %v313 = vld [vmem:[%s4 + $0x8] sm:$0xff]
        %v314 = vld [vmem:[%s4 + $0x10] sm:$0xff]
        %v315 = vld [vmem:[%s4 + $0x18] sm:$0xff]
        %v316 = vld [vmem:[%s4 + $0x20] sm:$0xff]
        %v317 = vld [vmem:[%s4 + $0x28] sm:$0xff]
        %v318 = vld [vmem:[%s4 + $0x30] sm:$0xff]
        %v319 = vld [vmem:[%s4 + $0x38] sm:$0xff]
        %v320 = vld [vmem:[%s4 + $0x40] sm:$0xff]
        %v321 = vld [vmem:[%s4 + $0x48] sm:$0xff]
        %v322 = vld [vmem:[%s4 + $0x50] sm:$0xff]
        %v323 = vld [vmem:[%s4 + $0x58] sm:$0xff]
        %v324 = vld [vmem:[%s4 + $0x60] sm:$0xff]
        %v325 = vld [vmem:[%s4 + $0x68] sm:$0xff]
        %v326 = vld [vmem:[%s4 + $0x70] sm:$0xff]
        %v327 = vld [vmem:[%s4 + $0x78] sm:$0xff]
        %v328 = vld [vmem:[%s4 + $0x80] sm:$0xff]
        %v329 = vld [vmem:[%s4 + $0x88] sm:$0xff]
        %v330 = vld [vmem:[%s4 + $0x90] sm:$0xff]
        %v331 = vld [vmem:[%s4 + $0x98] sm:$0xff]
        %v332 = vld [vmem:[%s4 + $0xa0] sm:$0xff]
        %v333 = vld [vmem:[%s4 + $0xa8] sm:$0xff]
        %v334 = vld [vmem:[%s4 + $0xb0] sm:$0xff]
        %v335 = vld [vmem:[%s4 + $0xb8] sm:$0xff]
        %v336 = vld [vmem:[%s4 + $0xc0] sm:$0xff]
        %v337 = vld [vmem:[%s4 + $0xc8] sm:$0xff]
        %v338 = vld [vmem:[%s4 + $0xd0] sm:$0xff]
        %v339 = vld [vmem:[%s4 + $0xd8] sm:$0xff]
        %v340 = vld [vmem:[%s4 + $0xe0] sm:$0xff]
        %v341 = vld [vmem:[%s4 + $0xe8] sm:$0xff]
        %v342 = vld [vmem:[%s4 + $0xf0] sm:$0xff]
        %v343 = vld [vmem:[%s4 + $0xf8] sm:$0xff]
        %v376 = vunpack.c.l.b16 %v312
        %v377 = vunpack.c.h.b16 %v312
        %v378 = vunpack.c.l.b16 %v313
        %v379 = vunpack.c.h.b16 %v313
        %v380 = vunpack.c.l.b16 %v314
        %v381 = vunpack.c.h.b16 %v314
        %v382 = vunpack.c.l.b16 %v315
        %v383 = vunpack.c.h.b16 %v315
        %v384 = vunpack.c.l.b16 %v316
        %v385 = vunpack.c.h.b16 %v316
        %v386 = vunpack.c.l.b16 %v317
        %v387 = vunpack.c.h.b16 %v317
        %v388 = vunpack.c.l.b16 %v318
        %v389 = vunpack.c.h.b16 %v318
        %v390 = vunpack.c.l.b16 %v319
        %v391 = vunpack.c.h.b16 %v319
        %v392 = vunpack.c.l.b16 %v320
        %v393 = vunpack.c.h.b16 %v320
        %v394 = vunpack.c.l.b16 %v321
        %v395 = vunpack.c.h.b16 %v321
        %v396 = vunpack.c.l.b16 %v322
        %v397 = vunpack.c.h.b16 %v322
        %v398 = vunpack.c.l.b16 %v323
        %v399 = vunpack.c.h.b16 %v323
        %v400 = vunpack.c.l.b16 %v324
        %v401 = vunpack.c.h.b16 %v324
        %v402 = vunpack.c.l.b16 %v325
        %v403 = vunpack.c.h.b16 %v325
        %v404 = vunpack.c.l.b16 %v326
        %v405 = vunpack.c.h.b16 %v326
        %v406 = vunpack.c.l.b16 %v327
        %v407 = vunpack.c.h.b16 %v327
        %v408 = vunpack.c.l.b16 %v328
        %v409 = vunpack.c.h.b16 %v328
        %v410 = vunpack.c.l.b16 %v329
        %v411 = vunpack.c.h.b16 %v329
        %v412 = vunpack.c.l.b16 %v330
        %v413 = vunpack.c.h.b16 %v330
        %v414 = vunpack.c.l.b16 %v331
        %v415 = vunpack.c.h.b16 %v331
        %v416 = vunpack.c.l.b16 %v332
        %v417 = vunpack.c.h.b16 %v332
        %v418 = vunpack.c.l.b16 %v333
        %v419 = vunpack.c.h.b16 %v333
        %v420 = vunpack.c.l.b16 %v334
        %v421 = vunpack.c.h.b16 %v334
        %v422 = vunpack.c.l.b16 %v335
        %v423 = vunpack.c.h.b16 %v335
        %v424 = vunpack.c.l.b16 %v336
        %v425 = vunpack.c.h.b16 %v336
        %v426 = vunpack.c.l.b16 %v337
        %v427 = vunpack.c.h.b16 %v337
        %v428 = vunpack.c.l.b16 %v338
        %v429 = vunpack.c.h.b16 %v338
        %v430 = vunpack.c.l.b16 %v339
        %v431 = vunpack.c.h.b16 %v339
        %v432 = vunpack.c.l.b16 %v340
        %v433 = vunpack.c.h.b16 %v340
        %v434 = vunpack.c.l.b16 %v341
        %v435 = vunpack.c.h.b16 %v341
        %v436 = vunpack.c.l.b16 %v342
        %v437 = vunpack.c.h.b16 %v342
        %v438 = vunpack.c.l.b16 %v343
        %v439 = vunpack.c.h.b16 %v343
        %v440 = vpack.c.b16 %v380, %v376
        %v441 = vpack.c.b16 %v381, %v377
        %v442 = vpack.c.b16 %v382, %v378
        %v443 = vpack.c.b16 %v383, %v379
        %v444 = vpack.c.b16 %v388, %v384
        %v445 = vpack.c.b16 %v389, %v385
        %v446 = vpack.c.b16 %v390, %v386
        %v447 = vpack.c.b16 %v391, %v387
        %v448 = vpack.c.b16 %v396, %v392
        %v449 = vpack.c.b16 %v397, %v393
        %v450 = vpack.c.b16 %v398, %v394
        %v451 = vpack.c.b16 %v399, %v395
        %v452 = vpack.c.b16 %v404, %v400
        %v453 = vpack.c.b16 %v405, %v401
        %v454 = vpack.c.b16 %v406, %v402
        %v455 = vpack.c.b16 %v407, %v403
        %v456 = vpack.c.b16 %v412, %v408
        %v457 = vpack.c.b16 %v413, %v409
        %v458 = vpack.c.b16 %v414, %v410
        %v459 = vpack.c.b16 %v415, %v411
        %v460 = vpack.c.b16 %v420, %v416
        %v461 = vpack.c.b16 %v421, %v417
        %v462 = vpack.c.b16 %v422, %v418
        %v463 = vpack.c.b16 %v423, %v419
        %v464 = vpack.c.b16 %v428, %v424
        %v465 = vpack.c.b16 %v429, %v425
        %v466 = vpack.c.b16 %v430, %v426
        %v467 = vpack.c.b16 %v431, %v427
        %v468 = vpack.c.b16 %v436, %v432
        %v469 = vpack.c.b16 %v437, %v433
        %v470 = vpack.c.b16 %v438, %v434
        %v471 = vpack.c.b16 %v439, %v435
        %504 = vmatprep.subr.bf16.mxu0 %v441
        %505 = vmatpush1.bf16.msra.mxu0 %v440
        %506 = vmatprep.subr.bf16.mxu0 %v445
        %507 = vmatpush1.bf16.msra.mxu0 %v444
        %508 = vmatprep.subr.bf16.mxu0 %v449
        %509 = vmatpush1.bf16.msra.mxu0 %v448
        %510 = vmatprep.subr.bf16.mxu0 %v453
        %511 = vmatpush1.bf16.msra.mxu0 %v452
        %512 = vmatprep.subr.bf16.mxu0 %v457
        %513 = vmatpush1.bf16.msra.mxu0 %v456
        %514 = vmatprep.subr.bf16.mxu0 %v461
        %515 = vmatpush1.bf16.msra.mxu0 %v460
        %516 = vmatprep.subr.bf16.mxu0 %v465
        %517 = vmatpush1.bf16.msra.mxu0 %v464
        %518 = vmatprep.subr.bf16.mxu0 %v469
        %519 = vmatpush1.bf16.msra.mxu0 %v468
        %520 = vmatprep.subr.bf16.mxu0 0
        %521 = vmatpush1.bf16.msra.mxu0 0
        %522 = vmatprep.subr.bf16.mxu0 0
        %523 = vmatpush1.bf16.msra.mxu0 0
        %524 = vmatprep.subr.bf16.mxu0 0
        %525 = vmatpush1.bf16.msra.mxu0 0
        %526 = vmatprep.subr.bf16.mxu0 0
        %527 = vmatpush1.bf16.msra.mxu0 0
        %528 = vmatprep.subr.bf16.mxu0 0
        %529 = vmatpush1.bf16.msra.mxu0 0
        %530 = vmatprep.subr.bf16.mxu0 0
        %531 = vmatpush1.bf16.msra.mxu0 0
        %532 = vmatprep.subr.bf16.mxu0 0
        %533 = vmatpush1.bf16.msra.mxu0 0
        %534 = vmatprep.subr.bf16.mxu0 0
        %535 = vmatpush1.bf16.msra.mxu0 0
        %536 = vmatprep.mubr.bf16.mxu0 0
        %537 = vmatmul.mubr.bf16.gmra.mrb[0].mxu0 %v311
        %v538 = vpop.f32.mrb[0].mxu0
        %v539 = vadd.f32 0.0, %v538
        %v540 = vpop.f32.mrb[0].mxu0
        %v541 = vadd.f32 0.0, %v540
        %v542 = vpop.f32.mrb[0].mxu0
        %v543 = vpop.f32.mrb[0].mxu0
        %544 = vdwg.mxu0
        %545 = vmatprep.subr.bf16.mxu0 %v443
        %546 = vmatpush1.bf16.msra.mxu0 %v442
        %547 = vmatprep.subr.bf16.mxu0 %v447
        %548 = vmatpush1.bf16.msra.mxu0 %v446
        %549 = vmatprep.subr.bf16.mxu0 %v451
        %550 = vmatpush1.bf16.msra.mxu0 %v450
        %551 = vmatprep.subr.bf16.mxu0 %v455
        %552 = vmatpush1.bf16.msra.mxu0 %v454
        %553 = vmatprep.subr.bf16.mxu0 %v459
        %554 = vmatpush1.bf16.msra.mxu0 %v458
        %555 = vmatprep.subr.bf16.mxu0 %v463
        %556 = vmatpush1.bf16.msra.mxu0 %v462
        %557 = vmatprep.subr.bf16.mxu0 %v467
        %558 = vmatpush1.bf16.msra.mxu0 %v466
        %559 = vmatprep.subr.bf16.mxu0 %v471
        %560 = vmatpush1.bf16.msra.mxu0 %v470
        %561 = vmatprep.subr.bf16.mxu0 0
        %562 = vmatpush1.bf16.msra.mxu0 0
        %563 = vmatprep.subr.bf16.mxu0 0
        %564 = vmatpush1.bf16.msra.mxu0 0
        %565 = vmatprep.subr.bf16.mxu0 0
        %566 = vmatpush1.bf16.msra.mxu0 0
        %567 = vmatprep.subr.bf16.mxu0 0
        %568 = vmatpush1.bf16.msra.mxu0 0
        %569 = vmatprep.subr.bf16.mxu0 0
        %570 = vmatpush1.bf16.msra.mxu0 0
        %571 = vmatprep.subr.bf16.mxu0 0
        %572 = vmatpush1.bf16.msra.mxu0 0
        %573 = vmatprep.subr.bf16.mxu0 0
        %574 = vmatpush1.bf16.msra.mxu0 0
        %575 = vmatprep.subr.bf16.mxu0 0
        %576 = vmatpush1.bf16.msra.mxu0 0
        %577 = vmatprep.mubr.bf16.mxu0 0
        %578 = vmatmul.mubr.bf16.gmra.mrb[0].mxu0 %v311
        %v579 = vpop.f32.mrb[0].mxu0
        %v580 = vadd.f32 0.0, %v579
        %v581 = vpop.f32.mrb[0].mxu0
        %v582 = vadd.f32 0.0, %v581
        %v583 = vpop.f32.mrb[0].mxu0
        %v584 = vpop.f32.mrb[0].mxu0
        %585 = vdwg.mxu0
        %v590 = vcombine.low %v539, %v541
        %v591 = vcombine.low %v580, %v582
        %v593 = vunpack.c.l.s4 1983009808
        %v594 = vunpack.c.0.s8 %v593
        %v595 = vlaneseq
        %v596 = vshrl.u32 %v595, 7
        %v597 = vsub.s32 %v594, %v596
        %v598 = vrot.slane %v590, %v597
        %v600 = vunpack.c.l.s4 1983009808
        %v601 = vunpack.c.0.s8 %v600
        %v602 = vlaneseq
        %v603 = vshrl.u32 %v602, 7
        %v604 = vsub.s32 %v601, %v603
        %v605 = vrot.slane %v591, %v604
        %v606 = vcombine.low %v598, %v605
        %v608 = vadd.f32 %v310, %v606
        %v609 = vxor.u32 %v608, 2147483648
        %v610 = vmul.f32 %v609, 1.442695
        %v611 = vpow.pop %v610
        %v612 = vadd.f32 %v611, 1.0
        %v613 = vrcp.pop %v612
        %v614 = vmul.f32 1.0, %v613
        %v616 = vrot.slane %v608, 2
        %v618 = vxor.u32 %v616, 2147483648
        %v619 = vmul.f32 %v618, 1.442695
        %v620 = vpow.pop %v619
        %v621 = vadd.f32 %v620, 1.0
        %v622 = vrcp.pop %v621
        %v623 = vmul.f32 1.0, %v622
        %v624 = vrot.slane %v608, 4
        %v626 = vtanh.pop %v624
        %v627 = vrot.slane %v608, 6
        %v629 = vxor.u32 %v627, 2147483648
        %v630 = vmul.f32 %v629, 1.442695
        %v631 = vpow.pop %v630
        %v632 = vadd.f32 %v631, 1.0
        %v633 = vrcp.pop %v632
        %v634 = vmul.f32 1.0, %v633
        %v635 = vmul.f32 %v623, %v309
        %v636 = vmul.f32 %v614, %v626
        %v637 = vadd.f32 %v635, %v636
        %v638 = vtanh.pop %v637
        %v639 = vmul.f32 %v634, %v638
        %640 = vst [vmem:[#allocation2] sm:$0x3] %v639
        %641 = vst [vmem:[#allocation3] sm:$0x3] %v637
        %642 = vst [vmem:[%s290] sm:$0x3] %v639
        %p643 = scmp.eq.s32.totalorder %s21, 1
        // Predicated region
        $region45: #{lstm_agent_forward.12} parent=39 // pred_check
          %p644 = pneg %p643
        $region46: #{lstm_agent_forward.12} parent=39 // pred_check_branch
          %646 = sbr.rel (%p644) target = $region48
        $region47: #{lstm_agent_forward.12} parent=39 // pred_region
          %647 = vst [vmem:[#allocation4] sm:$0x3] %v639
          %648 = vst [vmem:[#allocation6] sm:$0x3] %v637
        $region48: #{lstm_agent_forward.12} parent=39 // pred_fallthru
          _
        %p649 = scmp.lt.s32.totalorder %s21, 1
        %s650 = scalar_select %p649, %s21, 1
        %s651 = smul.addr %s650, 2
        %s652 = scalar_lea.vmem %s5, %s651
        // Predicated region
        $region49: #{lstm_agent_forward.12} parent=39 // pred_check
          %p653 = pneg %p154
        $region50: #{lstm_agent_forward.12} parent=39 // pred_check_branch
          %655 = sbr.rel (%p653) target = $region52
        $region51: #{lstm_agent_forward.12} parent=39 // pred_region
          _
        $region52: #{lstm_agent_forward.12} parent=39 // pred_fallthru
          _
        // Predicated region
        $region53: #{lstm_agent_forward.12} parent=39 // pred_check
          %p656 = pneg %p175
        $region54: #{lstm_agent_forward.12} parent=39 // pred_check_branch
          %658 = sbr.rel (%p656) target = $region56
        $region55: #{lstm_agent_forward.12} parent=39 // pred_region
          %s660 = ssub.s32 32, 32
          %661 = vsyncadd [#allocation5], %s660
          %s663 = sshll.u32 [#allocation4], 4
          %s664 = int_to_ptr.vmem [resolvable:$true] %s663
          %666 = dma.vmem_to_hbm [thread:$0]  %s664, 32, %s6, [#allocation5]
        $region56: #{lstm_agent_forward.12} parent=39 // pred_fallthru
          _
        // Predicated region
        $region57: #{lstm_agent_forward.12} parent=39 // pred_check
          %p667 = pneg %p196
        $region58: #{lstm_agent_forward.12} parent=39 // pred_check_branch
          %669 = sbr.rel (%p667) target = $region60
        $region59: #{lstm_agent_forward.12} parent=39 // pred_region
          %s671 = ssub.s32 32, 32
          %672 = vsyncadd [#allocation7], %s671
          %s674 = sshll.u32 [#allocation6], 4
          %s675 = int_to_ptr.vmem [resolvable:$true] %s674
          %677 = dma.vmem_to_hbm [thread:$0]  %s675, 32, %s7, [#allocation7]
        $region60: #{lstm_agent_forward.12} parent=39 // pred_fallthru
          _
        // Predicated region
        $region61: #{lstm_agent_forward.12} parent=39 // pred_check
          %p678 = pneg %p175
        $region62: #{lstm_agent_forward.12} parent=39 // pred_check_branch
          %680 = sbr.rel (%p678) target = $region64
        $region63: #{lstm_agent_forward.12} parent=39 // pred_region
          %681 = dma.done [#allocation5], 32
        $region64: #{lstm_agent_forward.12} parent=39 // pred_fallthru
          _
        // Predicated region
        $region65: #{lstm_agent_forward.12} parent=39 // pred_check
          %p682 = pneg %p196
        $region66: #{lstm_agent_forward.12} parent=39 // pred_check_branch
          %684 = sbr.rel (%p682) target = $region68
        $region67: #{lstm_agent_forward.12} parent=39 // pred_region
          %685 = dma.done [#allocation7], 32
        $region68: #{lstm_agent_forward.12} parent=39 // pred_fallthru
          _
      $region40: #{lstm_agent_forward.12} parent=5 // pred_fallthru
        _
      %p686 = scmp.le.s32.totalorder 2, %s16
      // Predicated region
      $region69: #{lstm_agent_forward.12} parent=5 // pred_check
        %p687 = pneg %p686
      $region70: #{lstm_agent_forward.12} parent=5 // pred_check_branch
        %689 = sbr.rel (%p687) target = $region72
      $region71: #{lstm_agent_forward.12} parent=5 // pred_region
        %s690 = ssub.s32 %s16, 2
        // Predicated region
        $region73: #{lstm_agent_forward.12} parent=71 // pred_check
          %p691 = pneg %p160
        $region74: #{lstm_agent_forward.12} parent=71 // pred_check_branch
          %693 = sbr.rel (%p691) target = $region76
        $region75: #{lstm_agent_forward.12} parent=71 // pred_region
          %p694 = scmp.lt.s32.totalorder %s22, 1
          %s695 = scalar_select %p694, %s22, 1
          %s696 = smul.addr %s695, 2
          %s697 = scalar_lea.vmem %s5, %s696
        $region76: #{lstm_agent_forward.12} parent=71 // pred_fallthru
          _
      $region72: #{lstm_agent_forward.12} parent=5 // pred_fallthru
        _
    $region6: #{lstm_agent_forward.12} parent=1 // loop_footer
      %s20 = sadd.s32 1, %s16
    $region7: #{lstm_agent_forward.12} parent=1 // loop_footer_branch
      %15 = sbr.rel target = $region3
    $region8: #{lstm_agent_forward.12} parent=1 // loop_exit
      _
    %698 = vsyncpa [#allocation5], 1
    %s699 = scalar_lea.sflag [#allocation5], 1
    %700 = vsyncpa %s699, 1
    %701 = vsyncpa [#allocation7], 1

// kernel: lstm_agent_forward.13
$region0: #{lstm_agent_forward.13}
  #allocation0 [shape = 'u32[]', space=smem, size = 0x4, offset = 0x4, fixed_abs, tag = 'smem constant byte address 0x4 - core index']
  #allocation1 [shape = 'u32[144,128]{1,0:T(1,128)}', space=vmem, size = 0x12000, scoped, tag = 'internal scratch']
  %s0 = inlined_call_operand.vmem [shape: bf16[4,128], index: 0, kind: input, shape index: {}]
  %s1 = inlined_call_operand.vmem [shape: bf16[128,128], index: 1, kind: input, shape index: {}]
  %s2 = inlined_call_operand.vmem [shape: f32[1,128], index: 2, kind: input, shape index: {}]
  %s3 = inlined_call_operand.vmem [shape: bf16[128,128], index: 3, kind: input, shape index: {}]
  %s4 = inlined_call_operand.vmem [shape: f32[1,128], index: 4, kind: input, shape index: {}]
  %s5 = inlined_call_operand.vmem [shape: f32[4,128], index: 5, kind: output, shape index: {}]
  %s6 = sld [smem:[#allocation0]]
  $region30: #{lstm_agent_forward.13} parent=0
    _
  %s8 = ssub.s32 1, %s6
  %s9 = scalar_select 0, %s8, %s6
  // Predicated region
  $region2: #{lstm_agent_forward.13} parent=0 // pred_check
    _
  $region3: #{lstm_agent_forward.13} parent=0 // pred_check_branch
    %11 = sbr.rel (0) target = $region5
  $region4: #{lstm_agent_forward.13} parent=0 // pred_region
    _
  $region5: #{lstm_agent_forward.13} parent=0 // pred_fallthru
    _
  // Predicated region
  $region6: #{lstm_agent_forward.13} parent=0 // pred_check
    _
  $region7: #{lstm_agent_forward.13} parent=0 // pred_check_branch
    %13 = sbr.rel (0) target = $region9
  $region8: #{lstm_agent_forward.13} parent=0 // pred_region
    _
  $region9: #{lstm_agent_forward.13} parent=0 // pred_fallthru
    _
  // Predicated region
  $region10: #{lstm_agent_forward.13} parent=0 // pred_check
    _
  $region11: #{lstm_agent_forward.13} parent=0 // pred_check_branch
    %15 = sbr.rel (0) target = $region13
  $region12: #{lstm_agent_forward.13} parent=0 // pred_region
    _
  $region13: #{lstm_agent_forward.13} parent=0 // pred_fallthru
    _
  // Predicated region
  $region14: #{lstm_agent_forward.13} parent=0 // pred_check
    _
  $region15: #{lstm_agent_forward.13} parent=0 // pred_check_branch
    %17 = sbr.rel (0) target = $region17
  $region16: #{lstm_agent_forward.13} parent=0 // pred_region
    _
  $region17: #{lstm_agent_forward.13} parent=0 // pred_fallthru
    _
  // Predicated region
  $region18: #{lstm_agent_forward.13} parent=0 // pred_check
    _
  $region19: #{lstm_agent_forward.13} parent=0 // pred_check_branch
    %19 = sbr.rel (0) target = $region21
  $region20: #{lstm_agent_forward.13} parent=0 // pred_region
    _
  $region21: #{lstm_agent_forward.13} parent=0 // pred_fallthru
    _
  %v21 = vld [vmem:[%s0] sm:$0x3]
  %v22 = vld [vmem:[%s1] sm:$0xf]
  %v23 = vld [vmem:[%s1 + $0x4] sm:$0xf]
  %v24 = vld [vmem:[%s1 + $0x8] sm:$0xf]
  %v25 = vld [vmem:[%s1 + $0xc] sm:$0xf]
  %v26 = vld [vmem:[%s1 + $0x10] sm:$0xf]
  %v27 = vld [vmem:[%s1 + $0x14] sm:$0xf]
  %v28 = vld [vmem:[%s1 + $0x18] sm:$0xf]
  %v29 = vld [vmem:[%s1 + $0x1c] sm:$0xf]
  %v30 = vld [vmem:[%s1 + $0x20] sm:$0xf]
  %v31 = vld [vmem:[%s1 + $0x24] sm:$0xf]
  %v32 = vld [vmem:[%s1 + $0x28] sm:$0xf]
  %v33 = vld [vmem:[%s1 + $0x2c] sm:$0xf]
  %v34 = vld [vmem:[%s1 + $0x30] sm:$0xf]
  %v35 = vld [vmem:[%s1 + $0x34] sm:$0xf]
  %v36 = vld [vmem:[%s1 + $0x38] sm:$0xf]
  %v37 = vld [vmem:[%s1 + $0x3c] sm:$0xf]
  %v38 = vld [vmem:[%s2] sm:$0x1]
  %v40 = vlaneseq
  %v41 = vshrl.u32 %v40, 7
  %v42 = vsub.s32 0, %v41
  %v43 = vrot.slane %v38, %v42
  %v61 = vunpack.c.l.b16 %v22
  %v62 = vunpack.c.l.b16 %v23
  %v63 = vunpack.c.l.b16 %v24
  %v64 = vunpack.c.l.b16 %v25
  %v65 = vunpack.c.l.b16 %v26
  %v66 = vunpack.c.l.b16 %v27
  %v67 = vunpack.c.l.b16 %v28
  %v68 = vunpack.c.l.b16 %v29
  %v69 = vunpack.c.l.b16 %v30
  %v70 = vunpack.c.l.b16 %v31
  %v71 = vunpack.c.l.b16 %v32
  %v72 = vunpack.c.l.b16 %v33
  %v73 = vunpack.c.l.b16 %v34
  %v74 = vunpack.c.l.b16 %v35
  %v75 = vunpack.c.l.b16 %v36
  %v76 = vunpack.c.l.b16 %v37
  %v77 = vpack.c.b16 %v62, %v61
  %v78 = vpack.c.b16 %v64, %v63
  %v79 = vpack.c.b16 %v66, %v65
  %v80 = vpack.c.b16 %v68, %v67
  %v81 = vpack.c.b16 %v70, %v69
  %v82 = vpack.c.b16 %v72, %v71
  %v83 = vpack.c.b16 %v74, %v73
  %v84 = vpack.c.b16 %v76, %v75
  %93 = vmatprep.subr.bf16.mxu0 0
  %94 = vmatpush1.bf16.msra.mxu0 %v77
  %95 = vmatprep.subr.bf16.mxu0 0
  %96 = vmatpush1.bf16.msra.mxu0 %v78
  %97 = vmatprep.subr.bf16.mxu0 0
  %98 = vmatpush1.bf16.msra.mxu0 %v79
  %99 = vmatprep.subr.bf16.mxu0 0
  %100 = vmatpush1.bf16.msra.mxu0 %v80
  %101 = vmatprep.subr.bf16.mxu0 0
  %102 = vmatpush1.bf16.msra.mxu0 %v81
  %103 = vmatprep.subr.bf16.mxu0 0
  %104 = vmatpush1.bf16.msra.mxu0 %v82
  %105 = vmatprep.subr.bf16.mxu0 0
  %106 = vmatpush1.bf16.msra.mxu0 %v83
  %107 = vmatprep.subr.bf16.mxu0 0
  %108 = vmatpush1.bf16.msra.mxu0 %v84
  %109 = vmatprep.subr.bf16.mxu0 0
  %110 = vmatpush1.bf16.msra.mxu0 0
  %111 = vmatprep.subr.bf16.mxu0 0
  %112 = vmatpush1.bf16.msra.mxu0 0
  %113 = vmatprep.subr.bf16.mxu0 0
  %114 = vmatpush1.bf16.msra.mxu0 0
  %115 = vmatprep.subr.bf16.mxu0 0
  %116 = vmatpush1.bf16.msra.mxu0 0
  %117 = vmatprep.subr.bf16.mxu0 0
  %118 = vmatpush1.bf16.msra.mxu0 0
  %119 = vmatprep.subr.bf16.mxu0 0
  %120 = vmatpush1.bf16.msra.mxu0 0
  %121 = vmatprep.subr.bf16.mxu0 0
  %122 = vmatpush1.bf16.msra.mxu0 0
  %123 = vmatprep.subr.bf16.mxu0 0
  %124 = vmatpush1.bf16.msra.mxu0 0
  %125 = vmatprep.mubr.bf16.mxu0 0
  %126 = vmatmul.mubr.bf16.gmra.mrb[0].mxu0 %v21
  %v127 = vpop.f32.mrb[0].mxu0
  %v128 = vadd.f32 %v43, %v127
  %v129 = vpop.f32.mrb[0].mxu0
  %v130 = vpop.f32.mrb[0].mxu0
  %v131 = vpop.f32.mrb[0].mxu0
  %132 = vdwg.mxu0
  %v133 = vtanh.pop %v128
  %v134 = vpack.c.bf16 %v133, %v133
  %v135 = vld [vmem:[%s3] sm:$0xf]
  %v136 = vld [vmem:[%s3 + $0x4] sm:$0xf]
  %v137 = vld [vmem:[%s3 + $0x8] sm:$0xf]
  %v138 = vld [vmem:[%s3 + $0xc] sm:$0xf]
  %v139 = vld [vmem:[%s3 + $0x10] sm:$0xf]
  %v140 = vld [vmem:[%s3 + $0x14] sm:$0xf]
  %v141 = vld [vmem:[%s3 + $0x18] sm:$0xf]
  %v142 = vld [vmem:[%s3 + $0x1c] sm:$0xf]
  %v143 = vld [vmem:[%s3 + $0x20] sm:$0xf]
  %v144 = vld [vmem:[%s3 + $0x24] sm:$0xf]
  %v145 = vld [vmem:[%s3 + $0x28] sm:$0xf]
  %v146 = vld [vmem:[%s3 + $0x2c] sm:$0xf]
  %v147 = vld [vmem:[%s3 + $0x30] sm:$0xf]
  %v148 = vld [vmem:[%s3 + $0x34] sm:$0xf]
  %v149 = vld [vmem:[%s3 + $0x38] sm:$0xf]
  %v150 = vld [vmem:[%s3 + $0x3c] sm:$0xf]
  %v151 = vld [vmem:[%s4] sm:$0x1]
  %v153 = vlaneseq
  %v154 = vshrl.u32 %v153, 7
  %v155 = vsub.s32 0, %v154
  %v156 = vrot.slane %v151, %v155
  %v174 = vunpack.c.l.b16 %v135
  %v175 = vunpack.c.l.b16 %v136
  %v176 = vunpack.c.l.b16 %v137
  %v177 = vunpack.c.l.b16 %v138
  %v178 = vunpack.c.l.b16 %v139
  %v179 = vunpack.c.l.b16 %v140
  %v180 = vunpack.c.l.b16 %v141
  %v181 = vunpack.c.l.b16 %v142
  %v182 = vunpack.c.l.b16 %v143
  %v183 = vunpack.c.l.b16 %v144
  %v184 = vunpack.c.l.b16 %v145
  %v185 = vunpack.c.l.b16 %v146
  %v186 = vunpack.c.l.b16 %v147
  %v187 = vunpack.c.l.b16 %v148
  %v188 = vunpack.c.l.b16 %v149
  %v189 = vunpack.c.l.b16 %v150
  %v190 = vpack.c.b16 %v175, %v174
  %v191 = vpack.c.b16 %v177, %v176
  %v192 = vpack.c.b16 %v179, %v178
  %v193 = vpack.c.b16 %v181, %v180
  %v194 = vpack.c.b16 %v183, %v182
  %v195 = vpack.c.b16 %v185, %v184
  %v196 = vpack.c.b16 %v187, %v186
  %v197 = vpack.c.b16 %v189, %v188
  %206 = vmatprep.subr.bf16.mxu0 0
  %207 = vmatpush1.bf16.msra.mxu0 %v190
  %208 = vmatprep.subr.bf16.mxu0 0
  %209 = vmatpush1.bf16.msra.mxu0 %v191
  %210 = vmatprep.subr.bf16.mxu0 0
  %211 = vmatpush1.bf16.msra.mxu0 %v192
  %212 = vmatprep.subr.bf16.mxu0 0
  %213 = vmatpush1.bf16.msra.mxu0 %v193
  %214 = vmatprep.subr.bf16.mxu0 0
  %215 = vmatpush1.bf16.msra.mxu0 %v194
  %216 = vmatprep.subr.bf16.mxu0 0
  %217 = vmatpush1.bf16.msra.mxu0 %v195
  %218 = vmatprep.subr.bf16.mxu0 0
  %219 = vmatpush1.bf16.msra.mxu0 %v196
  %220 = vmatprep.subr.bf16.mxu0 0
  %221 = vmatpush1.bf16.msra.mxu0 %v197
  %222 = vmatprep.subr.bf16.mxu0 0
  %223 = vmatpush1.bf16.msra.mxu0 0
  %224 = vmatprep.subr.bf16.mxu0 0
  %225 = vmatpush1.bf16.msra.mxu0 0
  %226 = vmatprep.subr.bf16.mxu0 0
  %227 = vmatpush1.bf16.msra.mxu0 0
  %228 = vmatprep.subr.bf16.mxu0 0
  %229 = vmatpush1.bf16.msra.mxu0 0
  %230 = vmatprep.subr.bf16.mxu0 0
  %231 = vmatpush1.bf16.msra.mxu0 0
  %232 = vmatprep.subr.bf16.mxu0 0
  %233 = vmatpush1.bf16.msra.mxu0 0
  %234 = vmatprep.subr.bf16.mxu0 0
  %235 = vmatpush1.bf16.msra.mxu0 0
  %236 = vmatprep.subr.bf16.mxu0 0
  %237 = vmatpush1.bf16.msra.mxu0 0
  %238 = vmatprep.mubr.bf16.mxu0 0
  %239 = vmatmul.mubr.bf16.gmra.mrb[0].mxu0 %v134
  %v240 = vpop.f32.mrb[0].mxu0
  %v241 = vadd.f32 %v156, %v240
  %v242 = vpop.f32.mrb[0].mxu0
  %v243 = vpop.f32.mrb[0].mxu0
  %v244 = vpop.f32.mrb[0].mxu0
  %245 = vdwg.mxu0
  %246 = vst [vmem:[%s5] sm:$0xf] %v241
  // Predicated region
  $region22: #{lstm_agent_forward.13} parent=0 // pred_check
    _
  $region23: #{lstm_agent_forward.13} parent=0 // pred_check_branch
    %248 = sbr.rel (0) target = $region25
  $region24: #{lstm_agent_forward.13} parent=0 // pred_region
    _
  $region25: #{lstm_agent_forward.13} parent=0 // pred_fallthru
    _
  // Predicated region
  $region26: #{lstm_agent_forward.13} parent=0 // pred_check
    _
  $region27: #{lstm_agent_forward.13} parent=0 // pred_check_branch
    %250 = sbr.rel (0) target = $region29
  $region28: #{lstm_agent_forward.13} parent=0 // pred_region
    _
  $region29: #{lstm_agent_forward.13} parent=0 // pred_fallthru
    _

</llo_original>
